<compile_context>
chip_gen: v7x
topology: tpu7x:2x2x1
jax: 0.10.0
libtpu: 0.0.40
codegen_flags: <defaults>
</compile_context>

<pallas_src>
import functools

import jax
import jax.numpy as jnp
from jax import lax
from jax.experimental import pallas as pl
from jax.experimental.pallas import tpu as pltpu


# ----------------------------- setup helpers -----------------------------

def _ffn_hidden_dim(dmodel, multiple_of, ffn_dim_multiplier=None):
    hidden = 4 * dmodel
    hidden = int(2 * hidden / 3)
    if ffn_dim_multiplier is not None:
        hidden = int(ffn_dim_multiplier * hidden)
    return multiple_of * ((hidden + multiple_of - 1) // multiple_of)


def _precompute_rope(head_dim, seq_len, start_p=0, theta=10000.0):
    """cos/sin of the rotary angles, shape (S, head_dim // 2)."""
    freqs = 1.0 / (theta ** (jnp.arange(0, head_dim, 2, dtype=jnp.float32) / head_dim))
    t = jnp.arange(start_p, start_p + seq_len, dtype=jnp.float32)
    ang = jnp.outer(t, freqs)
    return jnp.cos(ang), jnp.sin(ang)


def _rope_tables_full(head_dim, num_heads, seq_len, start_p=0):
    """(S, D)-wide per-lane RoPE tables shared by all heads.

    cos_t[s, d] = cos(ang[s, (d % Dh) // 2])
    sin_t[s, d] = sin(ang[s, (d % Dh) // 2]) * (-1 if d even else +1)
    so that rope(x) = x * cos_t + pair_swap(x) * sin_t with
    pair_swap(x)[2i] = x[2i+1], pair_swap(x)[2i+1] = x[2i].
    """
    cos_h, sin_h = _precompute_rope(head_dim, seq_len, start_p)
    cos_t = jnp.repeat(cos_h, 2, axis=-1)
    sign = jnp.tile(jnp.asarray([-1.0, 1.0], jnp.float32), head_dim // 2)
    sin_t = jnp.repeat(sin_h, 2, axis=-1) * sign
    return jnp.tile(cos_t, (1, num_heads)), jnp.tile(sin_t, (1, num_heads))


def _pick_tile(n, pref, align):
    """Largest multiple of `align` dividing n that is <= pref; fallback n.

    TODO(synk): pad ragged S / hidden dims instead of falling back to the full
    extent at production sizes.
    """
    t = (min(pref, n) // align) * align
    while t >= align:
        if n % t == 0:
            return t
        t -= align
    return n


def _vmem_limit_bytes():
    # ~3/4 of this generation's VMEM (v5e/v6e: 128 MiB, v7x: 64 MiB).
    try:
        return int(pltpu.get_tpu_info().vmem_capacity_bytes) * 3 // 4
    except Exception:
        return None  # leave the compiler's default scoped VMEM limit


def init_params(key, dmodel, n_layers, hidden):
    """Projection/FFN weights in bfloat16 (MXU-native); RMSNorm weights f32."""
    layers = []
    for _ in range(n_layers):
        key, *ks = jax.random.split(key, 8)
        n = lambda k, s: (jax.random.normal(k, s, jnp.float32) * 0.02).astype(jnp.bfloat16)
        layers.append(dict(
            attn_norm=jnp.ones((1, dmodel), jnp.float32),
            ffn_norm=jnp.ones((1, dmodel), jnp.float32),
            wq=n(ks[0], (dmodel, dmodel)),
            wk=n(ks[1], (dmodel, dmodel)),
            wv=n(ks[2], (dmodel, dmodel)),
            wo=n(ks[3], (dmodel, dmodel)),
            w1=n(ks[4], (dmodel, hidden)),
            w2=n(ks[5], (hidden, dmodel)),
            w3=n(ks[6], (dmodel, hidden)),
        ))
    return layers


# ------------------------------ Pallas kernels ------------------------------

def _qkv_rope_kernel(x_ref, cos_ref, sin_ref, nw_ref, wq_ref, wk_ref, wv_ref,
                     q_ref, k_ref, v_ref, xn_ref, *, eps, scale):
    """grid = (batch, seq-tile, weight-column-tile)."""
    f32, bf16 = jnp.float32, jnp.bfloat16
    cj = pl.program_id(2)

    @pl.when(cj == 0)                      # RMSNorm once per (batch, seq-tile)
    def _():
        x = x_ref[0]                                           # (ts, D) f32
        rms = lax.rsqrt(jnp.mean(x * x, axis=-1, keepdims=True) + eps)
        xn_ref[...] = (x * rms * nw_ref[...]).astype(bf16)

    xn = xn_ref[...]                                           # (ts, D) bf16
    q = jnp.dot(xn, wq_ref[...], preferred_element_type=f32) * scale
    k = jnp.dot(xn, wk_ref[...], preferred_element_type=f32)
    v = jnp.dot(xn, wv_ref[...], preferred_element_type=f32)

    # RoPE pair swizzle applied once to the whole (ts, ct) column tile (hoisted
    # out of any per-head loop).  ct is a multiple of Dh (even), so the +/-1
    # rolls never mix heads and the wrap-around lanes are discarded by the
    # even/odd select.  The per-pair sign is pre-folded into the sin table.
    # TODO(synk): at production widths use pltpu.roll to guarantee the XLU
    # lane-rotate lowering.
    cos = cos_ref[...]                                         # (ts, ct) f32
    sin = sin_ref[...]
    lane = lax.broadcasted_iota(jnp.int32, cos.shape, 1)
    is_even = (lane & 1) == 0

    def rope(t):
        swapped = jnp.where(is_even, jnp.roll(t, -1, axis=-1),
                            jnp.roll(t, 1, axis=-1))
        return t * cos + swapped * sin

    q_ref[0] = rope(q).astype(bf16)
    k_ref[0] = rope(k).astype(bf16)
    v_ref[0] = v.astype(bf16)


def _attn_kernel(x_ref, q_ref, k_ref, v_ref, wo_ref, bias_ref, o_ref, *, kv_tile):
    """grid = (batch, q-tile, head); flash attention + per-head Wo + residual."""
    f32, bf16 = jnp.float32, jnp.bfloat16
    qi = pl.program_id(1)
    h = pl.program_id(2)

    q = q_ref[0, 0]                                            # (tq, Dh) bf16
    tq, Dh = q.shape

    def kv_step(kj, carry, masked):
        m, l, acc = carry
        start = pl.multiple_of(kj * kv_tile, kv_tile)
        ks = k_ref[0, 0, pl.ds(start, kv_tile), :]             # (tk, Dh) bf16
        vs = v_ref[0, 0, pl.ds(start, kv_tile), :]
        s = lax.dot_general(q, ks, (((1,), (1,)), ((), ())),
                            preferred_element_type=f32)        # (tq, tk)
        if masked:
            s = s + bias_ref[...]            # precomputed diagonal causal bias
        m_new = jnp.maximum(m, jnp.max(s, axis=-1, keepdims=True))
        alpha = jnp.exp(m - m_new)
        p = jnp.exp(s - m_new)
        l = alpha * l + jnp.sum(p, axis=-1, keepdims=True)
        acc = alpha * acc + jnp.dot(p.astype(bf16), vs, preferred_element_type=f32)
        return m_new, l, acc

    carry0 = (jnp.full((tq, 1), -jnp.inf, f32),
              jnp.zeros((tq, 1), f32),
              jnp.zeros((tq, Dh), f32))
    # KV tiles strictly below the diagonal: unmasked; dynamic trip count means
    # the upper triangle is never visited (no wasted DMA or compute).
    m, l, acc = lax.fori_loop(0, qi, lambda kj, c: kv_step(kj, c, False), carry0)
    # Diagonal KV tile: apply the host-precomputed causal bias once.
    m, l, acc = kv_step(qi, (m, l, acc), True)

    out_h = (acc / l).astype(bf16)                              # (tq, Dh)
    contrib = jnp.dot(out_h, wo_ref[0], preferred_element_type=f32)  # (tq, D)

    @pl.when(h == 0)                        # residual + first head
    def _():
        o_ref[0] = x_ref[0] + contrib

    @pl.when(h > 0)                         # accumulate the remaining heads
    def _():
        o_ref[0] = o_ref[0] + contrib


def _ffn_kernel(h_ref, nw_ref, w1_ref, w3_ref, w2_ref, o_ref, xn_ref, *, eps):
    """grid = (batch, seq-tile, hidden-tile); SwiGLU FFN + residual."""
    f32, bf16 = jnp.float32, jnp.bfloat16
    hj = pl.program_id(2)

    @pl.when(hj == 0)                       # RMSNorm once per (batch, seq-tile)
    def _():
        h1 = h_ref[0]                                          # (ts, D) f32
        rms = lax.rsqrt(jnp.mean(h1 * h1, axis=-1, keepdims=True) + eps)
        xn_ref[...] = (h1 * rms * nw_ref[...]).astype(bf16)

    xn = xn_ref[...]                                           # (ts, D) bf16
    g = jnp.dot(xn, w1_ref[...], preferred_element_type=f32)   # (ts, ht)
    u = jnp.dot(xn, w3_ref[...], preferred_element_type=f32)
    # SiLU with a clamped exponent so exp never overflows before the divide.
    sig = 1.0 / (1.0 + jnp.exp(jnp.minimum(-g, 80.0)))
    ff = jnp.dot((g * sig * u).astype(bf16), w2_ref[...],
                 preferred_element_type=f32)                   # (ts, D)

    @pl.when(hj == 0)
    def _():
        o_ref[0] = h_ref[0] + ff

    @pl.when(hj > 0)
    def _():
        o_ref[0] = o_ref[0] + ff


# ------------------------------- wrappers -------------------------------

def llama_block_pallas(x, layer, cos_t, sin_t, bias, num_heads, eps,
                       *, s_tile, q_tile, c_tile, h_tile, vmem_limit):
    B, S, D = x.shape
    Dh = D // num_heads
    Hf = layer['w1'].shape[1]
    f32, bf16 = jnp.float32, jnp.bfloat16

    NS, NQ, NC, NH = S // s_tile, S // q_tile, D // c_tile, Hf // h_tile
    cparams = pltpu.CompilerParams(
        dimension_semantics=("parallel", "parallel", "arbitrary"),
        vmem_limit_bytes=vmem_limit)

    # ---- 1. RMSNorm + QKV + RoPE (wq/wk/wv streamed in column tiles) ----
    q, k, v = pl.pallas_call(
        functools.partial(_qkv_rope_kernel, eps=eps, scale=1.0 / (Dh ** 0.5)),
        out_shape=[jax.ShapeDtypeStruct((B, S, D), bf16)] * 3,
        grid=(B, NS, NC),
        in_specs=[
            pl.BlockSpec((1, s_tile, D), lambda b, si, cj: (b, si, 0)),        # x
            pl.BlockSpec((s_tile, c_tile), lambda b, si, cj: (si, cj)),        # cos
            pl.BlockSpec((s_tile, c_tile), lambda b, si, cj: (si, cj)),        # sin
            pl.BlockSpec((1, D), lambda b, si, cj: (0, 0),
                         pipeline_mode=pl.Buffered(1)),                        # attn norm
            pl.BlockSpec((D, c_tile), lambda b, si, cj: (0, cj)),              # wq
            pl.BlockSpec((D, c_tile), lambda b, si, cj: (0, cj)),              # wk
            pl.BlockSpec((D, c_tile), lambda b, si, cj: (0, cj)),              # wv
        ],
        out_specs=[pl.BlockSpec((1, s_tile, c_tile),
                                lambda b, si, cj: (b, si, cj))] * 3,
        scratch_shapes=[pltpu.VMEM((s_tile, D), bf16)],                        # cached xn
        compiler_params=cparams,
    )(x, cos_t, sin_t, layer['attn_norm'], layer['wq'], layer['wk'], layer['wv'])

    # Head-major layout for the attention kernel (wrapper-side layout plumbing).
    def to_heads(t):
        return t.reshape(B, S, num_heads, Dh).transpose(0, 2, 1, 3)
    qh, kh, vh = to_heads(q), to_heads(k), to_heads(v)
    wo_r = layer['wo'].reshape(num_heads, Dh, D)   # per-head Wo row blocks

    # ---- 2. flash attention + per-head Wo + residual ----
    h1 = pl.pallas_call(
        functools.partial(_attn_kernel, kv_tile=q_tile),
        out_shape=jax.ShapeDtypeStruct((B, S, D), f32),
        grid=(B, NQ, num_heads),
        in_specs=[
            pl.BlockSpec((1, q_tile, D), lambda b, qi, h: (b, qi, 0)),         # x (residual)
            pl.BlockSpec((1, 1, q_tile, Dh), lambda b, qi, h: (b, h, qi, 0)),  # q
            pl.BlockSpec((1, 1, S, Dh), lambda b, qi, h: (b, h, 0, 0)),        # k (full S)
            pl.BlockSpec((1, 1, S, Dh), lambda b, qi, h: (b, h, 0, 0)),        # v (full S)
            pl.BlockSpec((1, Dh, D), lambda b, qi, h: (h, 0, 0)),              # wo rows of head h
            pl.BlockSpec((q_tile, q_tile), lambda b, qi, h: (0, 0),
                         pipeline_mode=pl.Buffered(1)),                        # causal bias
        ],
        out_specs=pl.BlockSpec((1, q_tile, D), lambda b, qi, h: (b, qi, 0)),
        compiler_params=cparams,
    )(x, qh, kh, vh, wo_r, bias)

    # ---- 3. RMSNorm + SwiGLU FFN + residual (hidden dim streamed) ----
    out = pl.pallas_call(
        functools.partial(_ffn_kernel, eps=eps),
        out_shape=jax.ShapeDtypeStruct((B, S, D), f32),
        grid=(B, NS, NH),
        in_specs=[
            pl.BlockSpec((1, s_tile, D), lambda b, si, hj: (b, si, 0)),        # h1
            pl.BlockSpec((1, D), lambda b, si, hj: (0, 0),
                         pipeline_mode=pl.Buffered(1)),                        # ffn norm
            pl.BlockSpec((D, h_tile), lambda b, si, hj: (0, hj)),              # w1
            pl.BlockSpec((D, h_tile), lambda b, si, hj: (0, hj)),              # w3
            pl.BlockSpec((h_tile, D), lambda b, si, hj: (hj, 0)),              # w2
        ],
        out_specs=pl.BlockSpec((1, s_tile, D), lambda b, si, hj: (b, si, 0)),
        scratch_shapes=[pltpu.VMEM((s_tile, D), bf16)],                        # cached hn
        compiler_params=cparams,
    )(h1, layer['ffn_norm'], layer['w1'], layer['w3'], layer['w2'])
    return out


def llama_stage_pallas(x, layers, num_heads, eps, start_p=0,
                       s_tile_pref=256, q_tile_pref=256,
                       c_tile_pref=512, h_tile_pref=1024):
    B, S, D = x.shape
    Dh = D // num_heads
    Hf = layers[0]['w1'].shape[1]

    # Tile choices (shrink q/kv tiles to 128 on v5e; grow on v6e's 128 MiB VMEM).
    s_tile = _pick_tile(S, s_tile_pref, 8)
    q_tile = _pick_tile(S, q_tile_pref, 8)
    c_tile = _pick_tile(D, c_tile_pref, Dh)
    h_tile = _pick_tile(Hf, h_tile_pref, 128)
    vmem_limit = _vmem_limit_bytes()

    cos_t, sin_t = _rope_tables_full(Dh, num_heads, S, start_p=start_p)
    # Causal bias for the (always aligned) diagonal attention tile, built once.
    r = jnp.arange(q_tile)
    bias = jnp.where(r[None, :] > r[:, None], -1e30, 0.0).astype(jnp.float32)

    out = x
    for layer in layers:
        out = llama_block_pallas(out, layer, cos_t, sin_t, bias, num_heads, eps,
                                 s_tile=s_tile, q_tile=q_tile, c_tile=c_tile,
                                 h_tile=h_tile, vmem_limit=vmem_limit)
    return out


# ---------------------------- pure-JAX reference ----------------------------

def _ref_block(x, layer, cos_h, sin_h, num_heads, eps):
    B, S, D = x.shape
    Dh = D // num_heads
    bf16 = jnp.bfloat16
    scale = 1.0 / (Dh ** 0.5)

    def rmsnorm(t, w):
        return t * lax.rsqrt(jnp.mean(t * t, axis=-1, keepdims=True) + eps) * w

    def mm(a, w):   # bf16 operands, f32 accumulation — mirrors the kernel
        return jnp.dot(a.astype(bf16), w, preferred_element_type=jnp.float32)

    xn = rmsnorm(x, layer['attn_norm'][0])
    q = mm(xn, layer['wq']) * scale
    k = mm(xn, layer['wk'])
    v = mm(xn, layer['wv'])

    def rope(t):
        tr = t.reshape(B, S, num_heads, Dh // 2, 2)
        c = cos_h[None, :, None, :]
        s = sin_h[None, :, None, :]
        y0 = tr[..., 0] * c - tr[..., 1] * s
        y1 = tr[..., 0] * s + tr[..., 1] * c
        return jnp.stack([y0, y1], axis=-1).reshape(B, S, D)

    q = rope(q); k = rope(k)
    qh = q.reshape(B, S, num_heads, Dh).transpose(0, 2, 1, 3).astype(bf16)
    kh = k.reshape(B, S, num_heads, Dh).transpose(0, 2, 1, 3).astype(bf16)
    vh = v.reshape(B, S, num_heads, Dh).transpose(0, 2, 1, 3).astype(bf16)
    s = jnp.einsum('bhqd,bhkd->bhqk', qh, kh, preferred_element_type=jnp.float32)
    mask = jnp.where(jnp.arange(S)[None, :] > jnp.arange(S)[:, None],
                     -1e30, 0.0).astype(jnp.float32)
    p = jax.nn.softmax(s + mask, axis=-1).astype(bf16)
    o = jnp.einsum('bhqk,bhkd->bhqd', p, vh, preferred_element_type=jnp.float32)
    o = o.transpose(0, 2, 1, 3).reshape(B, S, D)
    h1 = x + mm(o, layer['wo'])
    hn = rmsnorm(h1, layer['ffn_norm'][0])
    g = mm(hn, layer['w1'])
    u = mm(hn, layer['w3'])
    ff = mm(jax.nn.silu(g) * u, layer['w2'])
    return h1 + ff


# ---------------------------------- main ----------------------------------

if __name__ == "__main__":
    B, S = 2, 8
    dmodel, num_heads, n_layers = 32, 4, 4
    multiple_of, norm_eps = 32, 1e-5
    Dh = dmodel // num_heads
    hidden = _ffn_hidden_dim(dmodel, multiple_of)

    key = jax.random.PRNGKey(0)
    key, xk, pk = jax.random.split(key, 3)
    x = jax.random.normal(xk, (B, S, dmodel), jnp.float32)
    layers = init_params(pk, dmodel, n_layers, hidden)

    stage = jax.jit(functools.partial(llama_stage_pallas,
                                      num_heads=num_heads, eps=norm_eps))
    out = jax.block_until_ready(stage(x, layers))

    # correctness check against a pure-JAX reference of the same (bf16) math
    cos_h, sin_h = _precompute_rope(Dh, S, start_p=0)
    ref = x
    for layer in layers:
        ref = _ref_block(ref, layer, cos_h, sin_h, num_heads, norm_eps)

    assert out.shape == (B, S, dmodel)
    err = float(jnp.max(jnp.abs(out - ref)))
    assert jnp.allclose(out, ref, atol=2e-2, rtol=2e-2), err
    print("KERNEL_OK")
</pallas_src>

<mosaic_0001>
module attributes {stable_mosaic.version = 11 : i64} {
  func.func @_qkv_rope_kernel(%arg0: i32, %arg1: i32, %arg2: i32, %arg3: memref<1x8x32xf32, #tpu.memory_space<vmem>>, %arg4: memref<8x32xf32, #tpu.memory_space<vmem>>, %arg5: memref<8x32xf32, #tpu.memory_space<vmem>>, %arg6: memref<1x32xf32, #tpu.memory_space<vmem>>, %arg7: memref<32x32xbf16, #tpu.memory_space<vmem>>, %arg8: memref<32x32xbf16, #tpu.memory_space<vmem>>, %arg9: memref<32x32xbf16, #tpu.memory_space<vmem>>, %arg10: memref<1x8x32xbf16, #tpu.memory_space<vmem>>, %arg11: memref<1x8x32xbf16, #tpu.memory_space<vmem>>, %arg12: memref<1x8x32xbf16, #tpu.memory_space<vmem>>, %arg13: memref<8x32xbf16, #tpu.memory_space<vmem>>) attributes {dimension_semantics = [#tpu.dimension_semantics<parallel>, #tpu.dimension_semantics<parallel>, #tpu.dimension_semantics<arbitrary>], iteration_bounds = array<i64: 2, 1, 1>, scalar_prefetch = 0 : i64, scratch_operands = 1 : i64, tpu.core_type = #tpu.core_type<tc>, window_params = [{transform_indices = @transform_0, window_bounds = array<i64: 1, 8, 32>}, {transform_indices = @transform_1, window_bounds = array<i64: 8, 32>}, {transform_indices = @transform_2, window_bounds = array<i64: 8, 32>}, {pipeline_mode = #tpu.pipeline_mode<synchronous>, transform_indices = @transform_3, window_bounds = array<i64: 1, 32>}, {transform_indices = @transform_4, window_bounds = array<i64: 32, 32>}, {transform_indices = @transform_5, window_bounds = array<i64: 32, 32>}, {transform_indices = @transform_6, window_bounds = array<i64: 32, 32>}, {transform_indices = @transform_7, window_bounds = array<i64: 1, 8, 32>}, {transform_indices = @transform_8, window_bounds = array<i64: 1, 8, 32>}, {transform_indices = @transform_9, window_bounds = array<i64: 1, 8, 32>}]} {
    %c0_i32 = arith.constant 0 : i32
    %0 = arith.cmpi eq, %arg2, %c0_i32 : i32
    %1 = arith.extui %0 : i1 to i32
    %c0_i32_0 = arith.constant 0 : i32
    %2 = arith.cmpi ne, %1, %c0_i32_0 : i32
    scf.if %2 {
      %c0_25 = arith.constant 0 : index
      %c0_26 = arith.constant 0 : index
      %c0_27 = arith.constant 0 : index
      %51 = vector.load %arg3[%c0_25, %c0_26, %c0_27] : memref<1x8x32xf32, #tpu.memory_space<vmem>>, vector<1x8x32xf32>
      %52 = vector.shape_cast %51 : vector<1x8x32xf32> to vector<8x32xf32>
      %53 = arith.mulf %52, %52 : vector<8x32xf32>
      %cst_28 = arith.constant dense<0.000000e+00> : vector<8xf32>
      %54 = vector.multi_reduction <add>, %53, %cst_28 [1] : vector<8x32xf32> to vector<8xf32>
      %55 = vector.shape_cast %54 : vector<8xf32> to vector<8x1xf32>
      %cst_29 = arith.constant 3.200000e+01 : f32
      %56 = vector.broadcast %cst_29 : f32 to vector<8x1xf32>
      %57 = arith.divf %55, %56 : vector<8x1xf32>
      %cst_30 = arith.constant 9.99999974E-6 : f32
      %58 = vector.broadcast %cst_30 : f32 to vector<8x1xf32>
      %59 = arith.addf %57, %58 : vector<8x1xf32>
      %60 = math.rsqrt %59 : vector<8x1xf32>
      %61 = vector.broadcast %60 : vector<8x1xf32> to vector<8x32xf32>
      %62 = arith.mulf %52, %61 : vector<8x32xf32>
      %c0_31 = arith.constant 0 : index
      %c0_32 = arith.constant 0 : index
      %63 = vector.load %arg6[%c0_31, %c0_32] : memref<1x32xf32, #tpu.memory_space<vmem>>, vector<1x32xf32>
      %64 = vector.broadcast %63 : vector<1x32xf32> to vector<8x32xf32>
      %65 = arith.mulf %62, %64 : vector<8x32xf32>
      %66 = arith.truncf %65 : vector<8x32xf32> to vector<8x32xbf16>
      %c0_33 = arith.constant 0 : index
      %c0_34 = arith.constant 0 : index
      %67 = vector.load %arg13[%c0_33, %c0_34] : memref<8x32xbf16, #tpu.memory_space<vmem>>, vector<8x32xbf16>
      tpu.vector_store %arg13[%c0_33, %c0_34], %66 {strides = array<i32>} : memref<8x32xbf16, #tpu.memory_space<vmem>>, vector<8x32xbf16>,
    } else {
    }
    %c0 = arith.constant 0 : index
    %c0_1 = arith.constant 0 : index
    %3 = vector.load %arg13[%c0, %c0_1] : memref<8x32xbf16, #tpu.memory_space<vmem>>, vector<8x32xbf16>
    %c0_2 = arith.constant 0 : index
    %c0_3 = arith.constant 0 : index
    %4 = vector.load %arg7[%c0_2, %c0_3] : memref<32x32xbf16, #tpu.memory_space<vmem>>, vector<32x32xbf16>
    %cst = arith.constant dense<0.000000e+00> : vector<8x32xf32>
    %5 = tpu.matmul %3, %4, %cst {dimension_numbers = #tpu.dot_dimension_numbers<[1], [0], [0], [1], [0, 0, 1, 1], [], []>} : vector<8x32xbf16>, vector<32x32xbf16>, vector<8x32xf32> -> vector<8x32xf32>
    %cst_4 = arith.constant 0.353553385 : f32
    %6 = vector.broadcast %cst_4 : f32 to vector<8x32xf32>
    %7 = arith.mulf %5, %6 : vector<8x32xf32>
    %c0_5 = arith.constant 0 : index
    %c0_6 = arith.constant 0 : index
    %8 = vector.load %arg8[%c0_5, %c0_6] : memref<32x32xbf16, #tpu.memory_space<vmem>>, vector<32x32xbf16>
    %cst_7 = arith.constant dense<0.000000e+00> : vector<8x32xf32>
    %9 = tpu.matmul %3, %8, %cst_7 {dimension_numbers = #tpu.dot_dimension_numbers<[1], [0], [0], [1], [0, 0, 1, 1], [], []>} : vector<8x32xbf16>, vector<32x32xbf16>, vector<8x32xf32> -> vector<8x32xf32>
    %c0_8 = arith.constant 0 : index
    %c0_9 = arith.constant 0 : index
    %10 = vector.load %arg9[%c0_8, %c0_9] : memref<32x32xbf16, #tpu.memory_space<vmem>>, vector<32x32xbf16>
    %cst_10 = arith.constant dense<0.000000e+00> : vector<8x32xf32>
    %11 = tpu.matmul %3, %10, %cst_10 {dimension_numbers = #tpu.dot_dimension_numbers<[1], [0], [0], [1], [0, 0, 1, 1], [], []>} : vector<8x32xbf16>, vector<32x32xbf16>, vector<8x32xf32> -> vector<8x32xf32>
    %c0_11 = arith.constant 0 : index
    %c0_12 = arith.constant 0 : index
    %12 = vector.load %arg4[%c0_11, %c0_12] : memref<8x32xf32, #tpu.memory_space<vmem>>, vector<8x32xf32>
    %c0_13 = arith.constant 0 : index
    %c0_14 = arith.constant 0 : index
    %13 = vector.load %arg5[%c0_13, %c0_14] : memref<8x32xf32, #tpu.memory_space<vmem>>, vector<8x32xf32>
    %14 = tpu.iota {dimensions = array<i32: 1>} : vector<8x32xi32>
    %c1_i32 = arith.constant 1 : i32
    %15 = vector.broadcast %c1_i32 : i32 to vector<8x32xi32>
    %16 = arith.andi %14, %15 : vector<8x32xi32>
    %c0_i32_15 = arith.constant 0 : i32
    %17 = vector.broadcast %c0_i32_15 : i32 to vector<8x32xi32>
    %18 = arith.cmpi eq, %16, %17 : vector<8x32xi32>
    %19 = vector.extract_strided_slice %7 {offsets = [0, 1], sizes = [8, 31], strides = [1, 1]} : vector<8x32xf32> to vector<8x31xf32>
    %20 = vector.extract_strided_slice %7 {offsets = [0, 0], sizes = [8, 1], strides = [1, 1]} : vector<8x32xf32> to vector<8x1xf32>
    %21 = tpu.concatenate %19, %20 in 1 : vector<8x31xf32>, vector<8x1xf32> -> vector<8x32xf32>
    %22 = vector.extract_strided_slice %7 {offsets = [0, 31], sizes = [8, 1], strides = [1, 1]} : vector<8x32xf32> to vector<8x1xf32>
    %23 = vector.extract_strided_slice %7 {offsets = [0, 0], sizes = [8, 31], strides = [1, 1]} : vector<8x32xf32> to vector<8x31xf32>
    %24 = tpu.concatenate %22, %23 in 1 : vector<8x1xf32>, vector<8x31xf32> -> vector<8x32xf32>
    %25 = arith.select %18, %21, %24 : vector<8x32xi1>, vector<8x32xf32>
    %26 = arith.mulf %7, %12 : vector<8x32xf32>
    %27 = arith.mulf %25, %13 : vector<8x32xf32>
    %28 = arith.addf %26, %27 : vector<8x32xf32>
    %29 = arith.truncf %28 : vector<8x32xf32> to vector<8x32xbf16>
    %c0_16 = arith.constant 0 : index
    %c0_17 = arith.constant 0 : index
    %c0_18 = arith.constant 0 : index
    %30 = vector.load %arg10[%c0_16, %c0_17, %c0_18] : memref<1x8x32xbf16, #tpu.memory_space<vmem>>, vector<1x8x32xbf16>
    %31 = vector.shape_cast %30 : vector<1x8x32xbf16> to vector<8x32xbf16>
    %32 = vector.shape_cast %29 : vector<8x32xbf16> to vector<1x8x32xbf16>
    tpu.vector_store %arg10[%c0_16, %c0_17, %c0_18], %32 {strides = array<i32>} : memref<1x8x32xbf16, #tpu.memory_space<vmem>>, vector<1x8x32xbf16>,
    %33 = vector.extract_strided_slice %9 {offsets = [0, 1], sizes = [8, 31], strides = [1, 1]} : vector<8x32xf32> to vector<8x31xf32>
    %34 = vector.extract_strided_slice %9 {offsets = [0, 0], sizes = [8, 1], strides = [1, 1]} : vector<8x32xf32> to vector<8x1xf32>
    %35 = tpu.concatenate %33, %34 in 1 : vector<8x31xf32>, vector<8x1xf32> -> vector<8x32xf32>
    %36 = vector.extract_strided_slice %9 {offsets = [0, 31], sizes = [8, 1], strides = [1, 1]} : vector<8x32xf32> to vector<8x1xf32>
    %37 = vector.extract_strided_slice %9 {offsets = [0, 0], sizes = [8, 31], strides = [1, 1]} : vector<8x32xf32> to vector<8x31xf32>
    %38 = tpu.concatenate %36, %37 in 1 : vector<8x1xf32>, vector<8x31xf32> -> vector<8x32xf32>
    %39 = arith.select %18, %35, %38 : vector<8x32xi1>, vector<8x32xf32>
    %40 = arith.mulf %9, %12 : vector<8x32xf32>
    %41 = arith.mulf %39, %13 : vector<8x32xf32>
    %42 = arith.addf %40, %41 : vector<8x32xf32>
    %43 = arith.truncf %42 : vector<8x32xf32> to vector<8x32xbf16>
    %c0_19 = arith.constant 0 : index
    %c0_20 = arith.constant 0 : index
    %c0_21 = arith.constant 0 : index
    %44 = vector.load %arg11[%c0_19, %c0_20, %c0_21] : memref<1x8x32xbf16, #tpu.memory_space<vmem>>, vector<1x8x32xbf16>
    %45 = vector.shape_cast %44 : vector<1x8x32xbf16> to vector<8x32xbf16>
    %46 = vector.shape_cast %43 : vector<8x32xbf16> to vector<1x8x32xbf16>
    tpu.vector_store %arg11[%c0_19, %c0_20, %c0_21], %46 {strides = array<i32>} : memref<1x8x32xbf16, #tpu.memory_space<vmem>>, vector<1x8x32xbf16>,
    %47 = arith.truncf %11 : vector<8x32xf32> to vector<8x32xbf16>
    %c0_22 = arith.constant 0 : index
    %c0_23 = arith.constant 0 : index
    %c0_24 = arith.constant 0 : index
    %48 = vector.load %arg12[%c0_22, %c0_23, %c0_24] : memref<1x8x32xbf16, #tpu.memory_space<vmem>>, vector<1x8x32xbf16>
    %49 = vector.shape_cast %48 : vector<1x8x32xbf16> to vector<8x32xbf16>
    %50 = vector.shape_cast %47 : vector<8x32xbf16> to vector<1x8x32xbf16>
    tpu.vector_store %arg12[%c0_22, %c0_23, %c0_24], %50 {strides = array<i32>} : memref<1x8x32xbf16, #tpu.memory_space<vmem>>, vector<1x8x32xbf16>,
    return
  }
  func.func @transform_0(%arg0: i32, %arg1: i32, %arg2: i32) -> (i32, i32, i32) {
    %c0_i32 = arith.constant 0 : i32
    %c0_i32_0 = arith.constant 0 : i32
    return %arg0, %arg1, %c0_i32 : i32, i32, i32
  }
  func.func @transform_1(%arg0: i32, %arg1: i32, %arg2: i32) -> (i32, i32) {
    %c0_i32 = arith.constant 0 : i32
    return %arg1, %arg2 : i32, i32
  }
  func.func @transform_2(%arg0: i32, %arg1: i32, %arg2: i32) -> (i32, i32) {
    %c0_i32 = arith.constant 0 : i32
    return %arg1, %arg2 : i32, i32
  }
  func.func @transform_3(%arg0: i32, %arg1: i32, %arg2: i32) -> (i32, i32) {
    %c0_i32 = arith.constant 0 : i32
    %c0_i32_0 = arith.constant 0 : i32
    %c0_i32_1 = arith.constant 0 : i32
    return %c0_i32, %c0_i32_0 : i32, i32
  }
  func.func @transform_4(%arg0: i32, %arg1: i32, %arg2: i32) -> (i32, i32) {
    %c0_i32 = arith.constant 0 : i32
    %c0_i32_0 = arith.constant 0 : i32
    return %c0_i32, %arg2 : i32, i32
  }
  func.func @transform_5(%arg0: i32, %arg1: i32, %arg2: i32) -> (i32, i32) {
    %c0_i32 = arith.constant 0 : i32
    %c0_i32_0 = arith.constant 0 : i32
    return %c0_i32, %arg2 : i32, i32
  }
  func.func @transform_6(%arg0: i32, %arg1: i32, %arg2: i32) -> (i32, i32) {
    %c0_i32 = arith.constant 0 : i32
    %c0_i32_0 = arith.constant 0 : i32
    return %c0_i32, %arg2 : i32, i32
  }
  func.func @transform_7(%arg0: i32, %arg1: i32, %arg2: i32) -> (i32, i32, i32) {
    %c0_i32 = arith.constant 0 : i32
    return %arg0, %arg1, %arg2 : i32, i32, i32
  }
  func.func @transform_8(%arg0: i32, %arg1: i32, %arg2: i32) -> (i32, i32, i32) {
    %c0_i32 = arith.constant 0 : i32
    return %arg0, %arg1, %arg2 : i32, i32, i32
  }
  func.func @transform_9(%arg0: i32, %arg1: i32, %arg2: i32) -> (i32, i32, i32) {
    %c0_i32 = arith.constant 0 : i32
    return %arg0, %arg1, %arg2 : i32, i32, i32
  }
}

module attributes {stable_mosaic.version = 11 : i64} {
  func.func @_attn_kernel(%arg0: i32, %arg1: i32, %arg2: i32, %arg3: memref<1x8x32xf32, #tpu.memory_space<vmem>>, %arg4: memref<1x1x8x8xbf16, #tpu.memory_space<vmem>>, %arg5: memref<1x1x8x8xbf16, #tpu.memory_space<vmem>>, %arg6: memref<1x1x8x8xbf16, #tpu.memory_space<vmem>>, %arg7: memref<1x8x32xbf16, #tpu.memory_space<vmem>>, %arg8: memref<8x8xf32, #tpu.memory_space<vmem>>, %arg9: memref<1x8x32xf32, #tpu.memory_space<vmem>>) attributes {dimension_semantics = [#tpu.dimension_semantics<parallel>, #tpu.dimension_semantics<parallel>, #tpu.dimension_semantics<arbitrary>], iteration_bounds = array<i64: 2, 1, 4>, scalar_prefetch = 0 : i64, scratch_operands = 0 : i64, tpu.core_type = #tpu.core_type<tc>, window_params = [{transform_indices = @transform_0, window_bounds = array<i64: 1, 8, 32>}, {transform_indices = @transform_1, window_bounds = array<i64: 1, 1, 8, 8>}, {transform_indices = @transform_2, window_bounds = array<i64: 1, 1, 8, 8>}, {transform_indices = @transform_3, window_bounds = array<i64: 1, 1, 8, 8>}, {transform_indices = @transform_4, window_bounds = array<i64: 1, 8, 32>}, {pipeline_mode = #tpu.pipeline_mode<synchronous>, transform_indices = @transform_5, window_bounds = array<i64: 8, 8>}, {transform_indices = @transform_6, window_bounds = array<i64: 1, 8, 32>}]} {
    %c0 = arith.constant 0 : index
    %c0_0 = arith.constant 0 : index
    %c0_1 = arith.constant 0 : index
    %c0_2 = arith.constant 0 : index
    %0 = vector.load %arg4[%c0, %c0_0, %c0_1, %c0_2] : memref<1x1x8x8xbf16, #tpu.memory_space<vmem>>, vector<1x1x8x8xbf16>
    %1 = vector.shape_cast %0 : vector<1x1x8x8xbf16> to vector<8x8xbf16>
    %cst = arith.constant 0xFF800000 : f32
    %2 = vector.broadcast %cst : f32 to vector<8x1xf32>
    %cst_3 = arith.constant 0.000000e+00 : f32
    %3 = vector.broadcast %cst_3 : f32 to vector<8x1xf32>
    %cst_4 = arith.constant 0.000000e+00 : f32
    %4 = vector.broadcast %cst_4 : f32 to vector<8x8xf32>
    %c0_i32 = arith.constant 0 : i32
    %5 = arith.subi %arg1, %c0_i32 : i32
    %6 = arith.addi %c0_i32, %5 : i32
    %c1_i32 = arith.constant 1 : i32
    %7:3 = scf.for %arg10 = %c0_i32 to %6 step %c1_i32 iter_args(%arg11 = %2, %arg12 = %3, %arg13 = %4) -> (vector<8x1xf32>, vector<8x1xf32>, vector<8x8xf32>)  : i32 {
      %c8_i32_25 = arith.constant 8 : i32
      %48 = arith.muli %arg10, %c8_i32_25 : i32
      %49 = tpu.assume_multiple %48, 8 : i32
      %c0_26 = arith.constant 0 : index
      %c0_27 = arith.constant 0 : index
      %50 = arith.index_cast %49 : i32 to index
      %c0_28 = arith.constant 0 : index
      %51 = vector.load %arg5[%c0_26, %c0_27, %50, %c0_28] : memref<1x1x8x8xbf16, #tpu.memory_space<vmem>>, vector<1x1x8x8xbf16>
      %52 = vector.shape_cast %51 : vector<1x1x8x8xbf16> to vector<8x8xbf16>
      %c0_29 = arith.constant 0 : index
      %c0_30 = arith.constant 0 : index
      %53 = arith.index_cast %49 : i32 to index
      %c0_31 = arith.constant 0 : index
      %54 = vector.load %arg6[%c0_29, %c0_30, %53, %c0_31] : memref<1x1x8x8xbf16, #tpu.memory_space<vmem>>, vector<1x1x8x8xbf16>
      %55 = vector.shape_cast %54 : vector<1x1x8x8xbf16> to vector<8x8xbf16>
      %cst_32 = arith.constant dense<0.000000e+00> : vector<8x8xf32>
      %56 = tpu.matmul %1, %52, %cst_32 {dimension_numbers = #tpu.dot_dimension_numbers<[1], [1], [0], [0], [0, 0, 1, 0], [], []>} : vector<8x8xbf16>, vector<8x8xbf16>, vector<8x8xf32> -> vector<8x8xf32>
      %cst_33 = arith.constant dense<0xFF800000> : vector<8xf32>
      %57 = vector.multi_reduction <maximumf>, %56, %cst_33 [1] : vector<8x8xf32> to vector<8xf32>
      %58 = vector.shape_cast %57 : vector<8xf32> to vector<8x1xf32>
      %59 = arith.maximumf %arg11, %58 : vector<8x1xf32>
      %60 = arith.subf %arg11, %59 : vector<8x1xf32>
      %61 = math.exp %60 : vector<8x1xf32>
      %62 = vector.broadcast %59 : vector<8x1xf32> to vector<8x8xf32>
      %63 = arith.subf %56, %62 : vector<8x8xf32>
      %64 = math.exp %63 : vector<8x8xf32>
      %65 = arith.mulf %61, %arg12 : vector<8x1xf32>
      %cst_34 = arith.constant dense<0.000000e+00> : vector<8xf32>
      %66 = vector.multi_reduction <add>, %64, %cst_34 [1] : vector<8x8xf32> to vector<8xf32>
      %67 = vector.shape_cast %66 : vector<8xf32> to vector<8x1xf32>
      %68 = arith.addf %65, %67 : vector<8x1xf32>
      %69 = vector.broadcast %61 : vector<8x1xf32> to vector<8x8xf32>
      %70 = arith.mulf %69, %arg13 : vector<8x8xf32>
      %71 = arith.truncf %64 : vector<8x8xf32> to vector<8x8xbf16>
      %cst_35 = arith.constant dense<0.000000e+00> : vector<8x8xf32>
      %72 = tpu.matmul %71, %55, %cst_35 {dimension_numbers = #tpu.dot_dimension_numbers<[1], [0], [0], [1], [0, 0, 1, 1], [], []>} : vector<8x8xbf16>, vector<8x8xbf16>, vector<8x8xf32> -> vector<8x8xf32>
      %73 = arith.addf %70, %72 : vector<8x8xf32>
      scf.yield %59, %68, %73 : vector<8x1xf32>, vector<8x1xf32>, vector<8x8xf32>
    }
    %c8_i32 = arith.constant 8 : i32
    %8 = arith.muli %arg1, %c8_i32 : i32
    %9 = tpu.assume_multiple %8, 8 : i32
    %c0_5 = arith.constant 0 : index
    %c0_6 = arith.constant 0 : index
    %10 = arith.index_cast %9 : i32 to index
    %c0_7 = arith.constant 0 : index
    %11 = vector.load %arg5[%c0_5, %c0_6, %10, %c0_7] : memref<1x1x8x8xbf16, #tpu.memory_space<vmem>>, vector<1x1x8x8xbf16>
    %12 = vector.shape_cast %11 : vector<1x1x8x8xbf16> to vector<8x8xbf16>
    %c0_8 = arith.constant 0 : index
    %c0_9 = arith.constant 0 : index
    %13 = arith.index_cast %9 : i32 to index
    %c0_10 = arith.constant 0 : index
    %14 = vector.load %arg6[%c0_8, %c0_9, %13, %c0_10] : memref<1x1x8x8xbf16, #tpu.memory_space<vmem>>, vector<1x1x8x8xbf16>
    %15 = vector.shape_cast %14 : vector<1x1x8x8xbf16> to vector<8x8xbf16>
    %cst_11 = arith.constant dense<0.000000e+00> : vector<8x8xf32>
    %16 = tpu.matmul %1, %12, %cst_11 {dimension_numbers = #tpu.dot_dimension_numbers<[1], [1], [0], [0], [0, 0, 1, 0], [], []>} : vector<8x8xbf16>, vector<8x8xbf16>, vector<8x8xf32> -> vector<8x8xf32>
    %c0_12 = arith.constant 0 : index
    %c0_13 = arith.constant 0 : index
    %17 = vector.load %arg8[%c0_12, %c0_13] : memref<8x8xf32, #tpu.memory_space<vmem>>, vector<8x8xf32>
    %18 = arith.addf %16, %17 : vector<8x8xf32>
    %cst_14 = arith.constant dense<0xFF800000> : vector<8xf32>
    %19 = vector.multi_reduction <maximumf>, %18, %cst_14 [1] : vector<8x8xf32> to vector<8xf32>
    %20 = vector.shape_cast %19 : vector<8xf32> to vector<8x1xf32>
    %21 = arith.maximumf %7#0, %20 : vector<8x1xf32>
    %22 = arith.subf %7#0, %21 : vector<8x1xf32>
    %23 = math.exp %22 : vector<8x1xf32>
    %24 = vector.broadcast %21 : vector<8x1xf32> to vector<8x8xf32>
    %25 = arith.subf %18, %24 : vector<8x8xf32>
    %26 = math.exp %25 : vector<8x8xf32>
    %27 = arith.mulf %23, %7#1 : vector<8x1xf32>
    %cst_15 = arith.constant dense<0.000000e+00> : vector<8xf32>
    %28 = vector.multi_reduction <add>, %26, %cst_15 [1] : vector<8x8xf32> to vector<8xf32>
    %29 = vector.shape_cast %28 : vector<8xf32> to vector<8x1xf32>
    %30 = arith.addf %27, %29 : vector<8x1xf32>
    %31 = vector.broadcast %23 : vector<8x1xf32> to vector<8x8xf32>
    %32 = arith.mulf %31, %7#2 : vector<8x8xf32>
    %33 = arith.truncf %26 : vector<8x8xf32> to vector<8x8xbf16>
    %cst_16 = arith.constant dense<0.000000e+00> : vector<8x8xf32>
    %34 = tpu.matmul %33, %15, %cst_16 {dimension_numbers = #tpu.dot_dimension_numbers<[1], [0], [0], [1], [0, 0, 1, 1], [], []>} : vector<8x8xbf16>, vector<8x8xbf16>, vector<8x8xf32> -> vector<8x8xf32>
    %35 = arith.addf %32, %34 : vector<8x8xf32>
    %36 = vector.broadcast %30 : vector<8x1xf32> to vector<8x8xf32>
    %37 = arith.divf %35, %36 : vector<8x8xf32>
    %38 = arith.truncf %37 : vector<8x8xf32> to vector<8x8xbf16>
    %c0_17 = arith.constant 0 : index
    %c0_18 = arith.constant 0 : index
    %c0_19 = arith.constant 0 : index
    %39 = vector.load %arg7[%c0_17, %c0_18, %c0_19] : memref<1x8x32xbf16, #tpu.memory_space<vmem>>, vector<1x8x32xbf16>
    %40 = vector.shape_cast %39 : vector<1x8x32xbf16> to vector<8x32xbf16>
    %cst_20 = arith.constant dense<0.000000e+00> : vector<8x32xf32>
    %41 = tpu.matmul %38, %40, %cst_20 {dimension_numbers = #tpu.dot_dimension_numbers<[1], [0], [0], [1], [0, 0, 1, 1], [], []>} : vector<8x8xbf16>, vector<8x32xbf16>, vector<8x32xf32> -> vector<8x32xf32>
    %c0_i32_21 = arith.constant 0 : i32
    %42 = arith.cmpi eq, %arg2, %c0_i32_21 : i32
    %43 = arith.extui %42 : i1 to i32
    %c0_i32_22 = arith.constant 0 : i32
    %44 = arith.cmpi ne, %43, %c0_i32_22 : i32
    scf.if %44 {
      %c0_25 = arith.constant 0 : index
      %c0_26 = arith.constant 0 : index
      %c0_27 = arith.constant 0 : index
      %48 = vector.load %arg3[%c0_25, %c0_26, %c0_27] : memref<1x8x32xf32, #tpu.memory_space<vmem>>, vector<1x8x32xf32>
      %49 = vector.shape_cast %48 : vector<1x8x32xf32> to vector<8x32xf32>
      %50 = arith.addf %49, %41 : vector<8x32xf32>
      %c0_28 = arith.constant 0 : index
      %c0_29 = arith.constant 0 : index
      %c0_30 = arith.constant 0 : index
      %51 = vector.load %arg9[%c0_28, %c0_29, %c0_30] : memref<1x8x32xf32, #tpu.memory_space<vmem>>, vector<1x8x32xf32>
      %52 = vector.shape_cast %51 : vector<1x8x32xf32> to vector<8x32xf32>
      %53 = vector.shape_cast %50 : vector<8x32xf32> to vector<1x8x32xf32>
      tpu.vector_store %arg9[%c0_28, %c0_29, %c0_30], %53 {strides = array<i32>} : memref<1x8x32xf32, #tpu.memory_space<vmem>>, vector<1x8x32xf32>,
    } else {
    }
    %c0_i32_23 = arith.constant 0 : i32
    %45 = arith.cmpi sgt, %arg2, %c0_i32_23 : i32
    %46 = arith.extui %45 : i1 to i32
    %c0_i32_24 = arith.constant 0 : i32
    %47 = arith.cmpi ne, %46, %c0_i32_24 : i32
    scf.if %47 {
      %c0_25 = arith.constant 0 : index
      %c0_26 = arith.constant 0 : index
      %c0_27 = arith.constant 0 : index
      %48 = vector.load %arg9[%c0_25, %c0_26, %c0_27] : memref<1x8x32xf32, #tpu.memory_space<vmem>>, vector<1x8x32xf32>
      %49 = vector.shape_cast %48 : vector<1x8x32xf32> to vector<8x32xf32>
      %50 = arith.addf %49, %41 : vector<8x32xf32>
      %c0_28 = arith.constant 0 : index
      %c0_29 = arith.constant 0 : index
      %c0_30 = arith.constant 0 : index
      %51 = vector.load %arg9[%c0_28, %c0_29, %c0_30] : memref<1x8x32xf32, #tpu.memory_space<vmem>>, vector<1x8x32xf32>
      %52 = vector.shape_cast %51 : vector<1x8x32xf32> to vector<8x32xf32>
      %53 = vector.shape_cast %50 : vector<8x32xf32> to vector<1x8x32xf32>
      tpu.vector_store %arg9[%c0_28, %c0_29, %c0_30], %53 {strides = array<i32>} : memref<1x8x32xf32, #tpu.memory_space<vmem>>, vector<1x8x32xf32>,
    } else {
    }
    return
  }
  func.func @transform_0(%arg0: i32, %arg1: i32, %arg2: i32) -> (i32, i32, i32) {
    %c0_i32 = arith.constant 0 : i32
    %c0_i32_0 = arith.constant 0 : i32
    return %arg0, %arg1, %c0_i32 : i32, i32, i32
  }
  func.func @transform_1(%arg0: i32, %arg1: i32, %arg2: i32) -> (i32, i32, i32, i32) {
    %c0_i32 = arith.constant 0 : i32
    %c0_i32_0 = arith.constant 0 : i32
    return %arg0, %arg2, %arg1, %c0_i32 : i32, i32, i32, i32
  }
  func.func @transform_2(%arg0: i32, %arg1: i32, %arg2: i32) -> (i32, i32, i32, i32) {
    %c0_i32 = arith.constant 0 : i32
    %c0_i32_0 = arith.constant 0 : i32
    %c0_i32_1 = arith.constant 0 : i32
    return %arg0, %arg2, %c0_i32, %c0_i32_0 : i32, i32, i32, i32
  }
  func.func @transform_3(%arg0: i32, %arg1: i32, %arg2: i32) -> (i32, i32, i32, i32) {
    %c0_i32 = arith.constant 0 : i32
    %c0_i32_0 = arith.constant 0 : i32
    %c0_i32_1 = arith.constant 0 : i32
    return %arg0, %arg2, %c0_i32, %c0_i32_0 : i32, i32, i32, i32
  }
  func.func @transform_4(%arg0: i32, %arg1: i32, %arg2: i32) -> (i32, i32, i32) {
    %c0_i32 = arith.constant 0 : i32
    %c0_i32_0 = arith.constant 0 : i32
    %c0_i32_1 = arith.constant 0 : i32
    return %arg2, %c0_i32, %c0_i32_0 : i32, i32, i32
  }
  func.func @transform_5(%arg0: i32, %arg1: i32, %arg2: i32) -> (i32, i32) {
    %c0_i32 = arith.constant 0 : i32
    %c0_i32_0 = arith.constant 0 : i32
    %c0_i32_1 = arith.constant 0 : i32
    return %c0_i32, %c0_i32_0 : i32, i32
  }
  func.func @transform_6(%arg0: i32, %arg1: i32, %arg2: i32) -> (i32, i32, i32) {
    %c0_i32 = arith.constant 0 : i32
    %c0_i32_0 = arith.constant 0 : i32
    return %arg0, %arg1, %c0_i32 : i32, i32, i32
  }
}

module attributes {stable_mosaic.version = 11 : i64} {
  func.func @_ffn_kernel(%arg0: i32, %arg1: i32, %arg2: i32, %arg3: memref<1x8x32xf32, #tpu.memory_space<vmem>>, %arg4: memref<1x32xf32, #tpu.memory_space<vmem>>, %arg5: memref<32x96xbf16, #tpu.memory_space<vmem>>, %arg6: memref<32x96xbf16, #tpu.memory_space<vmem>>, %arg7: memref<96x32xbf16, #tpu.memory_space<vmem>>, %arg8: memref<1x8x32xf32, #tpu.memory_space<vmem>>, %arg9: memref<8x32xbf16, #tpu.memory_space<vmem>>) attributes {dimension_semantics = [#tpu.dimension_semantics<parallel>, #tpu.dimension_semantics<parallel>, #tpu.dimension_semantics<arbitrary>], iteration_bounds = array<i64: 2, 1, 1>, scalar_prefetch = 0 : i64, scratch_operands = 1 : i64, tpu.core_type = #tpu.core_type<tc>, window_params = [{transform_indices = @transform_0, window_bounds = array<i64: 1, 8, 32>}, {pipeline_mode = #tpu.pipeline_mode<synchronous>, transform_indices = @transform_1, window_bounds = array<i64: 1, 32>}, {transform_indices = @transform_2, window_bounds = array<i64: 32, 96>}, {transform_indices = @transform_3, window_bounds = array<i64: 32, 96>}, {transform_indices = @transform_4, window_bounds = array<i64: 96, 32>}, {transform_indices = @transform_5, window_bounds = array<i64: 1, 8, 32>}]} {
    %c0_i32 = arith.constant 0 : i32
    %0 = arith.cmpi eq, %arg2, %c0_i32 : i32
    %1 = arith.extui %0 : i1 to i32
    %c0_i32_0 = arith.constant 0 : i32
    %2 = arith.cmpi ne, %1, %c0_i32_0 : i32
    scf.if %2 {
      %c0_18 = arith.constant 0 : index
      %c0_19 = arith.constant 0 : index
      %c0_20 = arith.constant 0 : index
      %28 = vector.load %arg3[%c0_18, %c0_19, %c0_20] : memref<1x8x32xf32, #tpu.memory_space<vmem>>, vector<1x8x32xf32>
      %29 = vector.shape_cast %28 : vector<1x8x32xf32> to vector<8x32xf32>
      %30 = arith.mulf %29, %29 : vector<8x32xf32>
      %cst_21 = arith.constant dense<0.000000e+00> : vector<8xf32>
      %31 = vector.multi_reduction <add>, %30, %cst_21 [1] : vector<8x32xf32> to vector<8xf32>
      %32 = vector.shape_cast %31 : vector<8xf32> to vector<8x1xf32>
      %cst_22 = arith.constant 3.200000e+01 : f32
      %33 = vector.broadcast %cst_22 : f32 to vector<8x1xf32>
      %34 = arith.divf %32, %33 : vector<8x1xf32>
      %cst_23 = arith.constant 9.99999974E-6 : f32
      %35 = vector.broadcast %cst_23 : f32 to vector<8x1xf32>
      %36 = arith.addf %34, %35 : vector<8x1xf32>
      %37 = math.rsqrt %36 : vector<8x1xf32>
      %38 = vector.broadcast %37 : vector<8x1xf32> to vector<8x32xf32>
      %39 = arith.mulf %29, %38 : vector<8x32xf32>
      %c0_24 = arith.constant 0 : index
      %c0_25 = arith.constant 0 : index
      %40 = vector.load %arg4[%c0_24, %c0_25] : memref<1x32xf32, #tpu.memory_space<vmem>>, vector<1x32xf32>
      %41 = vector.broadcast %40 : vector<1x32xf32> to vector<8x32xf32>
      %42 = arith.mulf %39, %41 : vector<8x32xf32>
      %43 = arith.truncf %42 : vector<8x32xf32> to vector<8x32xbf16>
      %c0_26 = arith.constant 0 : index
      %c0_27 = arith.constant 0 : index
      %44 = vector.load %arg9[%c0_26, %c0_27] : memref<8x32xbf16, #tpu.memory_space<vmem>>, vector<8x32xbf16>
      tpu.vector_store %arg9[%c0_26, %c0_27], %43 {strides = array<i32>} : memref<8x32xbf16, #tpu.memory_space<vmem>>, vector<8x32xbf16>,
    } else {
    }
    %c0 = arith.constant 0 : index
    %c0_1 = arith.constant 0 : index
    %3 = vector.load %arg9[%c0, %c0_1] : memref<8x32xbf16, #tpu.memory_space<vmem>>, vector<8x32xbf16>
    %c0_2 = arith.constant 0 : index
    %c0_3 = arith.constant 0 : index
    %4 = vector.load %arg5[%c0_2, %c0_3] : memref<32x96xbf16, #tpu.memory_space<vmem>>, vector<32x96xbf16>
    %cst = arith.constant dense<0.000000e+00> : vector<8x96xf32>
    %5 = tpu.matmul %3, %4, %cst {dimension_numbers = #tpu.dot_dimension_numbers<[1], [0], [0], [1], [0, 0, 1, 1], [], []>} : vector<8x32xbf16>, vector<32x96xbf16>, vector<8x96xf32> -> vector<8x96xf32>
    %c0_4 = arith.constant 0 : index
    %c0_5 = arith.constant 0 : index
    %6 = vector.load %arg6[%c0_4, %c0_5] : memref<32x96xbf16, #tpu.memory_space<vmem>>, vector<32x96xbf16>
    %cst_6 = arith.constant dense<0.000000e+00> : vector<8x96xf32>
    %7 = tpu.matmul %3, %6, %cst_6 {dimension_numbers = #tpu.dot_dimension_numbers<[1], [0], [0], [1], [0, 0, 1, 1], [], []>} : vector<8x32xbf16>, vector<32x96xbf16>, vector<8x96xf32> -> vector<8x96xf32>
    %cst_7 = arith.constant 0.000000e+00 : f32
    %8 = vector.broadcast %cst_7 : f32 to vector<8x96xf32>
    %9 = arith.subf %8, %5 : vector<8x96xf32>
    %cst_8 = arith.constant 8.000000e+01 : f32
    %10 = vector.broadcast %cst_8 : f32 to vector<8x96xf32>
    %11 = arith.minimumf %9, %10 : vector<8x96xf32>
    %12 = math.exp %11 : vector<8x96xf32>
    %cst_9 = arith.constant 1.000000e+00 : f32
    %13 = vector.broadcast %cst_9 : f32 to vector<8x96xf32>
    %14 = arith.addf %13, %12 : vector<8x96xf32>
    %cst_10 = arith.constant 1.000000e+00 : f32
    %15 = vector.broadcast %cst_10 : f32 to vector<8x96xf32>
    %16 = arith.divf %15, %14 : vector<8x96xf32>
    %17 = arith.mulf %5, %16 : vector<8x96xf32>
    %18 = arith.mulf %17, %7 : vector<8x96xf32>
    %19 = arith.truncf %18 : vector<8x96xf32> to vector<8x96xbf16>
    %c0_11 = arith.constant 0 : index
    %c0_12 = arith.constant 0 : index
    %20 = vector.load %arg7[%c0_11, %c0_12] : memref<96x32xbf16, #tpu.memory_space<vmem>>, vector<96x32xbf16>
    %cst_13 = arith.constant dense<0.000000e+00> : vector<8x32xf32>
    %21 = tpu.matmul %19, %20, %cst_13 {dimension_numbers = #tpu.dot_dimension_numbers<[1], [0], [0], [1], [0, 0, 1, 1], [], []>} : vector<8x96xbf16>, vector<96x32xbf16>, vector<8x32xf32> -> vector<8x32xf32>
    %c0_i32_14 = arith.constant 0 : i32
    %22 = arith.cmpi eq, %arg2, %c0_i32_14 : i32
    %23 = arith.extui %22 : i1 to i32
    %c0_i32_15 = arith.constant 0 : i32
    %24 = arith.cmpi ne, %23, %c0_i32_15 : i32
    scf.if %24 {
      %c0_18 = arith.constant 0 : index
      %c0_19 = arith.constant 0 : index
      %c0_20 = arith.constant 0 : index
      %28 = vector.load %arg3[%c0_18, %c0_19, %c0_20] : memref<1x8x32xf32, #tpu.memory_space<vmem>>, vector<1x8x32xf32>
      %29 = vector.shape_cast %28 : vector<1x8x32xf32> to vector<8x32xf32>
      %30 = arith.addf %29, %21 : vector<8x32xf32>
      %c0_21 = arith.constant 0 : index
      %c0_22 = arith.constant 0 : index
      %c0_23 = arith.constant 0 : index
      %31 = vector.load %arg8[%c0_21, %c0_22, %c0_23] : memref<1x8x32xf32, #tpu.memory_space<vmem>>, vector<1x8x32xf32>
      %32 = vector.shape_cast %31 : vector<1x8x32xf32> to vector<8x32xf32>
      %33 = vector.shape_cast %30 : vector<8x32xf32> to vector<1x8x32xf32>
      tpu.vector_store %arg8[%c0_21, %c0_22, %c0_23], %33 {strides = array<i32>} : memref<1x8x32xf32, #tpu.memory_space<vmem>>, vector<1x8x32xf32>,
    } else {
    }
    %c0_i32_16 = arith.constant 0 : i32
    %25 = arith.cmpi sgt, %arg2, %c0_i32_16 : i32
    %26 = arith.extui %25 : i1 to i32
    %c0_i32_17 = arith.constant 0 : i32
    %27 = arith.cmpi ne, %26, %c0_i32_17 : i32
    scf.if %27 {
      %c0_18 = arith.constant 0 : index
      %c0_19 = arith.constant 0 : index
      %c0_20 = arith.constant 0 : index
      %28 = vector.load %arg8[%c0_18, %c0_19, %c0_20] : memref<1x8x32xf32, #tpu.memory_space<vmem>>, vector<1x8x32xf32>
      %29 = vector.shape_cast %28 : vector<1x8x32xf32> to vector<8x32xf32>
      %30 = arith.addf %29, %21 : vector<8x32xf32>
      %c0_21 = arith.constant 0 : index
      %c0_22 = arith.constant 0 : index
      %c0_23 = arith.constant 0 : index
      %31 = vector.load %arg8[%c0_21, %c0_22, %c0_23] : memref<1x8x32xf32, #tpu.memory_space<vmem>>, vector<1x8x32xf32>
      %32 = vector.shape_cast %31 : vector<1x8x32xf32> to vector<8x32xf32>
      %33 = vector.shape_cast %30 : vector<8x32xf32> to vector<1x8x32xf32>
      tpu.vector_store %arg8[%c0_21, %c0_22, %c0_23], %33 {strides = array<i32>} : memref<1x8x32xf32, #tpu.memory_space<vmem>>, vector<1x8x32xf32>,
    } else {
    }
    return
  }
  func.func @transform_0(%arg0: i32, %arg1: i32, %arg2: i32) -> (i32, i32, i32) {
    %c0_i32 = arith.constant 0 : i32
    %c0_i32_0 = arith.constant 0 : i32
    return %arg0, %arg1, %c0_i32 : i32, i32, i32
  }
  func.func @transform_1(%arg0: i32, %arg1: i32, %arg2: i32) -> (i32, i32) {
    %c0_i32 = arith.constant 0 : i32
    %c0_i32_0 = arith.constant 0 : i32
    %c0_i32_1 = arith.constant 0 : i32
    return %c0_i32, %c0_i32_0 : i32, i32
  }
  func.func @transform_2(%arg0: i32, %arg1: i32, %arg2: i32) -> (i32, i32) {
    %c0_i32 = arith.constant 0 : i32
    %c0_i32_0 = arith.constant 0 : i32
    return %c0_i32, %arg2 : i32, i32
  }
  func.func @transform_3(%arg0: i32, %arg1: i32, %arg2: i32) -> (i32, i32) {
    %c0_i32 = arith.constant 0 : i32
    %c0_i32_0 = arith.constant 0 : i32
    return %c0_i32, %arg2 : i32, i32
  }
  func.func @transform_4(%arg0: i32, %arg1: i32, %arg2: i32) -> (i32, i32) {
    %c0_i32 = arith.constant 0 : i32
    %c0_i32_0 = arith.constant 0 : i32
    return %arg2, %c0_i32 : i32, i32
  }
  func.func @transform_5(%arg0: i32, %arg1: i32, %arg2: i32) -> (i32, i32, i32) {
    %c0_i32 = arith.constant 0 : i32
    %c0_i32_0 = arith.constant 0 : i32
    return %arg0, %arg1, %c0_i32 : i32, i32, i32
  }
}

module attributes {stable_mosaic.version = 11 : i64} {
  func.func @_ffn_kernel(%arg0: i32, %arg1: i32, %arg2: i32, %arg3: memref<1x8x32xf32, #tpu.memory_space<vmem>>, %arg4: memref<1x32xf32, #tpu.memory_space<vmem>>, %arg5: memref<32x96xbf16, #tpu.memory_space<vmem>>, %arg6: memref<32x96xbf16, #tpu.memory_space<vmem>>, %arg7: memref<96x32xbf16, #tpu.memory_space<vmem>>, %arg8: memref<1x8x32xf32, #tpu.memory_space<vmem>>, %arg9: memref<8x32xbf16, #tpu.memory_space<vmem>>) attributes {dimension_semantics = [#tpu.dimension_semantics<parallel>, #tpu.dimension_semantics<parallel>, #tpu.dimension_semantics<arbitrary>], iteration_bounds = array<i64: 2, 1, 1>, scalar_prefetch = 0 : i64, scratch_operands = 1 : i64, tpu.core_type = #tpu.core_type<tc>, window_params = [{transform_indices = @transform_0, window_bounds = array<i64: 1, 8, 32>}, {pipeline_mode = #tpu.pipeline_mode<synchronous>, transform_indices = @transform_1, window_bounds = array<i64: 1, 32>}, {transform_indices = @transform_2, window_bounds = array<i64: 32, 96>}, {transform_indices = @transform_3, window_bounds = array<i64: 32, 96>}, {transform_indices = @transform_4, window_bounds = array<i64: 96, 32>}, {transform_indices = @transform_5, window_bounds = array<i64: 1, 8, 32>}]} {
    %c0_i32 = arith.constant 0 : i32
    %0 = arith.cmpi eq, %arg2, %c0_i32 : i32
    %1 = arith.extui %0 : i1 to i32
    %c0_i32_0 = arith.constant 0 : i32
    %2 = arith.cmpi ne, %1, %c0_i32_0 : i32
    scf.if %2 {
      %c0_18 = arith.constant 0 : index
      %c0_19 = arith.constant 0 : index
      %c0_20 = arith.constant 0 : index
      %28 = vector.load %arg3[%c0_18, %c0_19, %c0_20] : memref<1x8x32xf32, #tpu.memory_space<vmem>>, vector<1x8x32xf32>
      %29 = vector.shape_cast %28 : vector<1x8x32xf32> to vector<8x32xf32>
      %30 = arith.mulf %29, %29 : vector<8x32xf32>
      %cst_21 = arith.constant dense<0.000000e+00> : vector<8xf32>
      %31 = vector.multi_reduction <add>, %30, %cst_21 [1] : vector<8x32xf32> to vector<8xf32>
      %32 = vector.shape_cast %31 : vector<8xf32> to vector<8x1xf32>
      %cst_22 = arith.constant 3.200000e+01 : f32
      %33 = vector.broadcast %cst_22 : f32 to vector<8x1xf32>
      %34 = arith.divf %32, %33 : vector<8x1xf32>
      %cst_23 = arith.constant 9.99999974E-6 : f32
      %35 = vector.broadcast %cst_23 : f32 to vector<8x1xf32>
      %36 = arith.addf %34, %35 : vector<8x1xf32>
      %37 = math.rsqrt %36 : vector<8x1xf32>
      %38 = vector.broadcast %37 : vector<8x1xf32> to vector<8x32xf32>
      %39 = arith.mulf %29, %38 : vector<8x32xf32>
      %c0_24 = arith.constant 0 : index
      %c0_25 = arith.constant 0 : index
      %40 = vector.load %arg4[%c0_24, %c0_25] : memref<1x32xf32, #tpu.memory_space<vmem>>, vector<1x32xf32>
      %41 = vector.broadcast %40 : vector<1x32xf32> to vector<8x32xf32>
      %42 = arith.mulf %39, %41 : vector<8x32xf32>
      %43 = arith.truncf %42 : vector<8x32xf32> to vector<8x32xbf16>
      %c0_26 = arith.constant 0 : index
      %c0_27 = arith.constant 0 : index
      %44 = vector.load %arg9[%c0_26, %c0_27] : memref<8x32xbf16, #tpu.memory_space<vmem>>, vector<8x32xbf16>
      tpu.vector_store %arg9[%c0_26, %c0_27], %43 {strides = array<i32>} : memref<8x32xbf16, #tpu.memory_space<vmem>>, vector<8x32xbf16>,
    } else {
    }
    %c0 = arith.constant 0 : index
    %c0_1 = arith.constant 0 : index
    %3 = vector.load %arg9[%c0, %c0_1] : memref<8x32xbf16, #tpu.memory_space<vmem>>, vector<8x32xbf16>
    %c0_2 = arith.constant 0 : index
    %c0_3 = arith.constant 0 : index
    %4 = vector.load %arg5[%c0_2, %c0_3] : memref<32x96xbf16, #tpu.memory_space<vmem>>, vector<32x96xbf16>
    %cst = arith.constant dense<0.000000e+00> : vector<8x96xf32>
    %5 = tpu.matmul %3, %4, %cst {dimension_numbers = #tpu.dot_dimension_numbers<[1], [0], [0], [1], [0, 0, 1, 1], [], []>} : vector<8x32xbf16>, vector<32x96xbf16>, vector<8x96xf32> -> vector<8x96xf32>
    %c0_4 = arith.constant 0 : index
    %c0_5 = arith.constant 0 : index
    %6 = vector.load %arg6[%c0_4, %c0_5] : memref<32x96xbf16, #tpu.memory_space<vmem>>, vector<32x96xbf16>
    %cst_6 = arith.constant dense<0.000000e+00> : vector<8x96xf32>
    %7 = tpu.matmul %3, %6, %cst_6 {dimension_numbers = #tpu.dot_dimension_numbers<[1], [0], [0], [1], [0, 0, 1, 1], [], []>} : vector<8x32xbf16>, vector<32x96xbf16>, vector<8x96xf32> -> vector<8x96xf32>
    %cst_7 = arith.constant 0.000000e+00 : f32
    %8 = vector.broadcast %cst_7 : f32 to vector<8x96xf32>
    %9 = arith.subf %8, %5 : vector<8x96xf32>
    %cst_8 = arith.constant 8.000000e+01 : f32
    %10 = vector.broadcast %cst_8 : f32 to vector<8x96xf32>
    %11 = arith.minimumf %9, %10 : vector<8x96xf32>
    %12 = math.exp %11 : vector<8x96xf32>
    %cst_9 = arith.constant 1.000000e+00 : f32
    %13 = vector.broadcast %cst_9 : f32 to vector<8x96xf32>
    %14 = arith.addf %13, %12 : vector<8x96xf32>
    %cst_10 = arith.constant 1.000000e+00 : f32
    %15 = vector.broadcast %cst_10 : f32 to vector<8x96xf32>
    %16 = arith.divf %15, %14 : vector<8x96xf32>
    %17 = arith.mulf %5, %16 : vector<8x96xf32>
    %18 = arith.mulf %17, %7 : vector<8x96xf32>
    %19 = arith.truncf %18 : vector<8x96xf32> to vector<8x96xbf16>
    %c0_11 = arith.constant 0 : index
    %c0_12 = arith.constant 0 : index
    %20 = vector.load %arg7[%c0_11, %c0_12] : memref<96x32xbf16, #tpu.memory_space<vmem>>, vector<96x32xbf16>
    %cst_13 = arith.constant dense<0.000000e+00> : vector<8x32xf32>
    %21 = tpu.matmul %19, %20, %cst_13 {dimension_numbers = #tpu.dot_dimension_numbers<[1], [0], [0], [1], [0, 0, 1, 1], [], []>} : vector<8x96xbf16>, vector<96x32xbf16>, vector<8x32xf32> -> vector<8x32xf32>
    %c0_i32_14 = arith.constant 0 : i32
    %22 = arith.cmpi eq, %arg2, %c0_i32_14 : i32
    %23 = arith.extui %22 : i1 to i32
    %c0_i32_15 = arith.constant 0 : i32
    %24 = arith.cmpi ne, %23, %c0_i32_15 : i32
    scf.if %24 {
      %c0_18 = arith.constant 0 : index
      %c0_19 = arith.constant 0 : index
      %c0_20 = arith.constant 0 : index
      %28 = vector.load %arg3[%c0_18, %c0_19, %c0_20] : memref<1x8x32xf32, #tpu.memory_space<vmem>>, vector<1x8x32xf32>
      %29 = vector.shape_cast %28 : vector<1x8x32xf32> to vector<8x32xf32>
      %30 = arith.addf %29, %21 : vector<8x32xf32>
      %c0_21 = arith.constant 0 : index
      %c0_22 = arith.constant 0 : index
      %c0_23 = arith.constant 0 : index
      %31 = vector.load %arg8[%c0_21, %c0_22, %c0_23] : memref<1x8x32xf32, #tpu.memory_space<vmem>>, vector<1x8x32xf32>
      %32 = vector.shape_cast %31 : vector<1x8x32xf32> to vector<8x32xf32>
      %33 = vector.shape_cast %30 : vector<8x32xf32> to vector<1x8x32xf32>
      tpu.vector_store %arg8[%c0_21, %c0_22, %c0_23], %33 {strides = array<i32>} : memref<1x8x32xf32, #tpu.memory_space<vmem>>, vector<1x8x32xf32>,
    } else {
    }
    %c0_i32_16 = arith.constant 0 : i32
    %25 = arith.cmpi sgt, %arg2, %c0_i32_16 : i32
    %26 = arith.extui %25 : i1 to i32
    %c0_i32_17 = arith.constant 0 : i32
    %27 = arith.cmpi ne, %26, %c0_i32_17 : i32
    scf.if %27 {
      %c0_18 = arith.constant 0 : index
      %c0_19 = arith.constant 0 : index
      %c0_20 = arith.constant 0 : index
      %28 = vector.load %arg8[%c0_18, %c0_19, %c0_20] : memref<1x8x32xf32, #tpu.memory_space<vmem>>, vector<1x8x32xf32>
      %29 = vector.shape_cast %28 : vector<1x8x32xf32> to vector<8x32xf32>
      %30 = arith.addf %29, %21 : vector<8x32xf32>
      %c0_21 = arith.constant 0 : index
      %c0_22 = arith.constant 0 : index
      %c0_23 = arith.constant 0 : index
      %31 = vector.load %arg8[%c0_21, %c0_22, %c0_23] : memref<1x8x32xf32, #tpu.memory_space<vmem>>, vector<1x8x32xf32>
      %32 = vector.shape_cast %31 : vector<1x8x32xf32> to vector<8x32xf32>
      %33 = vector.shape_cast %30 : vector<8x32xf32> to vector<1x8x32xf32>
      tpu.vector_store %arg8[%c0_21, %c0_22, %c0_23], %33 {strides = array<i32>} : memref<1x8x32xf32, #tpu.memory_space<vmem>>, vector<1x8x32xf32>,
    } else {
    }
    return
  }
  func.func @transform_0(%arg0: i32, %arg1: i32, %arg2: i32) -> (i32, i32, i32) {
    %c0_i32 = arith.constant 0 : i32
    %c0_i32_0 = arith.constant 0 : i32
    return %arg0, %arg1, %c0_i32 : i32, i32, i32
  }
  func.func @transform_1(%arg0: i32, %arg1: i32, %arg2: i32) -> (i32, i32) {
    %c0_i32 = arith.constant 0 : i32
    %c0_i32_0 = arith.constant 0 : i32
    %c0_i32_1 = arith.constant 0 : i32
    return %c0_i32, %c0_i32_0 : i32, i32
  }
  func.func @transform_2(%arg0: i32, %arg1: i32, %arg2: i32) -> (i32, i32) {
    %c0_i32 = arith.constant 0 : i32
    %c0_i32_0 = arith.constant 0 : i32
    return %c0_i32, %arg2 : i32, i32
  }
  func.func @transform_3(%arg0: i32, %arg1: i32, %arg2: i32) -> (i32, i32) {
    %c0_i32 = arith.constant 0 : i32
    %c0_i32_0 = arith.constant 0 : i32
    return %c0_i32, %arg2 : i32, i32
  }
  func.func @transform_4(%arg0: i32, %arg1: i32, %arg2: i32) -> (i32, i32) {
    %c0_i32 = arith.constant 0 : i32
    %c0_i32_0 = arith.constant 0 : i32
    return %arg2, %c0_i32 : i32, i32
  }
  func.func @transform_5(%arg0: i32, %arg1: i32, %arg2: i32) -> (i32, i32, i32) {
    %c0_i32 = arith.constant 0 : i32
    %c0_i32_0 = arith.constant 0 : i32
    return %arg0, %arg1, %c0_i32 : i32, i32, i32
  }
}

</mosaic_0001>

<llo_original>
// kernel: tile.15
$region0: #{tile.15}
  #allocation0 [shape = 's32[1]{0}', space=sflag, size = 0x4, scoped, tag = 'scoped memory for tile.15']
  %s0 = inlined_call_operand.vmem [shape: f32[2], index: 0, kind: input, shape index: {}]
  %s1 = inlined_call_operand.vmem [shape: f32[4,2], index: 1, kind: output, shape index: {}]
  // Predicated region
  $region2: #{tile.15} parent=0 // pred_check
    _
  $region3: #{tile.15} parent=0 // pred_check_branch
    %3 = sbr.rel (0) target = $region5
  $region4: #{tile.15} parent=0 // pred_region
    _
  $region5: #{tile.15} parent=0 // pred_fallthru
    _
  %v4 = vld [vmem:[%s0] ss:$0 sm:$0xff]
  %5 = vst [vmem:[%s1] sm:$0xf] %v4

// kernel: tile.25
$region0: #{tile.25}
  %s0 = inlined_call_operand.vmem [shape: f32[8,4,8], index: 0, kind: input, shape index: {}]
  %s1 = inlined_call_operand.vmem [shape: f32[8,32], index: 1, kind: output, shape index: {}]
  $region1: #{tile.25} parent=0
    #allocation0 [shape = 'u8[32768]{0}', space=vmem, size = 0x8000, scoped, tag = 'scoped mem for input reshape']
    %s3 = sshllo.u32 0, 4
    %s4 = smul.addr 4, 7
    %s5 = scalar_lea.vmem %s0, %s4
    %v6 = vld [vmem:[%s5] sm:%s3]
    %s7 = scalar_lea.vmem [#allocation0], 56
    %8 = vst [vmem:[%s7] sm:%s3] %v6
    %s9 = smul.addr 4, 6
    %s10 = scalar_lea.vmem %s0, %s9
    %v11 = vld [vmem:[%s10] sm:%s3]
    %s12 = scalar_lea.vmem [#allocation0], 48
    %13 = vst [vmem:[%s12] sm:%s3] %v11
    %s14 = smul.addr 4, 5
    %s15 = scalar_lea.vmem %s0, %s14
    %v16 = vld [vmem:[%s15] sm:%s3]
    %s17 = scalar_lea.vmem [#allocation0], 40
    %18 = vst [vmem:[%s17] sm:%s3] %v16
    %s19 = smul.addr 4, 4
    %s20 = scalar_lea.vmem %s0, %s19
    %v21 = vld [vmem:[%s20] sm:%s3]
    %s22 = scalar_lea.vmem [#allocation0], 32
    %23 = vst [vmem:[%s22] sm:%s3] %v21
    %s24 = smul.addr 4, 3
    %s25 = scalar_lea.vmem %s0, %s24
    %v26 = vld [vmem:[%s25] sm:%s3]
    %s27 = scalar_lea.vmem [#allocation0], 24
    %28 = vst [vmem:[%s27] sm:%s3] %v26
    %s29 = smul.addr 4, 2
    %s30 = scalar_lea.vmem %s0, %s29
    %v31 = vld [vmem:[%s30] sm:%s3]
    %s32 = scalar_lea.vmem [#allocation0], 16
    %33 = vst [vmem:[%s32] sm:%s3] %v31
    %s34 = scalar_lea.vmem %s0, 4
    %v35 = vld [vmem:[%s34] sm:%s3]
    %s36 = scalar_lea.vmem [#allocation0], 8
    %37 = vst [vmem:[%s36] sm:%s3] %v35
    %v38 = vld [vmem:[%s0] sm:%s3]
    %39 = vst [vmem:[#allocation0] sm:%s3] %v38
    %v40 = vld [vmem:[#allocation0] ss:$8 sm:$0xf]
    %v41 = vld [vmem:[#allocation0] ss:$8 sm:$0xf0]
    %vm42 = vcmask 1047556
    %v43 = vsel %vm42, %v41, %v40
    %vm44 = vcmask 64512
    %45 = vst.msk [vmem:[%s1] sm:$0xff] %vm44, %v43
    %s46 = scalar_lea.vmem [#allocation0], 3
    %v47 = vld [vmem:[%s46] ss:$8 sm:$0xf]
    %s48 = scalar_lea.vmem [#allocation0], 3
    %v49 = vld [vmem:[%s48] ss:$8 sm:$0xf0]
    %vm50 = vcmask 1047556
    %v51 = vsel %vm50, %v49, %v47
    %52 = vrot.lane.b32.xlu0 %v51, 24
    %v53 = vpop.permute.xlu0 %52
    %vm54 = vcmask 261312
    %55 = vst.msk [vmem:[%s1] sm:$0xff] %vm54, %v53
    %s56 = scalar_lea.vmem [#allocation0], 2
    %v57 = vld [vmem:[%s56] ss:$8 sm:$0xf]
    %s58 = scalar_lea.vmem [#allocation0], 2
    %v59 = vld [vmem:[%s58] ss:$8 sm:$0xf0]
    %vm60 = vcmask 1047556
    %v61 = vsel %vm60, %v59, %v57
    %62 = vrot.lane.b32.xlu0 %v61, 16
    %v63 = vpop.permute.xlu0 %62
    %vm64 = vcmask 195712
    %65 = vst.msk [vmem:[%s1] sm:$0xff] %vm64, %v63
    %s66 = scalar_lea.vmem [#allocation0], 1
    %v67 = vld [vmem:[%s66] ss:$8 sm:$0xf]
    %s68 = scalar_lea.vmem [#allocation0], 1
    %v69 = vld [vmem:[%s68] ss:$8 sm:$0xf0]
    %vm70 = vcmask 1047556
    %v71 = vsel %vm70, %v69, %v67
    %72 = vrot.lane.b32.xlu0 %v71, 8
    %v73 = vpop.permute.xlu0 %72
    %vm74 = vcmask 130112
    %75 = vst.msk [vmem:[%s1] sm:$0xff] %vm74, %v73

// kernel: llama_stage_pallas.14
$region0: #{llama_stage_pallas.14}
  #allocation0 [shape = 'u32[]', space=smem, size = 0x4, offset = 0x4, fixed_abs, tag = 'smem constant byte address 0x4 - core index']
  #allocation1 [shape = 'u32[144,128]{1,0:T(1,128)}', space=vmem, size = 0x12000, scoped, tag = 'internal scratch']
  #allocation2 [shape = 'bf16[8,32]{1,0:T(8,128)(2,1)}', space=vmem, size = 0x800, scoped, tag = 'scratch operand']
  %s0 = inlined_call_operand.vmem [shape: f32[2,8,32], index: 0, kind: input, shape index: {}]
  %s1 = inlined_call_operand.vmem [shape: f32[1,32], index: 1, kind: input, shape index: {}]
  %s2 = inlined_call_operand.vmem [shape: bf16[32,96], index: 2, kind: input, shape index: {}]
  %s3 = inlined_call_operand.vmem [shape: bf16[32,96], index: 3, kind: input, shape index: {}]
  %s4 = inlined_call_operand.vmem [shape: bf16[96,32], index: 4, kind: input, shape index: {}]
  %s5 = inlined_call_operand.vmem [shape: f32[2,8,32], index: 5, kind: output, shape index: {}]
  %s6 = sld [smem:[#allocation0]]
  $region65: #{llama_stage_pallas.14} parent=0
    _
  %s8 = ssub.s32 1, %s6
  %s9 = scalar_select 0, %s8, %s6
  loop: start=0, step=1, limit=4
  $region2: #{llama_stage_pallas.14} parent=0 // loop_pre_header
    _
  $region3: #{llama_stage_pallas.14} parent=0 // loop_header
    %s11 = sphi 0, %s15
    %p12 = scmp.ge.s32.totalorder %s11, 4
    %s18 = sphi 0, %s37
    %s19 = sphi 0, %s33
    %s20 = sphi 0, %s29
    %s21 = sphi 0, %s18
    %s22 = sphi 0, %s19
    %s23 = sphi 0, %s20
    %s24 = sphi 0, %s21
    %s25 = sphi 0, %s22
    %s26 = sphi 0, %s23
    %s42 = sphi 0, %s44
    %s45 = sphi 0, %s42
    %s46 = sphi 0, %s45
    %s62 = sphi 0, %s46
    %s66 = sphi 0, %s66
    %s68 = sphi 0, %s66
    %s69 = sphi 0, %s68
    %s83 = sphi 0, %s69
    %s89 = sphi 0, %s91
    %s92 = sphi 0, %s89
    %s93 = sphi 0, %s92
    %s109 = sphi 0, %s93
    %s115 = sphi 0, %s117
    %s118 = sphi 0, %s115
    %s119 = sphi 0, %s118
    %s135 = sphi 0, %s119
    %s141 = sphi 0, %s143
    %s144 = sphi 0, %s141
    %s145 = sphi 0, %s144
    %s161 = sphi 0, %s145
    %s169 = sphi 0, %s171
    %s172 = sphi 0, %s169
    %s173 = sphi 0, %s172
    %s189 = sphi 0, %s173
  $region4: #{llama_stage_pallas.14} parent=0 // loop_header_branch
    %14 = sbr.rel (%p12) target = $region8
  $region5: #{llama_stage_pallas.14} parent=0 // loop_body
    %s16 = ssub.s32 %s11, 1
    %s17 = ssub.s32 %s11, 2
    %s27 = sadd.s32 1, %s20
    %p28 = scmp.ge.s32.totalorder %s27, 1
    %s29 = scalar_select %p28, 0, %s27
    %s30 = sadd.s32 1, %s19
    %s31 = scalar_select %p28, %s30, %s19
    %p32 = scmp.ge.s32.totalorder %s31, 1
    %s33 = scalar_select %p32, 0, %s31
    %s34 = sadd.s32 1, %s18
    %s35 = scalar_select %p32, %s34, %s18
    %p36 = scmp.ge.s32.totalorder %s35, 2
    %s37 = scalar_select %p36, 0, %s35
    %s38 = ssub.s32 %s18, %s37
    %s39 = ssub.s32 %s19, %s33
    %s40 = sor.u32 %s38, %s39
    %p41 = scmp.eq.s32.totalorder %s40, 0
    %s43 = sadd.s32 %s42, 1
    %s44 = scalar_select %p41, %s42, %s43
    %p47 = pneg %p41
    %p48 = scmp.eq.s32.totalorder %s11, 1
    %p49 = por %p47, %p48
    %p50 = scmp.ne.s32.totalorder %s42, %s45
    %p51 = scmp.eq.s32.totalorder %s11, 0
    %p52 = por %p50, %p51
    %p53 = scmp.ne.s32.totalorder %s42, %s45
    %p54 = scmp.eq.s32.totalorder %s16, 1
    %p55 = por %p53, %p54
    %p56 = scmp.ne.s32.totalorder %s45, %s46
    %p57 = scmp.eq.s32.totalorder %s16, 0
    %p58 = por %p56, %p57
    %p59 = scmp.ne.s32.totalorder %s45, %s46
    %p60 = scmp.eq.s32.totalorder %s17, 1
    %p61 = por %p59, %p60
    %p63 = scmp.ne.s32.totalorder %s46, %s62
    %p64 = scmp.eq.s32.totalorder %s17, 0
    %p65 = por %p63, %p64
    %s67 = sadd.s32 %s66, 1
    %p70 = scmp.eq.s32.totalorder %s11, 1
    %p71 = scmp.ne.s32.totalorder %s66, %s68
    %p72 = scmp.eq.s32.totalorder %s11, 0
    %p73 = por %p71, %p72
    %p74 = scmp.ne.s32.totalorder %s66, %s68
    %p75 = scmp.eq.s32.totalorder %s16, 1
    %p76 = por %p74, %p75
    %p77 = scmp.ne.s32.totalorder %s68, %s69
    %p78 = scmp.eq.s32.totalorder %s16, 0
    %p79 = por %p77, %p78
    %p80 = scmp.ne.s32.totalorder %s68, %s69
    %p81 = scmp.eq.s32.totalorder %s17, 1
    %p82 = por %p80, %p81
    %p84 = scmp.ne.s32.totalorder %s69, %s83
    %p85 = scmp.eq.s32.totalorder %s17, 0
    %p86 = por %p84, %p85
    %s87 = ssub.s32 %s20, %s29
    %p88 = scmp.eq.s32.totalorder %s87, 0
    %s90 = sadd.s32 %s89, 1
    %s91 = scalar_select %p88, %s89, %s90
    %p94 = pneg %p88
    %p95 = scmp.eq.s32.totalorder %s11, 1
    %p96 = por %p94, %p95
    %p97 = scmp.ne.s32.totalorder %s89, %s92
    %p98 = scmp.eq.s32.totalorder %s11, 0
    %p99 = por %p97, %p98
    %p100 = scmp.ne.s32.totalorder %s89, %s92
    %p101 = scmp.eq.s32.totalorder %s16, 1
    %p102 = por %p100, %p101
    %p103 = scmp.ne.s32.totalorder %s92, %s93
    %p104 = scmp.eq.s32.totalorder %s16, 0
    %p105 = por %p103, %p104
    %p106 = scmp.ne.s32.totalorder %s92, %s93
    %p107 = scmp.eq.s32.totalorder %s17, 1
    %p108 = por %p106, %p107
    %p110 = scmp.ne.s32.totalorder %s93, %s109
    %p111 = scmp.eq.s32.totalorder %s17, 0
    %p112 = por %p110, %p111
    %s113 = ssub.s32 %s20, %s29
    %p114 = scmp.eq.s32.totalorder %s113, 0
    %s116 = sadd.s32 %s115, 1
    %s117 = scalar_select %p114, %s115, %s116
    %p120 = pneg %p114
    %p121 = scmp.eq.s32.totalorder %s11, 1
    %p122 = por %p120, %p121
    %p123 = scmp.ne.s32.totalorder %s115, %s118
    %p124 = scmp.eq.s32.totalorder %s11, 0
    %p125 = por %p123, %p124
    %p126 = scmp.ne.s32.totalorder %s115, %s118
    %p127 = scmp.eq.s32.totalorder %s16, 1
    %p128 = por %p126, %p127
    %p129 = scmp.ne.s32.totalorder %s118, %s119
    %p130 = scmp.eq.s32.totalorder %s16, 0
    %p131 = por %p129, %p130
    %p132 = scmp.ne.s32.totalorder %s118, %s119
    %p133 = scmp.eq.s32.totalorder %s17, 1
    %p134 = por %p132, %p133
    %p136 = scmp.ne.s32.totalorder %s119, %s135
    %p137 = scmp.eq.s32.totalorder %s17, 0
    %p138 = por %p136, %p137
    %s139 = ssub.s32 %s20, %s29
    %p140 = scmp.eq.s32.totalorder %s139, 0
    %s142 = sadd.s32 %s141, 1
    %s143 = scalar_select %p140, %s141, %s142
    %p146 = pneg %p140
    %p147 = scmp.eq.s32.totalorder %s11, 1
    %p148 = por %p146, %p147
    %p149 = scmp.ne.s32.totalorder %s141, %s144
    %p150 = scmp.eq.s32.totalorder %s11, 0
    %p151 = por %p149, %p150
    %p152 = scmp.ne.s32.totalorder %s141, %s144
    %p153 = scmp.eq.s32.totalorder %s16, 1
    %p154 = por %p152, %p153
    %p155 = scmp.ne.s32.totalorder %s144, %s145
    %p156 = scmp.eq.s32.totalorder %s16, 0
    %p157 = por %p155, %p156
    %p158 = scmp.ne.s32.totalorder %s144, %s145
    %p159 = scmp.eq.s32.totalorder %s17, 1
    %p160 = por %p158, %p159
    %p162 = scmp.ne.s32.totalorder %s145, %s161
    %p163 = scmp.eq.s32.totalorder %s17, 0
    %p164 = por %p162, %p163
    %s165 = ssub.s32 %s18, %s37
    %s166 = ssub.s32 %s19, %s33
    %s167 = sor.u32 %s165, %s166
    %p168 = scmp.eq.s32.totalorder %s167, 0
    %s170 = sadd.s32 %s169, 1
    %s171 = scalar_select %p168, %s169, %s170
    %p174 = pneg %p168
    %p175 = scmp.eq.s32.totalorder %s11, 1
    %p176 = por %p174, %p175
    %p177 = scmp.ne.s32.totalorder %s169, %s172
    %p178 = scmp.eq.s32.totalorder %s11, 0
    %p179 = por %p177, %p178
    %p180 = scmp.ne.s32.totalorder %s169, %s172
    %p181 = scmp.eq.s32.totalorder %s16, 1
    %p182 = por %p180, %p181
    %p183 = scmp.ne.s32.totalorder %s172, %s173
    %p184 = scmp.eq.s32.totalorder %s16, 0
    %p185 = por %p183, %p184
    %p186 = scmp.ne.s32.totalorder %s172, %s173
    %p187 = scmp.eq.s32.totalorder %s17, 1
    %p188 = por %p186, %p187
    %p190 = scmp.ne.s32.totalorder %s173, %s189
    %p191 = scmp.eq.s32.totalorder %s17, 0
    %p192 = por %p190, %p191
    %p193 = scmp.le.s32.totalorder 1, %s11
    %p194 = scmp.lt.s32.totalorder %s11, 3
    %p195 = pnand %p193, %p194
    %p196 = pneg %p195
    // Predicated region
    $region9: #{llama_stage_pallas.14} parent=5 // pred_check
      _
    $region10: #{llama_stage_pallas.14} parent=5 // pred_check_branch
      %198 = sbr.rel (%p195) target = $region12
    $region11: #{llama_stage_pallas.14} parent=5 // pred_region
      %s199 = ssub.s32 %s11, 1
      // Predicated region
      $region13: #{llama_stage_pallas.14} parent=11 // pred_check
        %p200 = pneg %p79
      $region14: #{llama_stage_pallas.14} parent=11 // pred_check_branch
        %202 = sbr.rel (%p200) target = $region16
      $region15: #{llama_stage_pallas.14} parent=11 // pred_region
        _
      $region16: #{llama_stage_pallas.14} parent=11 // pred_fallthru
        _
      // Predicated region
      $region17: #{llama_stage_pallas.14} parent=11 // pred_check
        %p203 = pneg %p105
      $region18: #{llama_stage_pallas.14} parent=11 // pred_check_branch
        %205 = sbr.rel (%p203) target = $region20
      $region19: #{llama_stage_pallas.14} parent=11 // pred_region
        %p206 = scmp.lt.s32.totalorder %s23, 0
        %s207 = scalar_select %p206, %s23, 0
        %s208 = smul.addr %s207, 4
        %s209 = scalar_lea.vmem %s2, %s208
      $region20: #{llama_stage_pallas.14} parent=11 // pred_fallthru
        _
      // Predicated region
      $region21: #{llama_stage_pallas.14} parent=11 // pred_check
        %p210 = pneg %p131
      $region22: #{llama_stage_pallas.14} parent=11 // pred_check_branch
        %212 = sbr.rel (%p210) target = $region24
      $region23: #{llama_stage_pallas.14} parent=11 // pred_region
        %p213 = scmp.lt.s32.totalorder %s23, 0
        %s214 = scalar_select %p213, %s23, 0
        %s215 = smul.addr %s214, 4
        %s216 = scalar_lea.vmem %s3, %s215
      $region24: #{llama_stage_pallas.14} parent=11 // pred_fallthru
        _
      // Predicated region
      $region25: #{llama_stage_pallas.14} parent=11 // pred_check
        %p217 = pneg %p157
      $region26: #{llama_stage_pallas.14} parent=11 // pred_check_branch
        %219 = sbr.rel (%p217) target = $region28
      $region27: #{llama_stage_pallas.14} parent=11 // pred_region
        %s220 = smul.u32 12, %s23
        %p221 = scmp.lt.s32.totalorder %s220, 11
        %s222 = scalar_select %p221, %s220, 11
        %s223 = smul.addr %s222, 4
        %s224 = scalar_lea.vmem %s4, %s223
        %s225 = smul.u32 12, %s23
      $region28: #{llama_stage_pallas.14} parent=11 // pred_fallthru
        _
    $region12: #{llama_stage_pallas.14} parent=5 // pred_fallthru
      _
    %p226 = scmp.lt.s32.totalorder %s11, 2
    // Predicated region
    $region29: #{llama_stage_pallas.14} parent=5 // pred_check
      %p227 = pneg %p226
    $region30: #{llama_stage_pallas.14} parent=5 // pred_check_branch
      %229 = sbr.rel (%p227) target = $region32
    $region31: #{llama_stage_pallas.14} parent=5 // pred_region
      // Predicated region
      $region33: #{llama_stage_pallas.14} parent=31 // pred_check
        %p230 = pneg %p52
      $region34: #{llama_stage_pallas.14} parent=31 // pred_check_branch
        %232 = sbr.rel (%p230) target = $region36
      $region35: #{llama_stage_pallas.14} parent=31 // pred_region
        %p233 = scmp.lt.s32.totalorder %s18, 1
        %s234 = scalar_select %p233, %s18, 1
        %p235 = scmp.lt.s32.totalorder %s19, 0
        %s236 = scalar_select %p235, %s19, 0
        %s237 = sadd.s32 %s236, %s234
        %s238 = smul.addr %s237, 8
        %s239 = scalar_lea.vmem %s0, %s238
      $region36: #{llama_stage_pallas.14} parent=31 // pred_fallthru
        _
    $region32: #{llama_stage_pallas.14} parent=5 // pred_fallthru
      _
    %p240 = scmp.le.s32.totalorder 1, %s11
    %p241 = scmp.lt.s32.totalorder %s11, 3
    %p242 = pnand %p240, %p241
    %p243 = pneg %p242
    // Predicated region
    $region37: #{llama_stage_pallas.14} parent=5 // pred_check
      _
    $region38: #{llama_stage_pallas.14} parent=5 // pred_check_branch
      %245 = sbr.rel (%p242) target = $region40
    $region39: #{llama_stage_pallas.14} parent=5 // pred_region
      %s246 = ssub.s32 %s11, 1
      %p247 = scmp.lt.s32.totalorder %s21, 1
      %s248 = scalar_select %p247, %s21, 1
      %p249 = scmp.lt.s32.totalorder %s22, 0
      %s250 = scalar_select %p249, %s22, 0
      %s251 = sadd.s32 %s250, %s248
      %s252 = smul.addr %s251, 8
      %s253 = scalar_lea.vmem %s0, %s252
      %p254 = pneg %p58
      %p255 = pneg %p55
      %p256 = pneg %p79
      %p257 = pneg %p76
      %p258 = scmp.lt.s32.totalorder %s23, 0
      %s259 = scalar_select %p258, %s23, 0
      %s260 = smul.addr %s259, 4
      %s261 = scalar_lea.vmem %s2, %s260
      %p262 = pneg %p105
      %p263 = pneg %p102
      %p264 = scmp.lt.s32.totalorder %s23, 0
      %s265 = scalar_select %p264, %s23, 0
      %s266 = smul.addr %s265, 4
      %s267 = scalar_lea.vmem %s3, %s266
      %p268 = pneg %p131
      %p269 = pneg %p128
      %s270 = smul.u32 12, %s23
      %p271 = scmp.lt.s32.totalorder %s270, 11
      %s272 = scalar_select %p271, %s270, 11
      %s273 = smul.addr %s272, 4
      %s274 = scalar_lea.vmem %s4, %s273
      %p275 = pneg %p157
      %p276 = pneg %p154
      %p277 = pneg %p185
      %p278 = pneg %p182
      %p279 = scmp.lt.s32.totalorder %s21, 1
      %s280 = scalar_select %p279, %s21, 1
      %p281 = scmp.lt.s32.totalorder %s22, 0
      %s282 = scalar_select %p281, %s22, 0
      %s283 = sadd.s32 %s282, %s280
      %s284 = smul.addr %s283, 8
      %s285 = scalar_lea.vmem %s5, %s284
      %p286 = scmp.lt.s32.totalorder %s21, 1
      %s287 = scalar_select %p286, %s21, 1
      %p288 = scmp.lt.s32.totalorder %s22, 0
      %s289 = scalar_select %p288, %s22, 0
      %s290 = sadd.s32 %s289, %s287
      %s291 = smul.addr %s290, 8
      %s292 = scalar_lea.vmem %s0, %s291
      %p293 = scmp.lt.s32.totalorder %s23, 0
      %s294 = scalar_select %p293, %s23, 0
      %s295 = smul.addr %s294, 4
      %s296 = scalar_lea.vmem %s2, %s295
      %p297 = scmp.lt.s32.totalorder %s23, 0
      %s298 = scalar_select %p297, %s23, 0
      %s299 = smul.addr %s298, 4
      %s300 = scalar_lea.vmem %s3, %s299
      %s301 = smul.u32 12, %s23
      %p302 = scmp.lt.s32.totalorder %s301, 11
      %s303 = scalar_select %p302, %s301, 11
      %s304 = smul.addr %s303, 4
      %s305 = scalar_lea.vmem %s4, %s304
      %s306 = smul.u32 12, %s23
      %p307 = scmp.lt.s32.totalorder %s21, 1
      %s308 = scalar_select %p307, %s21, 1
      %p309 = scmp.lt.s32.totalorder %s22, 0
      %s310 = scalar_select %p309, %s22, 0
      %s311 = sadd.s32 %s310, %s308
      %s312 = smul.addr %s311, 8
      %s313 = scalar_lea.vmem %s5, %s312
      %p315 = scmp.eq.s32.totalorder %s23, 0
      // Predicated region
      $region41: #{llama_stage_pallas.14} parent=39 // pred_check
        %p316 = pneg %p315
      $region42: #{llama_stage_pallas.14} parent=39 // pred_check_branch
        %318 = sbr.rel (%p316) target = $region44
      $region43: #{llama_stage_pallas.14} parent=39 // pred_region
        %v319 = vld [vmem:[%s292] sm:$0xff]
        %v320 = vmul.f32 %v319, %v319
        %vm321 = vcmask 261120
        %v322 = vsel %vm321, %v320, 0.0
        %323 = vadd.xlane.f32.xlu0 %v322
        %v324 = vpop.xlane.xlu0 %323
        %v325 = vrcp.pop 32.0
        %v326 = vmul.f32 %v324, %v325
        %v327 = vadd.f32 %v326, 1e-05
        %v328 = vrsqrt.pop %v327
        %v329 = vmul.f32 %v319, %v328
        %v330 = vld [vmem:[%s1] sm:$0x1]
        %v332 = vlaneseq
        %v333 = vshrl.u32 %v332, 7
        %v334 = vsub.s32 0, %v333
        %v335 = vrot.slane %v330, %v334
        %v337 = vmul.f32 %v329, %v335
        %v338 = vpack.c.bf16 %v337, %v337
        %vm339 = vcmask 257024
        %340 = vst.msk [vmem:[#allocation2] sm:$0xf] %vm339, %v338
      $region44: #{llama_stage_pallas.14} parent=39 // pred_fallthru
        _
      %v341 = vld [vmem:[#allocation2] sm:$0xf]
      %v342 = vld [vmem:[%s296] sm:$0xf]
      %v343 = vld [vmem:[%s296 + $0x4] sm:$0xf]
      %v344 = vld [vmem:[%s296 + $0x8] sm:$0xf]
      %v345 = vld [vmem:[%s296 + $0xc] sm:$0xf]
      %v350 = vunpack.c.l.b16 %v342
      %v351 = vunpack.c.l.b16 %v343
      %v352 = vunpack.c.l.b16 %v344
      %v353 = vunpack.c.l.b16 %v345
      %v354 = vpack.c.b16 %v351, %v350
      %v355 = vpack.c.b16 %v353, %v352
      %vm358 = vcmask 261120
      %v360 = vsel %vm358, %v341, 0
      %362 = vmatprep.subr.bf16.mxu0 0
      %363 = vmatpush1.bf16.msra.mxu0 %v354
      %364 = vmatprep.subr.bf16.mxu0 0
      %365 = vmatpush1.bf16.msra.mxu0 %v355
      %366 = vmatprep.subr.bf16.mxu0 0
      %367 = vmatpush1.bf16.msra.mxu0 0
      %368 = vmatprep.subr.bf16.mxu0 0
      %369 = vmatpush1.bf16.msra.mxu0 0
      %370 = vmatprep.subr.bf16.mxu0 0
      %371 = vmatpush1.bf16.msra.mxu0 0
      %372 = vmatprep.subr.bf16.mxu0 0
      %373 = vmatpush1.bf16.msra.mxu0 0
      %374 = vmatprep.subr.bf16.mxu0 0
      %375 = vmatpush1.bf16.msra.mxu0 0
      %376 = vmatprep.subr.bf16.mxu0 0
      %377 = vmatpush1.bf16.msra.mxu0 0
      %378 = vmatprep.subr.bf16.mxu0 0
      %379 = vmatpush1.bf16.msra.mxu0 0
      %380 = vmatprep.subr.bf16.mxu0 0
      %381 = vmatpush1.bf16.msra.mxu0 0
      %382 = vmatprep.subr.bf16.mxu0 0
      %383 = vmatpush1.bf16.msra.mxu0 0
      %384 = vmatprep.subr.bf16.mxu0 0
      %385 = vmatpush1.bf16.msra.mxu0 0
      %386 = vmatprep.subr.bf16.mxu0 0
      %387 = vmatpush1.bf16.msra.mxu0 0
      %388 = vmatprep.subr.bf16.mxu0 0
      %389 = vmatpush1.bf16.msra.mxu0 0
      %390 = vmatprep.subr.bf16.mxu0 0
      %391 = vmatpush1.bf16.msra.mxu0 0
      %392 = vmatprep.subr.bf16.mxu0 0
      %393 = vmatpush1.bf16.msra.mxu0 0
      %394 = vmatprep.mubr.bf16.mxu0 0
      %395 = vmatmul.mubr.bf16.gmra.mrb[0].mxu0 %v360
      %v396 = vpop.f32.mrb[0].mxu0
      %v397 = vadd.f32 0.0, %v396
      %v398 = vpop.f32.mrb[0].mxu0
      %v399 = vpop.f32.mrb[0].mxu0
      %v400 = vpop.f32.mrb[0].mxu0
      %401 = vdwg.mxu0
      %v402 = vld [vmem:[%s300] sm:$0xf]
      %v403 = vld [vmem:[%s300 + $0x4] sm:$0xf]
      %v404 = vld [vmem:[%s300 + $0x8] sm:$0xf]
      %v405 = vld [vmem:[%s300 + $0xc] sm:$0xf]
      %v410 = vunpack.c.l.b16 %v402
      %v411 = vunpack.c.l.b16 %v403
      %v412 = vunpack.c.l.b16 %v404
      %v413 = vunpack.c.l.b16 %v405
      %v414 = vpack.c.b16 %v411, %v410
      %v415 = vpack.c.b16 %v413, %v412
      %418 = vmatprep.subr.bf16.mxu0 0
      %419 = vmatpush1.bf16.msra.mxu0 %v414
      %420 = vmatprep.subr.bf16.mxu0 0
      %421 = vmatpush1.bf16.msra.mxu0 %v415
      %422 = vmatprep.subr.bf16.mxu0 0
      %423 = vmatpush1.bf16.msra.mxu0 0
      %424 = vmatprep.subr.bf16.mxu0 0
      %425 = vmatpush1.bf16.msra.mxu0 0
      %426 = vmatprep.subr.bf16.mxu0 0
      %427 = vmatpush1.bf16.msra.mxu0 0
      %428 = vmatprep.subr.bf16.mxu0 0
      %429 = vmatpush1.bf16.msra.mxu0 0
      %430 = vmatprep.subr.bf16.mxu0 0
      %431 = vmatpush1.bf16.msra.mxu0 0
      %432 = vmatprep.subr.bf16.mxu0 0
      %433 = vmatpush1.bf16.msra.mxu0 0
      %434 = vmatprep.subr.bf16.mxu0 0
      %435 = vmatpush1.bf16.msra.mxu0 0
      %436 = vmatprep.subr.bf16.mxu0 0
      %437 = vmatpush1.bf16.msra.mxu0 0
      %438 = vmatprep.subr.bf16.mxu0 0
      %439 = vmatpush1.bf16.msra.mxu0 0
      %440 = vmatprep.subr.bf16.mxu0 0
      %441 = vmatpush1.bf16.msra.mxu0 0
      %442 = vmatprep.subr.bf16.mxu0 0
      %443 = vmatpush1.bf16.msra.mxu0 0
      %444 = vmatprep.subr.bf16.mxu0 0
      %445 = vmatpush1.bf16.msra.mxu0 0
      %446 = vmatprep.subr.bf16.mxu0 0
      %447 = vmatpush1.bf16.msra.mxu0 0
      %448 = vmatprep.subr.bf16.mxu0 0
      %449 = vmatpush1.bf16.msra.mxu0 0
      %450 = vmatprep.mubr.bf16.mxu0 0
      %451 = vmatmul.mubr.bf16.gmra.mrb[0].mxu0 %v360
      %v452 = vpop.f32.mrb[0].mxu0
      %v453 = vadd.f32 0.0, %v452
      %v454 = vpop.f32.mrb[0].mxu0
      %v455 = vpop.f32.mrb[0].mxu0
      %v456 = vpop.f32.mrb[0].mxu0
      %457 = vdwg.mxu0
      %v458 = vsub.f32 0.0, %v397
      %v459 = vmin.f32 %v458, 80.0
      %v460 = vmul.f32 %v459, 1.442695
      %v461 = vpow.pop %v460
      %v462 = vadd.f32 %v461, 1.0
      %v463 = vrcp.pop %v462
      %v464 = vmul.f32 1.0, %v463
      %v465 = vmul.f32 %v397, %v464
      %v466 = vmul.f32 %v465, %v453
      %v467 = vpack.c.bf16 %v466, %v466
      %v468 = vld [vmem:[%s305] sm:$0xf]
      %v469 = vld [vmem:[%s305 + $0x4] sm:$0xf]
      %v470 = vld [vmem:[%s305 + $0x8] sm:$0xf]
      %v471 = vld [vmem:[%s305 + $0xc] sm:$0xf]
      %v472 = vld [vmem:[%s305 + $0x10] sm:$0xf]
      %v473 = vld [vmem:[%s305 + $0x14] sm:$0xf]
      %v474 = vld [vmem:[%s305 + $0x18] sm:$0xf]
      %v475 = vld [vmem:[%s305 + $0x1c] sm:$0xf]
      %v476 = vld [vmem:[%s305 + $0x20] sm:$0xf]
      %v477 = vld [vmem:[%s305 + $0x24] sm:$0xf]
      %v478 = vld [vmem:[%s305 + $0x28] sm:$0xf]
      %v479 = vld [vmem:[%s305 + $0x2c] sm:$0xf]
      %v492 = vunpack.c.l.b16 %v468
      %v493 = vunpack.c.l.b16 %v469
      %v494 = vunpack.c.l.b16 %v470
      %v495 = vunpack.c.l.b16 %v471
      %v496 = vunpack.c.l.b16 %v472
      %v497 = vunpack.c.l.b16 %v473
      %v498 = vunpack.c.l.b16 %v474
      %v499 = vunpack.c.l.b16 %v475
      %v500 = vunpack.c.l.b16 %v476
      %v501 = vunpack.c.l.b16 %v477
      %v502 = vunpack.c.l.b16 %v478
      %v503 = vunpack.c.l.b16 %v479
      %v504 = vpack.c.b16 %v493, %v492
      %v505 = vpack.c.b16 %v495, %v494
      %v506 = vpack.c.b16 %v497, %v496
      %v507 = vpack.c.b16 %v499, %v498
      %v508 = vpack.c.b16 %v501, %v500
      %v509 = vpack.c.b16 %v503, %v502
      %vm516 = vcmask 785408
      %v518 = vsel %vm516, %v467, 0
      %520 = vmatprep.subr.bf16.mxu0 0
      %521 = vmatpush1.bf16.msra.mxu0 %v504
      %522 = vmatprep.subr.bf16.mxu0 0
      %523 = vmatpush1.bf16.msra.mxu0 %v505
      %524 = vmatprep.subr.bf16.mxu0 0
      %525 = vmatpush1.bf16.msra.mxu0 %v506
      %526 = vmatprep.subr.bf16.mxu0 0
      %527 = vmatpush1.bf16.msra.mxu0 %v507
      %528 = vmatprep.subr.bf16.mxu0 0
      %529 = vmatpush1.bf16.msra.mxu0 %v508
      %530 = vmatprep.subr.bf16.mxu0 0
      %531 = vmatpush1.bf16.msra.mxu0 %v509
      %532 = vmatprep.subr.bf16.mxu0 0
      %533 = vmatpush1.bf16.msra.mxu0 0
      %534 = vmatprep.subr.bf16.mxu0 0
      %535 = vmatpush1.bf16.msra.mxu0 0
      %536 = vmatprep.subr.bf16.mxu0 0
      %537 = vmatpush1.bf16.msra.mxu0 0
      %538 = vmatprep.subr.bf16.mxu0 0
      %539 = vmatpush1.bf16.msra.mxu0 0
      %540 = vmatprep.subr.bf16.mxu0 0
      %541 = vmatpush1.bf16.msra.mxu0 0
      %542 = vmatprep.subr.bf16.mxu0 0
      %543 = vmatpush1.bf16.msra.mxu0 0
      %544 = vmatprep.subr.bf16.mxu0 0
      %545 = vmatpush1.bf16.msra.mxu0 0
      %546 = vmatprep.subr.bf16.mxu0 0
      %547 = vmatpush1.bf16.msra.mxu0 0
      %548 = vmatprep.subr.bf16.mxu0 0
      %549 = vmatpush1.bf16.msra.mxu0 0
      %550 = vmatprep.subr.bf16.mxu0 0
      %551 = vmatpush1.bf16.msra.mxu0 0
      %552 = vmatprep.mubr.bf16.mxu0 0
      %553 = vmatmul.mubr.bf16.gmra.mrb[0].mxu0 %v518
      %v554 = vpop.f32.mrb[0].mxu0
      %v555 = vadd.f32 0.0, %v554
      %v556 = vpop.f32.mrb[0].mxu0
      %v557 = vpop.f32.mrb[0].mxu0
      %v558 = vpop.f32.mrb[0].mxu0
      %559 = vdwg.mxu0
      // Predicated region
      $region45: #{llama_stage_pallas.14} parent=39 // pred_check
        %p560 = pneg %p315
      $region46: #{llama_stage_pallas.14} parent=39 // pred_check_branch
        %562 = sbr.rel (%p560) target = $region48
      $region47: #{llama_stage_pallas.14} parent=39 // pred_region
        %v563 = vld [vmem:[%s292] sm:$0xff]
        %v564 = vadd.f32 %v563, %v555
        %565 = vst.msk [vmem:[%s313] sm:$0xff] %vm358, %v564
      $region48: #{llama_stage_pallas.14} parent=39 // pred_fallthru
        _
      %p566 = scmp.gt.s32.totalorder %s23, 0
      // Predicated region
      $region49: #{llama_stage_pallas.14} parent=39 // pred_check
        %p567 = pneg %p566
      $region50: #{llama_stage_pallas.14} parent=39 // pred_check_branch
        %569 = sbr.rel (%p567) target = $region52
      $region51: #{llama_stage_pallas.14} parent=39 // pred_region
        %v570 = vld [vmem:[%s313] sm:$0xff]
        %v571 = vadd.f32 %v570, %v555
        %572 = vst.msk [vmem:[%s313] sm:$0xff] %vm358, %v571
      $region52: #{llama_stage_pallas.14} parent=39 // pred_fallthru
        _
      %p573 = scmp.lt.s32.totalorder %s21, 1
      %s574 = scalar_select %p573, %s21, 1
      %p575 = scmp.lt.s32.totalorder %s22, 0
      %s576 = scalar_select %p575, %s22, 0
      %s577 = sadd.s32 %s576, %s574
      %s578 = smul.addr %s577, 8
      %s579 = scalar_lea.vmem %s5, %s578
      // Predicated region
      $region53: #{llama_stage_pallas.14} parent=39 // pred_check
        %p580 = pneg %p182
      $region54: #{llama_stage_pallas.14} parent=39 // pred_check_branch
        %582 = sbr.rel (%p580) target = $region56
      $region55: #{llama_stage_pallas.14} parent=39 // pred_region
        _
      $region56: #{llama_stage_pallas.14} parent=39 // pred_fallthru
        _
    $region40: #{llama_stage_pallas.14} parent=5 // pred_fallthru
      _
    %p583 = scmp.le.s32.totalorder 2, %s11
    // Predicated region
    $region57: #{llama_stage_pallas.14} parent=5 // pred_check
      %p584 = pneg %p583
    $region58: #{llama_stage_pallas.14} parent=5 // pred_check_branch
      %586 = sbr.rel (%p584) target = $region60
    $region59: #{llama_stage_pallas.14} parent=5 // pred_region
      %s587 = ssub.s32 %s11, 2
      // Predicated region
      $region61: #{llama_stage_pallas.14} parent=59 // pred_check
        %p588 = pneg %p188
      $region62: #{llama_stage_pallas.14} parent=59 // pred_check_branch
        %590 = sbr.rel (%p588) target = $region64
      $region63: #{llama_stage_pallas.14} parent=59 // pred_region
        %p591 = scmp.lt.s32.totalorder %s24, 1
        %s592 = scalar_select %p591, %s24, 1
        %p593 = scmp.lt.s32.totalorder %s25, 0
        %s594 = scalar_select %p593, %s25, 0
        %s595 = sadd.s32 %s594, %s592
        %s596 = smul.addr %s595, 8
        %s597 = scalar_lea.vmem %s5, %s596
      $region64: #{llama_stage_pallas.14} parent=59 // pred_fallthru
        _
    $region60: #{llama_stage_pallas.14} parent=5 // pred_fallthru
      _
  $region6: #{llama_stage_pallas.14} parent=0 // loop_footer
    %s15 = sadd.s32 1, %s11
  $region7: #{llama_stage_pallas.14} parent=0 // loop_footer_branch
    %10 = sbr.rel target = $region3
  $region8: #{llama_stage_pallas.14} parent=0 // loop_exit
    _

// kernel: llama_stage_pallas.12
$region0: #{llama_stage_pallas.12}
  #allocation0 [shape = 'u32[]', space=smem, size = 0x4, offset = 0x4, fixed_abs, tag = 'smem constant byte address 0x4 - core index']
  #allocation1 [shape = 'u32[144,128]{1,0:T(1,128)}', space=vmem, size = 0x12000, scoped, tag = 'internal scratch']
  #allocation2 [shape = 'bf16[8,32]{1,0:T(8,128)(2,1)}', space=vmem, size = 0x800, scoped, tag = 'scratch operand']
  %s0 = inlined_call_operand.vmem [shape: f32[2,8,32], index: 0, kind: input, shape index: {}]
  %s1 = inlined_call_operand.vmem [shape: f32[8,32], index: 1, kind: input, shape index: {}]
  %s2 = inlined_call_operand.vmem [shape: f32[8,32], index: 2, kind: input, shape index: {}]
  %s3 = inlined_call_operand.vmem [shape: f32[1,32], index: 3, kind: input, shape index: {}]
  %s4 = inlined_call_operand.vmem [shape: bf16[32,32], index: 4, kind: input, shape index: {}]
  %s5 = inlined_call_operand.vmem [shape: bf16[32,32], index: 5, kind: input, shape index: {}]
  %s6 = inlined_call_operand.vmem [shape: bf16[32,32], index: 6, kind: input, shape index: {}]
  %s7 = inlined_call_operand.vmem [shape: bf16[2,8,32], index: 7, kind: output, shape index: {0}]
  %s8 = inlined_call_operand.vmem [shape: bf16[2,8,32], index: 8, kind: output, shape index: {1}]
  %s9 = inlined_call_operand.vmem [shape: bf16[2,8,32], index: 9, kind: output, shape index: {2}]
  %10 = xla_tuple %s7, %s8, %s9
  %s11 = sld [smem:[#allocation0]]
  $region81: #{llama_stage_pallas.12} parent=0
    _
  %s13 = ssub.s32 1, %s11
  %s14 = scalar_select 0, %s13, %s11
  loop: start=0, step=1, limit=4
  $region2: #{llama_stage_pallas.12} parent=0 // loop_pre_header
    _
  $region3: #{llama_stage_pallas.12} parent=0 // loop_header
    %s16 = sphi 0, %s20
    %p17 = scmp.ge.s32.totalorder %s16, 4
    %s23 = sphi 0, %s42
    %s24 = sphi 0, %s38
    %s25 = sphi 0, %s34
    %s26 = sphi 0, %s23
    %s27 = sphi 0, %s24
    %s28 = sphi 0, %s25
    %s29 = sphi 0, %s26
    %s30 = sphi 0, %s27
    %s31 = sphi 0, %s28
    %s47 = sphi 0, %s49
    %s50 = sphi 0, %s47
    %s51 = sphi 0, %s50
    %s67 = sphi 0, %s51
    %s75 = sphi 0, %s77
    %s78 = sphi 0, %s75
    %s79 = sphi 0, %s78
    %s95 = sphi 0, %s79
    %s103 = sphi 0, %s105
    %s106 = sphi 0, %s103
    %s107 = sphi 0, %s106
    %s123 = sphi 0, %s107
    %s127 = sphi 0, %s127
    %s129 = sphi 0, %s127
    %s130 = sphi 0, %s129
    %s144 = sphi 0, %s130
    %s150 = sphi 0, %s152
    %s153 = sphi 0, %s150
    %s154 = sphi 0, %s153
    %s170 = sphi 0, %s154
    %s176 = sphi 0, %s178
    %s179 = sphi 0, %s176
    %s180 = sphi 0, %s179
    %s196 = sphi 0, %s180
    %s202 = sphi 0, %s204
    %s205 = sphi 0, %s202
    %s206 = sphi 0, %s205
    %s222 = sphi 0, %s206
    %s232 = sphi 0, %s234
    %s235 = sphi 0, %s232
    %s236 = sphi 0, %s235
    %s252 = sphi 0, %s236
    %s262 = sphi 0, %s264
    %s265 = sphi 0, %s262
    %s266 = sphi 0, %s265
    %s282 = sphi 0, %s266
    %s292 = sphi 0, %s294
    %s295 = sphi 0, %s292
    %s296 = sphi 0, %s295
    %s312 = sphi 0, %s296
  $region4: #{llama_stage_pallas.12} parent=0 // loop_header_branch
    %19 = sbr.rel (%p17) target = $region8
  $region5: #{llama_stage_pallas.12} parent=0 // loop_body
    %s21 = ssub.s32 %s16, 1
    %s22 = ssub.s32 %s16, 2
    %s32 = sadd.s32 1, %s25
    %p33 = scmp.ge.s32.totalorder %s32, 1
    %s34 = scalar_select %p33, 0, %s32
    %s35 = sadd.s32 1, %s24
    %s36 = scalar_select %p33, %s35, %s24
    %p37 = scmp.ge.s32.totalorder %s36, 1
    %s38 = scalar_select %p37, 0, %s36
    %s39 = sadd.s32 1, %s23
    %s40 = scalar_select %p37, %s39, %s23
    %p41 = scmp.ge.s32.totalorder %s40, 2
    %s42 = scalar_select %p41, 0, %s40
    %s43 = ssub.s32 %s23, %s42
    %s44 = ssub.s32 %s24, %s38
    %s45 = sor.u32 %s43, %s44
    %p46 = scmp.eq.s32.totalorder %s45, 0
    %s48 = sadd.s32 %s47, 1
    %s49 = scalar_select %p46, %s47, %s48
    %p52 = pneg %p46
    %p53 = scmp.eq.s32.totalorder %s16, 1
    %p54 = por %p52, %p53
    %p55 = scmp.ne.s32.totalorder %s47, %s50
    %p56 = scmp.eq.s32.totalorder %s16, 0
    %p57 = por %p55, %p56
    %p58 = scmp.ne.s32.totalorder %s47, %s50
    %p59 = scmp.eq.s32.totalorder %s21, 1
    %p60 = por %p58, %p59
    %p61 = scmp.ne.s32.totalorder %s50, %s51
    %p62 = scmp.eq.s32.totalorder %s21, 0
    %p63 = por %p61, %p62
    %p64 = scmp.ne.s32.totalorder %s50, %s51
    %p65 = scmp.eq.s32.totalorder %s22, 1
    %p66 = por %p64, %p65
    %p68 = scmp.ne.s32.totalorder %s51, %s67
    %p69 = scmp.eq.s32.totalorder %s22, 0
    %p70 = por %p68, %p69
    %s71 = ssub.s32 %s24, %s38
    %s72 = ssub.s32 %s25, %s34
    %s73 = sor.u32 %s71, %s72
    %p74 = scmp.eq.s32.totalorder %s73, 0
    %s76 = sadd.s32 %s75, 1
    %s77 = scalar_select %p74, %s75, %s76
    %p80 = pneg %p74
    %p81 = scmp.eq.s32.totalorder %s16, 1
    %p82 = por %p80, %p81
    %p83 = scmp.ne.s32.totalorder %s75, %s78
    %p84 = scmp.eq.s32.totalorder %s16, 0
    %p85 = por %p83, %p84
    %p86 = scmp.ne.s32.totalorder %s75, %s78
    %p87 = scmp.eq.s32.totalorder %s21, 1
    %p88 = por %p86, %p87
    %p89 = scmp.ne.s32.totalorder %s78, %s79
    %p90 = scmp.eq.s32.totalorder %s21, 0
    %p91 = por %p89, %p90
    %p92 = scmp.ne.s32.totalorder %s78, %s79
    %p93 = scmp.eq.s32.totalorder %s22, 1
    %p94 = por %p92, %p93
    %p96 = scmp.ne.s32.totalorder %s79, %s95
    %p97 = scmp.eq.s32.totalorder %s22, 0
    %p98 = por %p96, %p97
    %s99 = ssub.s32 %s24, %s38
    %s100 = ssub.s32 %s25, %s34
    %s101 = sor.u32 %s99, %s100
    %p102 = scmp.eq.s32.totalorder %s101, 0
    %s104 = sadd.s32 %s103, 1
    %s105 = scalar_select %p102, %s103, %s104
    %p108 = pneg %p102
    %p109 = scmp.eq.s32.totalorder %s16, 1
    %p110 = por %p108, %p109
    %p111 = scmp.ne.s32.totalorder %s103, %s106
    %p112 = scmp.eq.s32.totalorder %s16, 0
    %p113 = por %p111, %p112
    %p114 = scmp.ne.s32.totalorder %s103, %s106
    %p115 = scmp.eq.s32.totalorder %s21, 1
    %p116 = por %p114, %p115
    %p117 = scmp.ne.s32.totalorder %s106, %s107
    %p118 = scmp.eq.s32.totalorder %s21, 0
    %p119 = por %p117, %p118
    %p120 = scmp.ne.s32.totalorder %s106, %s107
    %p121 = scmp.eq.s32.totalorder %s22, 1
    %p122 = por %p120, %p121
    %p124 = scmp.ne.s32.totalorder %s107, %s123
    %p125 = scmp.eq.s32.totalorder %s22, 0
    %p126 = por %p124, %p125
    %s128 = sadd.s32 %s127, 1
    %p131 = scmp.eq.s32.totalorder %s16, 1
    %p132 = scmp.ne.s32.totalorder %s127, %s129
    %p133 = scmp.eq.s32.totalorder %s16, 0
    %p134 = por %p132, %p133
    %p135 = scmp.ne.s32.totalorder %s127, %s129
    %p136 = scmp.eq.s32.totalorder %s21, 1
    %p137 = por %p135, %p136
    %p138 = scmp.ne.s32.totalorder %s129, %s130
    %p139 = scmp.eq.s32.totalorder %s21, 0
    %p140 = por %p138, %p139
    %p141 = scmp.ne.s32.totalorder %s129, %s130
    %p142 = scmp.eq.s32.totalorder %s22, 1
    %p143 = por %p141, %p142
    %p145 = scmp.ne.s32.totalorder %s130, %s144
    %p146 = scmp.eq.s32.totalorder %s22, 0
    %p147 = por %p145, %p146
    %s148 = ssub.s32 %s25, %s34
    %p149 = scmp.eq.s32.totalorder %s148, 0
    %s151 = sadd.s32 %s150, 1
    %s152 = scalar_select %p149, %s150, %s151
    %p155 = pneg %p149
    %p156 = scmp.eq.s32.totalorder %s16, 1
    %p157 = por %p155, %p156
    %p158 = scmp.ne.s32.totalorder %s150, %s153
    %p159 = scmp.eq.s32.totalorder %s16, 0
    %p160 = por %p158, %p159
    %p161 = scmp.ne.s32.totalorder %s150, %s153
    %p162 = scmp.eq.s32.totalorder %s21, 1
    %p163 = por %p161, %p162
    %p164 = scmp.ne.s32.totalorder %s153, %s154
    %p165 = scmp.eq.s32.totalorder %s21, 0
    %p166 = por %p164, %p165
    %p167 = scmp.ne.s32.totalorder %s153, %s154
    %p168 = scmp.eq.s32.totalorder %s22, 1
    %p169 = por %p167, %p168
    %p171 = scmp.ne.s32.totalorder %s154, %s170
    %p172 = scmp.eq.s32.totalorder %s22, 0
    %p173 = por %p171, %p172
    %s174 = ssub.s32 %s25, %s34
    %p175 = scmp.eq.s32.totalorder %s174, 0
    %s177 = sadd.s32 %s176, 1
    %s178 = scalar_select %p175, %s176, %s177
    %p181 = pneg %p175
    %p182 = scmp.eq.s32.totalorder %s16, 1
    %p183 = por %p181, %p182
    %p184 = scmp.ne.s32.totalorder %s176, %s179
    %p185 = scmp.eq.s32.totalorder %s16, 0
    %p186 = por %p184, %p185
    %p187 = scmp.ne.s32.totalorder %s176, %s179
    %p188 = scmp.eq.s32.totalorder %s21, 1
    %p189 = por %p187, %p188
    %p190 = scmp.ne.s32.totalorder %s179, %s180
    %p191 = scmp.eq.s32.totalorder %s21, 0
    %p192 = por %p190, %p191
    %p193 = scmp.ne.s32.totalorder %s179, %s180
    %p194 = scmp.eq.s32.totalorder %s22, 1
    %p195 = por %p193, %p194
    %p197 = scmp.ne.s32.totalorder %s180, %s196
    %p198 = scmp.eq.s32.totalorder %s22, 0
    %p199 = por %p197, %p198
    %s200 = ssub.s32 %s25, %s34
    %p201 = scmp.eq.s32.totalorder %s200, 0
    %s203 = sadd.s32 %s202, 1
    %s204 = scalar_select %p201, %s202, %s203
    %p207 = pneg %p201
    %p208 = scmp.eq.s32.totalorder %s16, 1
    %p209 = por %p207, %p208
    %p210 = scmp.ne.s32.totalorder %s202, %s205
    %p211 = scmp.eq.s32.totalorder %s16, 0
    %p212 = por %p210, %p211
    %p213 = scmp.ne.s32.totalorder %s202, %s205
    %p214 = scmp.eq.s32.totalorder %s21, 1
    %p215 = por %p213, %p214
    %p216 = scmp.ne.s32.totalorder %s205, %s206
    %p217 = scmp.eq.s32.totalorder %s21, 0
    %p218 = por %p216, %p217
    %p219 = scmp.ne.s32.totalorder %s205, %s206
    %p220 = scmp.eq.s32.totalorder %s22, 1
    %p221 = por %p219, %p220
    %p223 = scmp.ne.s32.totalorder %s206, %s222
    %p224 = scmp.eq.s32.totalorder %s22, 0
    %p225 = por %p223, %p224
    %s226 = ssub.s32 %s23, %s42
    %s227 = ssub.s32 %s24, %s38
    %s228 = sor.u32 %s226, %s227
    %s229 = ssub.s32 %s25, %s34
    %s230 = sor.u32 %s228, %s229
    %p231 = scmp.eq.s32.totalorder %s230, 0
    %s233 = sadd.s32 %s232, 1
    %s234 = scalar_select %p231, %s232, %s233
    %p237 = pneg %p231
    %p238 = scmp.eq.s32.totalorder %s16, 1
    %p239 = por %p237, %p238
    %p240 = scmp.ne.s32.totalorder %s232, %s235
    %p241 = scmp.eq.s32.totalorder %s16, 0
    %p242 = por %p240, %p241
    %p243 = scmp.ne.s32.totalorder %s232, %s235
    %p244 = scmp.eq.s32.totalorder %s21, 1
    %p245 = por %p243, %p244
    %p246 = scmp.ne.s32.totalorder %s235, %s236
    %p247 = scmp.eq.s32.totalorder %s21, 0
    %p248 = por %p246, %p247
    %p249 = scmp.ne.s32.totalorder %s235, %s236
    %p250 = scmp.eq.s32.totalorder %s22, 1
    %p251 = por %p249, %p250
    %p253 = scmp.ne.s32.totalorder %s236, %s252
    %p254 = scmp.eq.s32.totalorder %s22, 0
    %p255 = por %p253, %p254
    %s256 = ssub.s32 %s23, %s42
    %s257 = ssub.s32 %s24, %s38
    %s258 = sor.u32 %s256, %s257
    %s259 = ssub.s32 %s25, %s34
    %s260 = sor.u32 %s258, %s259
    %p261 = scmp.eq.s32.totalorder %s260, 0
    %s263 = sadd.s32 %s262, 1
    %s264 = scalar_select %p261, %s262, %s263
    %p267 = pneg %p261
    %p268 = scmp.eq.s32.totalorder %s16, 1
    %p269 = por %p267, %p268
    %p270 = scmp.ne.s32.totalorder %s262, %s265
    %p271 = scmp.eq.s32.totalorder %s16, 0
    %p272 = por %p270, %p271
    %p273 = scmp.ne.s32.totalorder %s262, %s265
    %p274 = scmp.eq.s32.totalorder %s21, 1
    %p275 = por %p273, %p274
    %p276 = scmp.ne.s32.totalorder %s265, %s266
    %p277 = scmp.eq.s32.totalorder %s21, 0
    %p278 = por %p276, %p277
    %p279 = scmp.ne.s32.totalorder %s265, %s266
    %p280 = scmp.eq.s32.totalorder %s22, 1
    %p281 = por %p279, %p280
    %p283 = scmp.ne.s32.totalorder %s266, %s282
    %p284 = scmp.eq.s32.totalorder %s22, 0
    %p285 = por %p283, %p284
    %s286 = ssub.s32 %s23, %s42
    %s287 = ssub.s32 %s24, %s38
    %s288 = sor.u32 %s286, %s287
    %s289 = ssub.s32 %s25, %s34
    %s290 = sor.u32 %s288, %s289
    %p291 = scmp.eq.s32.totalorder %s290, 0
    %s293 = sadd.s32 %s292, 1
    %s294 = scalar_select %p291, %s292, %s293
    %p297 = pneg %p291
    %p298 = scmp.eq.s32.totalorder %s16, 1
    %p299 = por %p297, %p298
    %p300 = scmp.ne.s32.totalorder %s292, %s295
    %p301 = scmp.eq.s32.totalorder %s16, 0
    %p302 = por %p300, %p301
    %p303 = scmp.ne.s32.totalorder %s292, %s295
    %p304 = scmp.eq.s32.totalorder %s21, 1
    %p305 = por %p303, %p304
    %p306 = scmp.ne.s32.totalorder %s295, %s296
    %p307 = scmp.eq.s32.totalorder %s21, 0
    %p308 = por %p306, %p307
    %p309 = scmp.ne.s32.totalorder %s295, %s296
    %p310 = scmp.eq.s32.totalorder %s22, 1
    %p311 = por %p309, %p310
    %p313 = scmp.ne.s32.totalorder %s296, %s312
    %p314 = scmp.eq.s32.totalorder %s22, 0
    %p315 = por %p313, %p314
    %p316 = scmp.le.s32.totalorder 1, %s16
    %p317 = scmp.lt.s32.totalorder %s16, 3
    %p318 = pnand %p316, %p317
    %p319 = pneg %p318
    // Predicated region
    $region9: #{llama_stage_pallas.12} parent=5 // pred_check
      _
    $region10: #{llama_stage_pallas.12} parent=5 // pred_check_branch
      %321 = sbr.rel (%p318) target = $region12
    $region11: #{llama_stage_pallas.12} parent=5 // pred_region
      %s322 = ssub.s32 %s16, 1
      // Predicated region
      $region13: #{llama_stage_pallas.12} parent=11 // pred_check
        %p323 = pneg %p91
      $region14: #{llama_stage_pallas.12} parent=11 // pred_check_branch
        %325 = sbr.rel (%p323) target = $region16
      $region15: #{llama_stage_pallas.12} parent=11 // pred_region
        %p326 = scmp.lt.s32.totalorder %s27, 0
        %s327 = scalar_select %p326, %s27, 0
        %p328 = scmp.lt.s32.totalorder %s28, 0
        %s329 = scalar_select %p328, %s28, 0
        %s330 = sadd.s32 %s329, %s327
        %s331 = smul.addr %s330, 8
        %s332 = scalar_lea.vmem %s1, %s331
      $region16: #{llama_stage_pallas.12} parent=11 // pred_fallthru
        _
      // Predicated region
      $region17: #{llama_stage_pallas.12} parent=11 // pred_check
        %p333 = pneg %p119
      $region18: #{llama_stage_pallas.12} parent=11 // pred_check_branch
        %335 = sbr.rel (%p333) target = $region20
      $region19: #{llama_stage_pallas.12} parent=11 // pred_region
        %p336 = scmp.lt.s32.totalorder %s27, 0
        %s337 = scalar_select %p336, %s27, 0
        %p338 = scmp.lt.s32.totalorder %s28, 0
        %s339 = scalar_select %p338, %s28, 0
        %s340 = sadd.s32 %s339, %s337
        %s341 = smul.addr %s340, 8
        %s342 = scalar_lea.vmem %s2, %s341
      $region20: #{llama_stage_pallas.12} parent=11 // pred_fallthru
        _
      // Predicated region
      $region21: #{llama_stage_pallas.12} parent=11 // pred_check
        %p343 = pneg %p140
      $region22: #{llama_stage_pallas.12} parent=11 // pred_check_branch
        %345 = sbr.rel (%p343) target = $region24
      $region23: #{llama_stage_pallas.12} parent=11 // pred_region
        _
      $region24: #{llama_stage_pallas.12} parent=11 // pred_fallthru
        _
      // Predicated region
      $region25: #{llama_stage_pallas.12} parent=11 // pred_check
        %p346 = pneg %p166
      $region26: #{llama_stage_pallas.12} parent=11 // pred_check_branch
        %348 = sbr.rel (%p346) target = $region28
      $region27: #{llama_stage_pallas.12} parent=11 // pred_region
        %p349 = scmp.lt.s32.totalorder %s28, 0
        %s350 = scalar_select %p349, %s28, 0
        %s351 = smul.addr %s350, 4
        %s352 = scalar_lea.vmem %s4, %s351
      $region28: #{llama_stage_pallas.12} parent=11 // pred_fallthru
        _
      // Predicated region
      $region29: #{llama_stage_pallas.12} parent=11 // pred_check
        %p353 = pneg %p192
      $region30: #{llama_stage_pallas.12} parent=11 // pred_check_branch
        %355 = sbr.rel (%p353) target = $region32
      $region31: #{llama_stage_pallas.12} parent=11 // pred_region
        %p356 = scmp.lt.s32.totalorder %s28, 0
        %s357 = scalar_select %p356, %s28, 0
        %s358 = smul.addr %s357, 4
        %s359 = scalar_lea.vmem %s5, %s358
      $region32: #{llama_stage_pallas.12} parent=11 // pred_fallthru
        _
      // Predicated region
      $region33: #{llama_stage_pallas.12} parent=11 // pred_check
        %p360 = pneg %p218
      $region34: #{llama_stage_pallas.12} parent=11 // pred_check_branch
        %362 = sbr.rel (%p360) target = $region36
      $region35: #{llama_stage_pallas.12} parent=11 // pred_region
        %p363 = scmp.lt.s32.totalorder %s28, 0
        %s364 = scalar_select %p363, %s28, 0
        %s365 = smul.addr %s364, 4
        %s366 = scalar_lea.vmem %s6, %s365
      $region36: #{llama_stage_pallas.12} parent=11 // pred_fallthru
        _
    $region12: #{llama_stage_pallas.12} parent=5 // pred_fallthru
      _
    %p367 = scmp.lt.s32.totalorder %s16, 2
    // Predicated region
    $region37: #{llama_stage_pallas.12} parent=5 // pred_check
      %p368 = pneg %p367
    $region38: #{llama_stage_pallas.12} parent=5 // pred_check_branch
      %370 = sbr.rel (%p368) target = $region40
    $region39: #{llama_stage_pallas.12} parent=5 // pred_region
      // Predicated region
      $region41: #{llama_stage_pallas.12} parent=39 // pred_check
        %p371 = pneg %p57
      $region42: #{llama_stage_pallas.12} parent=39 // pred_check_branch
        %373 = sbr.rel (%p371) target = $region44
      $region43: #{llama_stage_pallas.12} parent=39 // pred_region
        %p374 = scmp.lt.s32.totalorder %s23, 1
        %s375 = scalar_select %p374, %s23, 1
        %p376 = scmp.lt.s32.totalorder %s24, 0
        %s377 = scalar_select %p376, %s24, 0
        %s378 = sadd.s32 %s377, %s375
        %s379 = smul.addr %s378, 8
        %s380 = scalar_lea.vmem %s0, %s379
      $region44: #{llama_stage_pallas.12} parent=39 // pred_fallthru
        _
    $region40: #{llama_stage_pallas.12} parent=5 // pred_fallthru
      _
    %p381 = scmp.le.s32.totalorder 1, %s16
    %p382 = scmp.lt.s32.totalorder %s16, 3
    %p383 = pnand %p381, %p382
    %p384 = pneg %p383
    // Predicated region
    $region45: #{llama_stage_pallas.12} parent=5 // pred_check
      _
    $region46: #{llama_stage_pallas.12} parent=5 // pred_check_branch
      %386 = sbr.rel (%p383) target = $region48
    $region47: #{llama_stage_pallas.12} parent=5 // pred_region
      %s387 = ssub.s32 %s16, 1
      %p388 = scmp.lt.s32.totalorder %s26, 1
      %s389 = scalar_select %p388, %s26, 1
      %p390 = scmp.lt.s32.totalorder %s27, 0
      %s391 = scalar_select %p390, %s27, 0
      %s392 = sadd.s32 %s391, %s389
      %s393 = smul.addr %s392, 8
      %s394 = scalar_lea.vmem %s0, %s393
      %p395 = pneg %p63
      %p396 = pneg %p60
      %p397 = scmp.lt.s32.totalorder %s27, 0
      %s398 = scalar_select %p397, %s27, 0
      %p399 = scmp.lt.s32.totalorder %s28, 0
      %s400 = scalar_select %p399, %s28, 0
      %s401 = sadd.s32 %s400, %s398
      %s402 = smul.addr %s401, 8
      %s403 = scalar_lea.vmem %s1, %s402
      %p404 = pneg %p91
      %p405 = pneg %p88
      %p406 = scmp.lt.s32.totalorder %s27, 0
      %s407 = scalar_select %p406, %s27, 0
      %p408 = scmp.lt.s32.totalorder %s28, 0
      %s409 = scalar_select %p408, %s28, 0
      %s410 = sadd.s32 %s409, %s407
      %s411 = smul.addr %s410, 8
      %s412 = scalar_lea.vmem %s2, %s411
      %p413 = pneg %p119
      %p414 = pneg %p116
      %p415 = pneg %p140
      %p416 = pneg %p137
      %p417 = scmp.lt.s32.totalorder %s28, 0
      %s418 = scalar_select %p417, %s28, 0
      %s419 = smul.addr %s418, 4
      %s420 = scalar_lea.vmem %s4, %s419
      %p421 = pneg %p166
      %p422 = pneg %p163
      %p423 = scmp.lt.s32.totalorder %s28, 0
      %s424 = scalar_select %p423, %s28, 0
      %s425 = smul.addr %s424, 4
      %s426 = scalar_lea.vmem %s5, %s425
      %p427 = pneg %p192
      %p428 = pneg %p189
      %p429 = scmp.lt.s32.totalorder %s28, 0
      %s430 = scalar_select %p429, %s28, 0
      %s431 = smul.addr %s430, 4
      %s432 = scalar_lea.vmem %s6, %s431
      %p433 = pneg %p218
      %p434 = pneg %p215
      %p435 = pneg %p248
      %p436 = pneg %p245
      %p437 = scmp.lt.s32.totalorder %s26, 1
      %s438 = scalar_select %p437, %s26, 1
      %p439 = scmp.lt.s32.totalorder %s27, 0
      %s440 = scalar_select %p439, %s27, 0
      %p441 = scmp.lt.s32.totalorder %s28, 0
      %s442 = scalar_select %p441, %s28, 0
      %s443 = sadd.s32 %s442, %s440
      %s444 = sadd.s32 %s443, %s438
      %s445 = smul.addr %s444, 4
      %s446 = scalar_lea.vmem %s7, %s445
      %p447 = pneg %p278
      %p448 = pneg %p275
      %p449 = scmp.lt.s32.totalorder %s26, 1
      %s450 = scalar_select %p449, %s26, 1
      %p451 = scmp.lt.s32.totalorder %s27, 0
      %s452 = scalar_select %p451, %s27, 0
      %p453 = scmp.lt.s32.totalorder %s28, 0
      %s454 = scalar_select %p453, %s28, 0
      %s455 = sadd.s32 %s454, %s452
      %s456 = sadd.s32 %s455, %s450
      %s457 = smul.addr %s456, 4
      %s458 = scalar_lea.vmem %s8, %s457
      %p459 = pneg %p308
      %p460 = pneg %p305
      %p461 = scmp.lt.s32.totalorder %s26, 1
      %s462 = scalar_select %p461, %s26, 1
      %p463 = scmp.lt.s32.totalorder %s27, 0
      %s464 = scalar_select %p463, %s27, 0
      %p465 = scmp.lt.s32.totalorder %s28, 0
      %s466 = scalar_select %p465, %s28, 0
      %s467 = sadd.s32 %s466, %s464
      %s468 = sadd.s32 %s467, %s462
      %s469 = smul.addr %s468, 4
      %s470 = scalar_lea.vmem %s9, %s469
      %p471 = scmp.lt.s32.totalorder %s26, 1
      %s472 = scalar_select %p471, %s26, 1
      %p473 = scmp.lt.s32.totalorder %s27, 0
      %s474 = scalar_select %p473, %s27, 0
      %s475 = sadd.s32 %s474, %s472
      %s476 = smul.addr %s475, 8
      %s477 = scalar_lea.vmem %s0, %s476
      %p478 = scmp.lt.s32.totalorder %s27, 0
      %s479 = scalar_select %p478, %s27, 0
      %p480 = scmp.lt.s32.totalorder %s28, 0
      %s481 = scalar_select %p480, %s28, 0
      %s482 = sadd.s32 %s481, %s479
      %s483 = smul.addr %s482, 8
      %s484 = scalar_lea.vmem %s1, %s483
      %p485 = scmp.lt.s32.totalorder %s27, 0
      %s486 = scalar_select %p485, %s27, 0
      %p487 = scmp.lt.s32.totalorder %s28, 0
      %s488 = scalar_select %p487, %s28, 0
      %s489 = sadd.s32 %s488, %s486
      %s490 = smul.addr %s489, 8
      %s491 = scalar_lea.vmem %s2, %s490
      %p492 = scmp.lt.s32.totalorder %s28, 0
      %s493 = scalar_select %p492, %s28, 0
      %s494 = smul.addr %s493, 4
      %s495 = scalar_lea.vmem %s4, %s494
      %p496 = scmp.lt.s32.totalorder %s28, 0
      %s497 = scalar_select %p496, %s28, 0
      %s498 = smul.addr %s497, 4
      %s499 = scalar_lea.vmem %s5, %s498
      %p500 = scmp.lt.s32.totalorder %s28, 0
      %s501 = scalar_select %p500, %s28, 0
      %s502 = smul.addr %s501, 4
      %s503 = scalar_lea.vmem %s6, %s502
      %p504 = scmp.lt.s32.totalorder %s26, 1
      %s505 = scalar_select %p504, %s26, 1
      %p506 = scmp.lt.s32.totalorder %s27, 0
      %s507 = scalar_select %p506, %s27, 0
      %p508 = scmp.lt.s32.totalorder %s28, 0
      %s509 = scalar_select %p508, %s28, 0
      %s510 = sadd.s32 %s509, %s507
      %s511 = sadd.s32 %s510, %s505
      %s512 = smul.addr %s511, 4
      %s513 = scalar_lea.vmem %s7, %s512
      %p514 = scmp.lt.s32.totalorder %s26, 1
      %s515 = scalar_select %p514, %s26, 1
      %p516 = scmp.lt.s32.totalorder %s27, 0
      %s517 = scalar_select %p516, %s27, 0
      %p518 = scmp.lt.s32.totalorder %s28, 0
      %s519 = scalar_select %p518, %s28, 0
      %s520 = sadd.s32 %s519, %s517
      %s521 = sadd.s32 %s520, %s515
      %s522 = smul.addr %s521, 4
      %s523 = scalar_lea.vmem %s8, %s522
      %p524 = scmp.lt.s32.totalorder %s26, 1
      %s525 = scalar_select %p524, %s26, 1
      %p526 = scmp.lt.s32.totalorder %s27, 0
      %s527 = scalar_select %p526, %s27, 0
      %p528 = scmp.lt.s32.totalorder %s28, 0
      %s529 = scalar_select %p528, %s28, 0
      %s530 = sadd.s32 %s529, %s527
      %s531 = sadd.s32 %s530, %s525
      %s532 = smul.addr %s531, 4
      %s533 = scalar_lea.vmem %s9, %s532
      %p535 = scmp.eq.s32.totalorder %s28, 0
      // Predicated region
      $region49: #{llama_stage_pallas.12} parent=47 // pred_check
        %p536 = pneg %p535
      $region50: #{llama_stage_pallas.12} parent=47 // pred_check_branch
        %538 = sbr.rel (%p536) target = $region52
      $region51: #{llama_stage_pallas.12} parent=47 // pred_region
        %v539 = vld [vmem:[%s477] sm:$0xff]
        %v540 = vmul.f32 %v539, %v539
        %vm541 = vcmask 261120
        %v542 = vsel %vm541, %v540, 0.0
        %543 = vadd.xlane.f32.xlu0 %v542
        %v544 = vpop.xlane.xlu0 %543
        %v545 = vrcp.pop 32.0
        %v546 = vmul.f32 %v544, %v545
        %v547 = vadd.f32 %v546, 1e-05
        %v548 = vrsqrt.pop %v547
        %v549 = vmul.f32 %v539, %v548
        %v550 = vld [vmem:[%s3] sm:$0x1]
        %v552 = vlaneseq
        %v553 = vshrl.u32 %v552, 7
        %v554 = vsub.s32 0, %v553
        %v555 = vrot.slane %v550, %v554
        %v557 = vmul.f32 %v549, %v555
        %v558 = vpack.c.bf16 %v557, %v557
        %vm559 = vcmask 257024
        %560 = vst.msk [vmem:[#allocation2] sm:$0xf] %vm559, %v558
      $region52: #{llama_stage_pallas.12} parent=47 // pred_fallthru
        _
      %v561 = vld [vmem:[#allocation2] sm:$0xf]
      %v562 = vld [vmem:[%s495] sm:$0xf]
      %v563 = vld [vmem:[%s495 + $0x4] sm:$0xf]
      %v564 = vld [vmem:[%s495 + $0x8] sm:$0xf]
      %v565 = vld [vmem:[%s495 + $0xc] sm:$0xf]
      %v570 = vunpack.c.l.b16 %v562
      %v571 = vunpack.c.l.b16 %v563
      %v572 = vunpack.c.l.b16 %v564
      %v573 = vunpack.c.l.b16 %v565
      %v574 = vpack.c.b16 %v571, %v570
      %v575 = vpack.c.b16 %v573, %v572
      %vm578 = vcmask 261120
      %v580 = vsel %vm578, %v561, 0
      %582 = vmatprep.subr.bf16.mxu0 0
      %583 = vmatpush1.bf16.msra.mxu0 %v574
      %584 = vmatprep.subr.bf16.mxu0 0
      %585 = vmatpush1.bf16.msra.mxu0 %v575
      %586 = vmatprep.subr.bf16.mxu0 0
      %587 = vmatpush1.bf16.msra.mxu0 0
      %588 = vmatprep.subr.bf16.mxu0 0
      %589 = vmatpush1.bf16.msra.mxu0 0
      %590 = vmatprep.subr.bf16.mxu0 0
      %591 = vmatpush1.bf16.msra.mxu0 0
      %592 = vmatprep.subr.bf16.mxu0 0
      %593 = vmatpush1.bf16.msra.mxu0 0
      %594 = vmatprep.subr.bf16.mxu0 0
      %595 = vmatpush1.bf16.msra.mxu0 0
      %596 = vmatprep.subr.bf16.mxu0 0
      %597 = vmatpush1.bf16.msra.mxu0 0
      %598 = vmatprep.subr.bf16.mxu0 0
      %599 = vmatpush1.bf16.msra.mxu0 0
      %600 = vmatprep.subr.bf16.mxu0 0
      %601 = vmatpush1.bf16.msra.mxu0 0
      %602 = vmatprep.subr.bf16.mxu0 0
      %603 = vmatpush1.bf16.msra.mxu0 0
      %604 = vmatprep.subr.bf16.mxu0 0
      %605 = vmatpush1.bf16.msra.mxu0 0
      %606 = vmatprep.subr.bf16.mxu0 0
      %607 = vmatpush1.bf16.msra.mxu0 0
      %608 = vmatprep.subr.bf16.mxu0 0
      %609 = vmatpush1.bf16.msra.mxu0 0
      %610 = vmatprep.subr.bf16.mxu0 0
      %611 = vmatpush1.bf16.msra.mxu0 0
      %612 = vmatprep.subr.bf16.mxu0 0
      %613 = vmatpush1.bf16.msra.mxu0 0
      %614 = vmatprep.mubr.bf16.mxu0 0
      %615 = vmatmul.mubr.bf16.gmra.mrb[0].mxu0 %v580
      %v616 = vpop.f32.mrb[0].mxu0
      %v617 = vadd.f32 0.0, %v616
      %v618 = vpop.f32.mrb[0].mxu0
      %v619 = vpop.f32.mrb[0].mxu0
      %v620 = vpop.f32.mrb[0].mxu0
      %621 = vdwg.mxu0
      %v622 = vmul.f32 %v617, 0.35355338
      %v623 = vld [vmem:[%s499] sm:$0xf]
      %v624 = vld [vmem:[%s499 + $0x4] sm:$0xf]
      %v625 = vld [vmem:[%s499 + $0x8] sm:$0xf]
      %v626 = vld [vmem:[%s499 + $0xc] sm:$0xf]
      %v631 = vunpack.c.l.b16 %v623
      %v632 = vunpack.c.l.b16 %v624
      %v633 = vunpack.c.l.b16 %v625
      %v634 = vunpack.c.l.b16 %v626
      %v635 = vpack.c.b16 %v632, %v631
      %v636 = vpack.c.b16 %v634, %v633
      %639 = vmatprep.subr.bf16.mxu0 0
      %640 = vmatpush1.bf16.msra.mxu0 %v635
      %641 = vmatprep.subr.bf16.mxu0 0
      %642 = vmatpush1.bf16.msra.mxu0 %v636
      %643 = vmatprep.subr.bf16.mxu0 0
      %644 = vmatpush1.bf16.msra.mxu0 0
      %645 = vmatprep.subr.bf16.mxu0 0
      %646 = vmatpush1.bf16.msra.mxu0 0
      %647 = vmatprep.subr.bf16.mxu0 0
      %648 = vmatpush1.bf16.msra.mxu0 0
      %649 = vmatprep.subr.bf16.mxu0 0
      %650 = vmatpush1.bf16.msra.mxu0 0
      %651 = vmatprep.subr.bf16.mxu0 0
      %652 = vmatpush1.bf16.msra.mxu0 0
      %653 = vmatprep.subr.bf16.mxu0 0
      %654 = vmatpush1.bf16.msra.mxu0 0
      %655 = vmatprep.subr.bf16.mxu0 0
      %656 = vmatpush1.bf16.msra.mxu0 0
      %657 = vmatprep.subr.bf16.mxu0 0
      %658 = vmatpush1.bf16.msra.mxu0 0
      %659 = vmatprep.subr.bf16.mxu0 0
      %660 = vmatpush1.bf16.msra.mxu0 0
      %661 = vmatprep.subr.bf16.mxu0 0
      %662 = vmatpush1.bf16.msra.mxu0 0
      %663 = vmatprep.subr.bf16.mxu0 0
      %664 = vmatpush1.bf16.msra.mxu0 0
      %665 = vmatprep.subr.bf16.mxu0 0
      %666 = vmatpush1.bf16.msra.mxu0 0
      %667 = vmatprep.subr.bf16.mxu0 0
      %668 = vmatpush1.bf16.msra.mxu0 0
      %669 = vmatprep.subr.bf16.mxu0 0
      %670 = vmatpush1.bf16.msra.mxu0 0
      %671 = vmatprep.mubr.bf16.mxu0 0
      %672 = vmatmul.mubr.bf16.gmra.mrb[0].mxu0 %v580
      %v673 = vpop.f32.mrb[0].mxu0
      %v674 = vadd.f32 0.0, %v673
      %v675 = vpop.f32.mrb[0].mxu0
      %v676 = vpop.f32.mrb[0].mxu0
      %v677 = vpop.f32.mrb[0].mxu0
      %678 = vdwg.mxu0
      %v679 = vld [vmem:[%s503] sm:$0xf]
      %v680 = vld [vmem:[%s503 + $0x4] sm:$0xf]
      %v681 = vld [vmem:[%s503 + $0x8] sm:$0xf]
      %v682 = vld [vmem:[%s503 + $0xc] sm:$0xf]
      %v687 = vunpack.c.l.b16 %v679
      %v688 = vunpack.c.l.b16 %v680
      %v689 = vunpack.c.l.b16 %v681
      %v690 = vunpack.c.l.b16 %v682
      %v691 = vpack.c.b16 %v688, %v687
      %v692 = vpack.c.b16 %v690, %v689
      %695 = vmatprep.subr.bf16.mxu0 0
      %696 = vmatpush1.bf16.msra.mxu0 %v691
      %697 = vmatprep.subr.bf16.mxu0 0
      %698 = vmatpush1.bf16.msra.mxu0 %v692
      %699 = vmatprep.subr.bf16.mxu0 0
      %700 = vmatpush1.bf16.msra.mxu0 0
      %701 = vmatprep.subr.bf16.mxu0 0
      %702 = vmatpush1.bf16.msra.mxu0 0
      %703 = vmatprep.subr.bf16.mxu0 0
      %704 = vmatpush1.bf16.msra.mxu0 0
      %705 = vmatprep.subr.bf16.mxu0 0
      %706 = vmatpush1.bf16.msra.mxu0 0
      %707 = vmatprep.subr.bf16.mxu0 0
      %708 = vmatpush1.bf16.msra.mxu0 0
      %709 = vmatprep.subr.bf16.mxu0 0
      %710 = vmatpush1.bf16.msra.mxu0 0
      %711 = vmatprep.subr.bf16.mxu0 0
      %712 = vmatpush1.bf16.msra.mxu0 0
      %713 = vmatprep.subr.bf16.mxu0 0
      %714 = vmatpush1.bf16.msra.mxu0 0
      %715 = vmatprep.subr.bf16.mxu0 0
      %716 = vmatpush1.bf16.msra.mxu0 0
      %717 = vmatprep.subr.bf16.mxu0 0
      %718 = vmatpush1.bf16.msra.mxu0 0
      %719 = vmatprep.subr.bf16.mxu0 0
      %720 = vmatpush1.bf16.msra.mxu0 0
      %721 = vmatprep.subr.bf16.mxu0 0
      %722 = vmatpush1.bf16.msra.mxu0 0
      %723 = vmatprep.subr.bf16.mxu0 0
      %724 = vmatpush1.bf16.msra.mxu0 0
      %725 = vmatprep.subr.bf16.mxu0 0
      %726 = vmatpush1.bf16.msra.mxu0 0
      %727 = vmatprep.mubr.bf16.mxu0 0
      %728 = vmatmul.mubr.bf16.gmra.mrb[0].mxu0 %v580
      %v729 = vpop.f32.mrb[0].mxu0
      %v730 = vadd.f32 0.0, %v729
      %v731 = vpop.f32.mrb[0].mxu0
      %v732 = vpop.f32.mrb[0].mxu0
      %v733 = vpop.f32.mrb[0].mxu0
      %734 = vdwg.mxu0
      %v735 = vld [vmem:[%s484] sm:$0xff]
      %v736 = vld [vmem:[%s491] sm:$0xff]
      %v737 = vlaneseq
      %v738 = vand.u32 %v737, 127
      %v739 = vand.u32 %v738, 1
      %vm740 = vcmp.eq.s32.totalorder %v739, 0
      %742 = vrot.lane.b32.xlu0 %v622, 127
      %v743 = vpop.permute.xlu0 %742
      %745 = vrot.lane.b32.xlu0 %v622, 31
      %v746 = vpop.permute.xlu0 %745
      %vm748 = vcmask 252928
      %v749 = vsel %vm748, %v743, %v746
      %750 = vrot.lane.b32.xlu0 %v622, 97
      %v751 = vpop.permute.xlu0 %750
      %753 = vrot.lane.b32.xlu0 %v622, 1
      %v754 = vpop.permute.xlu0 %753
      %vm756 = vcmask 7168
      %v757 = vsel %vm756, %v751, %v754
      %v758 = vsel %vm740, %v749, %v757
      %v759 = vmul.f32 %v622, %v735
      %v760 = vmul.f32 %v758, %v736
      %v761 = vadd.f32 %v759, %v760
      %v762 = vpack.c.bf16 %v761, %v761
      %vm763 = vcmask 257024
      %764 = vst.msk [vmem:[%s513] sm:$0xf] %vm763, %v762
      %766 = vrot.lane.b32.xlu0 %v674, 127
      %v767 = vpop.permute.xlu0 %766
      %769 = vrot.lane.b32.xlu0 %v674, 31
      %v770 = vpop.permute.xlu0 %769
      %v772 = vsel %vm748, %v767, %v770
      %773 = vrot.lane.b32.xlu0 %v674, 97
      %v774 = vpop.permute.xlu0 %773
      %776 = vrot.lane.b32.xlu0 %v674, 1
      %v777 = vpop.permute.xlu0 %776
      %v779 = vsel %vm756, %v774, %v777
      %v780 = vsel %vm740, %v772, %v779
      %v781 = vmul.f32 %v674, %v735
      %v782 = vmul.f32 %v780, %v736
      %v783 = vadd.f32 %v781, %v782
      %v784 = vpack.c.bf16 %v783, %v783
      %785 = vst.msk [vmem:[%s523] sm:$0xf] %vm763, %v784
      %v786 = vpack.c.bf16 %v730, %v730
      %787 = vst.msk [vmem:[%s533] sm:$0xf] %vm763, %v786
      %p788 = scmp.lt.s32.totalorder %s26, 1
      %s789 = scalar_select %p788, %s26, 1
      %p790 = scmp.lt.s32.totalorder %s27, 0
      %s791 = scalar_select %p790, %s27, 0
      %p792 = scmp.lt.s32.totalorder %s28, 0
      %s793 = scalar_select %p792, %s28, 0
      %s794 = sadd.s32 %s793, %s791
      %s795 = sadd.s32 %s794, %s789
      %s796 = smul.addr %s795, 4
      %s797 = scalar_lea.vmem %s7, %s796
      %p798 = scmp.lt.s32.totalorder %s26, 1
      %s799 = scalar_select %p798, %s26, 1
      %p800 = scmp.lt.s32.totalorder %s27, 0
      %s801 = scalar_select %p800, %s27, 0
      %p802 = scmp.lt.s32.totalorder %s28, 0
      %s803 = scalar_select %p802, %s28, 0
      %s804 = sadd.s32 %s803, %s801
      %s805 = sadd.s32 %s804, %s799
      %s806 = smul.addr %s805, 4
      %s807 = scalar_lea.vmem %s8, %s806
      %p808 = scmp.lt.s32.totalorder %s26, 1
      %s809 = scalar_select %p808, %s26, 1
      %p810 = scmp.lt.s32.totalorder %s27, 0
      %s811 = scalar_select %p810, %s27, 0
      %p812 = scmp.lt.s32.totalorder %s28, 0
      %s813 = scalar_select %p812, %s28, 0
      %s814 = sadd.s32 %s813, %s811
      %s815 = sadd.s32 %s814, %s809
      %s816 = smul.addr %s815, 4
      %s817 = scalar_lea.vmem %s9, %s816
      // Predicated region
      $region53: #{llama_stage_pallas.12} parent=47 // pred_check
        %p818 = pneg %p245
      $region54: #{llama_stage_pallas.12} parent=47 // pred_check_branch
        %820 = sbr.rel (%p818) target = $region56
      $region55: #{llama_stage_pallas.12} parent=47 // pred_region
        _
      $region56: #{llama_stage_pallas.12} parent=47 // pred_fallthru
        _
      // Predicated region
      $region57: #{llama_stage_pallas.12} parent=47 // pred_check
        %p821 = pneg %p275
      $region58: #{llama_stage_pallas.12} parent=47 // pred_check_branch
        %823 = sbr.rel (%p821) target = $region60
      $region59: #{llama_stage_pallas.12} parent=47 // pred_region
        _
      $region60: #{llama_stage_pallas.12} parent=47 // pred_fallthru
        _
      // Predicated region
      $region61: #{llama_stage_pallas.12} parent=47 // pred_check
        %p824 = pneg %p305
      $region62: #{llama_stage_pallas.12} parent=47 // pred_check_branch
        %826 = sbr.rel (%p824) target = $region64
      $region63: #{llama_stage_pallas.12} parent=47 // pred_region
        _
      $region64: #{llama_stage_pallas.12} parent=47 // pred_fallthru
        _
    $region48: #{llama_stage_pallas.12} parent=5 // pred_fallthru
      _
    %p827 = scmp.le.s32.totalorder 2, %s16
    // Predicated region
    $region65: #{llama_stage_pallas.12} parent=5 // pred_check
      %p828 = pneg %p827
    $region66: #{llama_stage_pallas.12} parent=5 // pred_check_branch
      %830 = sbr.rel (%p828) target = $region68
    $region67: #{llama_stage_pallas.12} parent=5 // pred_region
      %s831 = ssub.s32 %s16, 2
      // Predicated region
      $region69: #{llama_stage_pallas.12} parent=67 // pred_check
        %p832 = pneg %p251
      $region70: #{llama_stage_pallas.12} parent=67 // pred_check_branch
        %834 = sbr.rel (%p832) target = $region72
      $region71: #{llama_stage_pallas.12} parent=67 // pred_region
        %p835 = scmp.lt.s32.totalorder %s29, 1
        %s836 = scalar_select %p835, %s29, 1
        %p837 = scmp.lt.s32.totalorder %s30, 0
        %s838 = scalar_select %p837, %s30, 0
        %p839 = scmp.lt.s32.totalorder %s31, 0
        %s840 = scalar_select %p839, %s31, 0
        %s841 = sadd.s32 %s840, %s838
        %s842 = sadd.s32 %s841, %s836
        %s843 = smul.addr %s842, 4
        %s844 = scalar_lea.vmem %s7, %s843
      $region72: #{llama_stage_pallas.12} parent=67 // pred_fallthru
        _
      // Predicated region
      $region73: #{llama_stage_pallas.12} parent=67 // pred_check
        %p845 = pneg %p281
      $region74: #{llama_stage_pallas.12} parent=67 // pred_check_branch
        %847 = sbr.rel (%p845) target = $region76
      $region75: #{llama_stage_pallas.12} parent=67 // pred_region
        %p848 = scmp.lt.s32.totalorder %s29, 1
        %s849 = scalar_select %p848, %s29, 1
        %p850 = scmp.lt.s32.totalorder %s30, 0
        %s851 = scalar_select %p850, %s30, 0
        %p852 = scmp.lt.s32.totalorder %s31, 0
        %s853 = scalar_select %p852, %s31, 0
        %s854 = sadd.s32 %s853, %s851
        %s855 = sadd.s32 %s854, %s849
        %s856 = smul.addr %s855, 4
        %s857 = scalar_lea.vmem %s8, %s856
      $region76: #{llama_stage_pallas.12} parent=67 // pred_fallthru
        _
      // Predicated region
      $region77: #{llama_stage_pallas.12} parent=67 // pred_check
        %p858 = pneg %p311
      $region78: #{llama_stage_pallas.12} parent=67 // pred_check_branch
        %860 = sbr.rel (%p858) target = $region80
      $region79: #{llama_stage_pallas.12} parent=67 // pred_region
        %p861 = scmp.lt.s32.totalorder %s29, 1
        %s862 = scalar_select %p861, %s29, 1
        %p863 = scmp.lt.s32.totalorder %s30, 0
        %s864 = scalar_select %p863, %s30, 0
        %p865 = scmp.lt.s32.totalorder %s31, 0
        %s866 = scalar_select %p865, %s31, 0
        %s867 = sadd.s32 %s866, %s864
        %s868 = sadd.s32 %s867, %s862
        %s869 = smul.addr %s868, 4
        %s870 = scalar_lea.vmem %s9, %s869
      $region80: #{llama_stage_pallas.12} parent=67 // pred_fallthru
        _
    $region68: #{llama_stage_pallas.12} parent=5 // pred_fallthru
      _
  $region6: #{llama_stage_pallas.12} parent=0 // loop_footer
    %s20 = sadd.s32 1, %s16
  $region7: #{llama_stage_pallas.12} parent=0 // loop_footer_branch
    %15 = sbr.rel target = $region3
  $region8: #{llama_stage_pallas.12} parent=0 // loop_exit
    _

// kernel: llama_stage_pallas.13
$region0: #{llama_stage_pallas.13}
  #allocation0 [shape = 'u32[]', space=smem, size = 0x4, offset = 0x4, fixed_abs, tag = 'smem constant byte address 0x4 - core index']
  #allocation1 [shape = 'u32[144,128]{1,0:T(1,128)}', space=vmem, size = 0x12000, scoped, tag = 'internal scratch']
  %s0 = inlined_call_operand.vmem [shape: f32[2,8,32], index: 0, kind: input, shape index: {}]
  %s1 = inlined_call_operand.vmem [shape: bf16[2,4,8,8], index: 1, kind: input, shape index: {}]
  %s2 = inlined_call_operand.vmem [shape: bf16[2,4,8,8], index: 2, kind: input, shape index: {}]
  %s3 = inlined_call_operand.vmem [shape: bf16[2,4,8,8], index: 3, kind: input, shape index: {}]
  %s4 = inlined_call_operand.vmem [shape: bf16[4,8,32], index: 4, kind: input, shape index: {}]
  %s5 = inlined_call_operand.vmem [shape: f32[8,8], index: 5, kind: input, shape index: {}]
  %s6 = inlined_call_operand.vmem [shape: f32[2,8,32], index: 6, kind: output, shape index: {}]
  %s7 = sld [smem:[#allocation0]]
  $region72: #{llama_stage_pallas.13} parent=0
    _
  %s9 = ssub.s32 1, %s7
  %s10 = scalar_select 0, %s9, %s7
  loop: start=0, step=1, limit=10
  $region2: #{llama_stage_pallas.13} parent=0 // loop_pre_header
    _
  $region3: #{llama_stage_pallas.13} parent=0 // loop_header
    %s12 = sphi 0, %s16
    %p13 = scmp.ge.s32.totalorder %s12, 10
    %s19 = sphi 0, %s38
    %s20 = sphi 0, %s34
    %s21 = sphi 0, %s30
    %s22 = sphi 0, %s19
    %s23 = sphi 0, %s20
    %s24 = sphi 0, %s21
    %s25 = sphi 0, %s22
    %s26 = sphi 0, %s23
    %s27 = sphi 0, %s24
    %s43 = sphi 0, %s45
    %s46 = sphi 0, %s43
    %s47 = sphi 0, %s46
    %s63 = sphi 0, %s47
    %s73 = sphi 0, %s75
    %s76 = sphi 0, %s73
    %s77 = sphi 0, %s76
    %s93 = sphi 0, %s77
    %s101 = sphi 0, %s103
    %s104 = sphi 0, %s101
    %s105 = sphi 0, %s104
    %s121 = sphi 0, %s105
    %s129 = sphi 0, %s131
    %s132 = sphi 0, %s129
    %s133 = sphi 0, %s132
    %s149 = sphi 0, %s133
    %s155 = sphi 0, %s157
    %s158 = sphi 0, %s155
    %s159 = sphi 0, %s158
    %s175 = sphi 0, %s159
    %s179 = sphi 0, %s179
    %s181 = sphi 0, %s179
    %s182 = sphi 0, %s181
    %s196 = sphi 0, %s182
    %s204 = sphi 0, %s206
    %s207 = sphi 0, %s204
    %s208 = sphi 0, %s207
    %s224 = sphi 0, %s208
  $region4: #{llama_stage_pallas.13} parent=0 // loop_header_branch
    %15 = sbr.rel (%p13) target = $region8
  $region5: #{llama_stage_pallas.13} parent=0 // loop_body
    %s17 = ssub.s32 %s12, 1
    %s18 = ssub.s32 %s12, 2
    %s28 = sadd.s32 1, %s21
    %p29 = scmp.ge.s32.totalorder %s28, 4
    %s30 = scalar_select %p29, 0, %s28
    %s31 = sadd.s32 1, %s20
    %s32 = scalar_select %p29, %s31, %s20
    %p33 = scmp.ge.s32.totalorder %s32, 1
    %s34 = scalar_select %p33, 0, %s32
    %s35 = sadd.s32 1, %s19
    %s36 = scalar_select %p33, %s35, %s19
    %p37 = scmp.ge.s32.totalorder %s36, 2
    %s38 = scalar_select %p37, 0, %s36
    %s39 = ssub.s32 %s19, %s38
    %s40 = ssub.s32 %s20, %s34
    %s41 = sor.u32 %s39, %s40
    %p42 = scmp.eq.s32.totalorder %s41, 0
    %s44 = sadd.s32 %s43, 1
    %s45 = scalar_select %p42, %s43, %s44
    %p48 = pneg %p42
    %p49 = scmp.eq.s32.totalorder %s12, 7
    %p50 = por %p48, %p49
    %p51 = scmp.ne.s32.totalorder %s43, %s46
    %p52 = scmp.eq.s32.totalorder %s12, 0
    %p53 = por %p51, %p52
    %p54 = scmp.ne.s32.totalorder %s43, %s46
    %p55 = scmp.eq.s32.totalorder %s17, 7
    %p56 = por %p54, %p55
    %p57 = scmp.ne.s32.totalorder %s46, %s47
    %p58 = scmp.eq.s32.totalorder %s17, 0
    %p59 = por %p57, %p58
    %p60 = scmp.ne.s32.totalorder %s46, %s47
    %p61 = scmp.eq.s32.totalorder %s18, 7
    %p62 = por %p60, %p61
    %p64 = scmp.ne.s32.totalorder %s47, %s63
    %p65 = scmp.eq.s32.totalorder %s18, 0
    %p66 = por %p64, %p65
    %s67 = ssub.s32 %s19, %s38
    %s68 = ssub.s32 %s21, %s30
    %s69 = sor.u32 %s67, %s68
    %s70 = ssub.s32 %s20, %s34
    %s71 = sor.u32 %s69, %s70
    %p72 = scmp.eq.s32.totalorder %s71, 0
    %s74 = sadd.s32 %s73, 1
    %s75 = scalar_select %p72, %s73, %s74
    %p78 = pneg %p72
    %p79 = scmp.eq.s32.totalorder %s12, 7
    %p80 = por %p78, %p79
    %p81 = scmp.ne.s32.totalorder %s73, %s76
    %p82 = scmp.eq.s32.totalorder %s12, 0
    %p83 = por %p81, %p82
    %p84 = scmp.ne.s32.totalorder %s73, %s76
    %p85 = scmp.eq.s32.totalorder %s17, 7
    %p86 = por %p84, %p85
    %p87 = scmp.ne.s32.totalorder %s76, %s77
    %p88 = scmp.eq.s32.totalorder %s17, 0
    %p89 = por %p87, %p88
    %p90 = scmp.ne.s32.totalorder %s76, %s77
    %p91 = scmp.eq.s32.totalorder %s18, 7
    %p92 = por %p90, %p91
    %p94 = scmp.ne.s32.totalorder %s77, %s93
    %p95 = scmp.eq.s32.totalorder %s18, 0
    %p96 = por %p94, %p95
    %s97 = ssub.s32 %s19, %s38
    %s98 = ssub.s32 %s21, %s30
    %s99 = sor.u32 %s97, %s98
    %p100 = scmp.eq.s32.totalorder %s99, 0
    %s102 = sadd.s32 %s101, 1
    %s103 = scalar_select %p100, %s101, %s102
    %p106 = pneg %p100
    %p107 = scmp.eq.s32.totalorder %s12, 7
    %p108 = por %p106, %p107
    %p109 = scmp.ne.s32.totalorder %s101, %s104
    %p110 = scmp.eq.s32.totalorder %s12, 0
    %p111 = por %p109, %p110
    %p112 = scmp.ne.s32.totalorder %s101, %s104
    %p113 = scmp.eq.s32.totalorder %s17, 7
    %p114 = por %p112, %p113
    %p115 = scmp.ne.s32.totalorder %s104, %s105
    %p116 = scmp.eq.s32.totalorder %s17, 0
    %p117 = por %p115, %p116
    %p118 = scmp.ne.s32.totalorder %s104, %s105
    %p119 = scmp.eq.s32.totalorder %s18, 7
    %p120 = por %p118, %p119
    %p122 = scmp.ne.s32.totalorder %s105, %s121
    %p123 = scmp.eq.s32.totalorder %s18, 0
    %p124 = por %p122, %p123
    %s125 = ssub.s32 %s19, %s38
    %s126 = ssub.s32 %s21, %s30
    %s127 = sor.u32 %s125, %s126
    %p128 = scmp.eq.s32.totalorder %s127, 0
    %s130 = sadd.s32 %s129, 1
    %s131 = scalar_select %p128, %s129, %s130
    %p134 = pneg %p128
    %p135 = scmp.eq.s32.totalorder %s12, 7
    %p136 = por %p134, %p135
    %p137 = scmp.ne.s32.totalorder %s129, %s132
    %p138 = scmp.eq.s32.totalorder %s12, 0
    %p139 = por %p137, %p138
    %p140 = scmp.ne.s32.totalorder %s129, %s132
    %p141 = scmp.eq.s32.totalorder %s17, 7
    %p142 = por %p140, %p141
    %p143 = scmp.ne.s32.totalorder %s132, %s133
    %p144 = scmp.eq.s32.totalorder %s17, 0
    %p145 = por %p143, %p144
    %p146 = scmp.ne.s32.totalorder %s132, %s133
    %p147 = scmp.eq.s32.totalorder %s18, 7
    %p148 = por %p146, %p147
    %p150 = scmp.ne.s32.totalorder %s133, %s149
    %p151 = scmp.eq.s32.totalorder %s18, 0
    %p152 = por %p150, %p151
    %s153 = ssub.s32 %s21, %s30
    %p154 = scmp.eq.s32.totalorder %s153, 0
    %s156 = sadd.s32 %s155, 1
    %s157 = scalar_select %p154, %s155, %s156
    %p160 = pneg %p154
    %p161 = scmp.eq.s32.totalorder %s12, 7
    %p162 = por %p160, %p161
    %p163 = scmp.ne.s32.totalorder %s155, %s158
    %p164 = scmp.eq.s32.totalorder %s12, 0
    %p165 = por %p163, %p164
    %p166 = scmp.ne.s32.totalorder %s155, %s158
    %p167 = scmp.eq.s32.totalorder %s17, 7
    %p168 = por %p166, %p167
    %p169 = scmp.ne.s32.totalorder %s158, %s159
    %p170 = scmp.eq.s32.totalorder %s17, 0
    %p171 = por %p169, %p170
    %p172 = scmp.ne.s32.totalorder %s158, %s159
    %p173 = scmp.eq.s32.totalorder %s18, 7
    %p174 = por %p172, %p173
    %p176 = scmp.ne.s32.totalorder %s159, %s175
    %p177 = scmp.eq.s32.totalorder %s18, 0
    %p178 = por %p176, %p177
    %s180 = sadd.s32 %s179, 1
    %p183 = scmp.eq.s32.totalorder %s12, 7
    %p184 = scmp.ne.s32.totalorder %s179, %s181
    %p185 = scmp.eq.s32.totalorder %s12, 0
    %p186 = por %p184, %p185
    %p187 = scmp.ne.s32.totalorder %s179, %s181
    %p188 = scmp.eq.s32.totalorder %s17, 7
    %p189 = por %p187, %p188
    %p190 = scmp.ne.s32.totalorder %s181, %s182
    %p191 = scmp.eq.s32.totalorder %s17, 0
    %p192 = por %p190, %p191
    %p193 = scmp.ne.s32.totalorder %s181, %s182
    %p194 = scmp.eq.s32.totalorder %s18, 7
    %p195 = por %p193, %p194
    %p197 = scmp.ne.s32.totalorder %s182, %s196
    %p198 = scmp.eq.s32.totalorder %s18, 0
    %p199 = por %p197, %p198
    %s200 = ssub.s32 %s19, %s38
    %s201 = ssub.s32 %s20, %s34
    %s202 = sor.u32 %s200, %s201
    %p203 = scmp.eq.s32.totalorder %s202, 0
    %s205 = sadd.s32 %s204, 1
    %s206 = scalar_select %p203, %s204, %s205
    %p209 = pneg %p203
    %p210 = scmp.eq.s32.totalorder %s12, 7
    %p211 = por %p209, %p210
    %p212 = scmp.ne.s32.totalorder %s204, %s207
    %p213 = scmp.eq.s32.totalorder %s12, 0
    %p214 = por %p212, %p213
    %p215 = scmp.ne.s32.totalorder %s204, %s207
    %p216 = scmp.eq.s32.totalorder %s17, 7
    %p217 = por %p215, %p216
    %p218 = scmp.ne.s32.totalorder %s207, %s208
    %p219 = scmp.eq.s32.totalorder %s17, 0
    %p220 = por %p218, %p219
    %p221 = scmp.ne.s32.totalorder %s207, %s208
    %p222 = scmp.eq.s32.totalorder %s18, 7
    %p223 = por %p221, %p222
    %p225 = scmp.ne.s32.totalorder %s208, %s224
    %p226 = scmp.eq.s32.totalorder %s18, 0
    %p227 = por %p225, %p226
    %p228 = scmp.le.s32.totalorder 1, %s12
    %p229 = scmp.lt.s32.totalorder %s12, 9
    %p230 = pnand %p228, %p229
    %p231 = pneg %p230
    // Predicated region
    $region9: #{llama_stage_pallas.13} parent=5 // pred_check
      _
    $region10: #{llama_stage_pallas.13} parent=5 // pred_check_branch
      %233 = sbr.rel (%p230) target = $region12
    $region11: #{llama_stage_pallas.13} parent=5 // pred_region
      %s234 = ssub.s32 %s12, 1
      // Predicated region
      $region13: #{llama_stage_pallas.13} parent=11 // pred_check
        %p235 = pneg %p192
      $region14: #{llama_stage_pallas.13} parent=11 // pred_check_branch
        %237 = sbr.rel (%p235) target = $region16
      $region15: #{llama_stage_pallas.13} parent=11 // pred_region
        _
      $region16: #{llama_stage_pallas.13} parent=11 // pred_fallthru
        _
    $region12: #{llama_stage_pallas.13} parent=5 // pred_fallthru
      _
    %p238 = scmp.lt.s32.totalorder %s12, 8
    // Predicated region
    $region17: #{llama_stage_pallas.13} parent=5 // pred_check
      %p239 = pneg %p238
    $region18: #{llama_stage_pallas.13} parent=5 // pred_check_branch
      %241 = sbr.rel (%p239) target = $region20
    $region19: #{llama_stage_pallas.13} parent=5 // pred_region
      // Predicated region
      $region21: #{llama_stage_pallas.13} parent=19 // pred_check
        %p242 = pneg %p53
      $region22: #{llama_stage_pallas.13} parent=19 // pred_check_branch
        %244 = sbr.rel (%p242) target = $region24
      $region23: #{llama_stage_pallas.13} parent=19 // pred_region
        %p245 = scmp.lt.s32.totalorder %s19, 1
        %s246 = scalar_select %p245, %s19, 1
        %p247 = scmp.lt.s32.totalorder %s20, 0
        %s248 = scalar_select %p247, %s20, 0
        %s249 = sadd.s32 %s248, %s246
        %s250 = smul.addr %s249, 8
        %s251 = scalar_lea.vmem %s0, %s250
      $region24: #{llama_stage_pallas.13} parent=19 // pred_fallthru
        _
      // Predicated region
      $region25: #{llama_stage_pallas.13} parent=19 // pred_check
        %p252 = pneg %p83
      $region26: #{llama_stage_pallas.13} parent=19 // pred_check_branch
        %254 = sbr.rel (%p252) target = $region28
      $region27: #{llama_stage_pallas.13} parent=19 // pred_region
        %p255 = scmp.lt.s32.totalorder %s19, 1
        %s256 = scalar_select %p255, %s19, 1
        %p257 = scmp.lt.s32.totalorder %s21, 3
        %s258 = scalar_select %p257, %s21, 3
        %p259 = scmp.lt.s32.totalorder %s20, 0
        %s260 = scalar_select %p259, %s20, 0
        %s261 = sadd.s32 %s260, %s258
        %s262 = smul.addr %s256, 4
        %s263 = sadd.s32 %s261, %s262
        %s264 = smul.addr %s263, 4
        %s265 = scalar_lea.vmem %s1, %s264
      $region28: #{llama_stage_pallas.13} parent=19 // pred_fallthru
        _
      // Predicated region
      $region29: #{llama_stage_pallas.13} parent=19 // pred_check
        %p266 = pneg %p111
      $region30: #{llama_stage_pallas.13} parent=19 // pred_check_branch
        %268 = sbr.rel (%p266) target = $region32
      $region31: #{llama_stage_pallas.13} parent=19 // pred_region
        %p269 = scmp.lt.s32.totalorder %s19, 1
        %s270 = scalar_select %p269, %s19, 1
        %p271 = scmp.lt.s32.totalorder %s21, 3
        %s272 = scalar_select %p271, %s21, 3
        %s273 = smul.addr %s270, 4
        %s274 = sadd.s32 %s272, %s273
        %s275 = smul.addr %s274, 4
        %s276 = scalar_lea.vmem %s2, %s275
      $region32: #{llama_stage_pallas.13} parent=19 // pred_fallthru
        _
      // Predicated region
      $region33: #{llama_stage_pallas.13} parent=19 // pred_check
        %p277 = pneg %p139
      $region34: #{llama_stage_pallas.13} parent=19 // pred_check_branch
        %279 = sbr.rel (%p277) target = $region36
      $region35: #{llama_stage_pallas.13} parent=19 // pred_region
        %p280 = scmp.lt.s32.totalorder %s19, 1
        %s281 = scalar_select %p280, %s19, 1
        %p282 = scmp.lt.s32.totalorder %s21, 3
        %s283 = scalar_select %p282, %s21, 3
        %s284 = smul.addr %s281, 4
        %s285 = sadd.s32 %s283, %s284
        %s286 = smul.addr %s285, 4
        %s287 = scalar_lea.vmem %s3, %s286
      $region36: #{llama_stage_pallas.13} parent=19 // pred_fallthru
        _
      // Predicated region
      $region37: #{llama_stage_pallas.13} parent=19 // pred_check
        %p288 = pneg %p165
      $region38: #{llama_stage_pallas.13} parent=19 // pred_check_branch
        %290 = sbr.rel (%p288) target = $region40
      $region39: #{llama_stage_pallas.13} parent=19 // pred_region
        %p291 = scmp.lt.s32.totalorder %s21, 3
        %s292 = scalar_select %p291, %s21, 3
        %s293 = smul.addr %s292, 4
        %s294 = scalar_lea.vmem %s4, %s293
      $region40: #{llama_stage_pallas.13} parent=19 // pred_fallthru
        _
    $region20: #{llama_stage_pallas.13} parent=5 // pred_fallthru
      _
    %p295 = scmp.le.s32.totalorder 1, %s12
    %p296 = scmp.lt.s32.totalorder %s12, 9
    %p297 = pnand %p295, %p296
    %p298 = pneg %p297
    // Predicated region
    $region41: #{llama_stage_pallas.13} parent=5 // pred_check
      _
    $region42: #{llama_stage_pallas.13} parent=5 // pred_check_branch
      %300 = sbr.rel (%p297) target = $region44
    $region43: #{llama_stage_pallas.13} parent=5 // pred_region
      %s301 = ssub.s32 %s12, 1
      %p302 = scmp.lt.s32.totalorder %s22, 1
      %s303 = scalar_select %p302, %s22, 1
      %p304 = scmp.lt.s32.totalorder %s23, 0
      %s305 = scalar_select %p304, %s23, 0
      %s306 = sadd.s32 %s305, %s303
      %s307 = smul.addr %s306, 8
      %s308 = scalar_lea.vmem %s0, %s307
      %p309 = pneg %p59
      %p310 = pneg %p56
      %p311 = scmp.lt.s32.totalorder %s22, 1
      %s312 = scalar_select %p311, %s22, 1
      %p313 = scmp.lt.s32.totalorder %s24, 3
      %s314 = scalar_select %p313, %s24, 3
      %p315 = scmp.lt.s32.totalorder %s23, 0
      %s316 = scalar_select %p315, %s23, 0
      %s317 = sadd.s32 %s316, %s314
      %s318 = smul.addr %s312, 4
      %s319 = sadd.s32 %s317, %s318
      %s320 = smul.addr %s319, 4
      %s321 = scalar_lea.vmem %s1, %s320
      %p322 = pneg %p89
      %p323 = pneg %p86
      %p324 = scmp.lt.s32.totalorder %s22, 1
      %s325 = scalar_select %p324, %s22, 1
      %p326 = scmp.lt.s32.totalorder %s24, 3
      %s327 = scalar_select %p326, %s24, 3
      %s328 = smul.addr %s325, 4
      %s329 = sadd.s32 %s327, %s328
      %s330 = smul.addr %s329, 4
      %s331 = scalar_lea.vmem %s2, %s330
      %p332 = pneg %p117
      %p333 = pneg %p114
      %p334 = scmp.lt.s32.totalorder %s22, 1
      %s335 = scalar_select %p334, %s22, 1
      %p336 = scmp.lt.s32.totalorder %s24, 3
      %s337 = scalar_select %p336, %s24, 3
      %s338 = smul.addr %s335, 4
      %s339 = sadd.s32 %s337, %s338
      %s340 = smul.addr %s339, 4
      %s341 = scalar_lea.vmem %s3, %s340
      %p342 = pneg %p145
      %p343 = pneg %p142
      %p344 = scmp.lt.s32.totalorder %s24, 3
      %s345 = scalar_select %p344, %s24, 3
      %s346 = smul.addr %s345, 4
      %s347 = scalar_lea.vmem %s4, %s346
      %p348 = pneg %p171
      %p349 = pneg %p168
      %p350 = pneg %p192
      %p351 = pneg %p189
      %p352 = pneg %p220
      %p353 = pneg %p217
      %p354 = scmp.lt.s32.totalorder %s22, 1
      %s355 = scalar_select %p354, %s22, 1
      %p356 = scmp.lt.s32.totalorder %s23, 0
      %s357 = scalar_select %p356, %s23, 0
      %s358 = sadd.s32 %s357, %s355
      %s359 = smul.addr %s358, 8
      %s360 = scalar_lea.vmem %s6, %s359
      %p361 = scmp.lt.s32.totalorder %s22, 1
      %s362 = scalar_select %p361, %s22, 1
      %p363 = scmp.lt.s32.totalorder %s23, 0
      %s364 = scalar_select %p363, %s23, 0
      %s365 = sadd.s32 %s364, %s362
      %s366 = smul.addr %s365, 8
      %s367 = scalar_lea.vmem %s0, %s366
      %p368 = scmp.lt.s32.totalorder %s22, 1
      %s369 = scalar_select %p368, %s22, 1
      %p370 = scmp.lt.s32.totalorder %s24, 3
      %s371 = scalar_select %p370, %s24, 3
      %p372 = scmp.lt.s32.totalorder %s23, 0
      %s373 = scalar_select %p372, %s23, 0
      %s374 = sadd.s32 %s373, %s371
      %s375 = smul.addr %s369, 4
      %s376 = sadd.s32 %s374, %s375
      %s377 = smul.addr %s376, 4
      %s378 = scalar_lea.vmem %s1, %s377
      %p379 = scmp.lt.s32.totalorder %s22, 1
      %s380 = scalar_select %p379, %s22, 1
      %p381 = scmp.lt.s32.totalorder %s24, 3
      %s382 = scalar_select %p381, %s24, 3
      %s383 = smul.addr %s380, 4
      %s384 = sadd.s32 %s382, %s383
      %s385 = smul.addr %s384, 4
      %s386 = scalar_lea.vmem %s2, %s385
      %p387 = scmp.lt.s32.totalorder %s22, 1
      %s388 = scalar_select %p387, %s22, 1
      %p389 = scmp.lt.s32.totalorder %s24, 3
      %s390 = scalar_select %p389, %s24, 3
      %s391 = smul.addr %s388, 4
      %s392 = sadd.s32 %s390, %s391
      %s393 = smul.addr %s392, 4
      %s394 = scalar_lea.vmem %s3, %s393
      %p395 = scmp.lt.s32.totalorder %s24, 3
      %s396 = scalar_select %p395, %s24, 3
      %s397 = smul.addr %s396, 4
      %s398 = scalar_lea.vmem %s4, %s397
      %p399 = scmp.lt.s32.totalorder %s22, 1
      %s400 = scalar_select %p399, %s22, 1
      %p401 = scmp.lt.s32.totalorder %s23, 0
      %s402 = scalar_select %p401, %s23, 0
      %s403 = sadd.s32 %s402, %s400
      %s404 = smul.addr %s403, 8
      %s405 = scalar_lea.vmem %s6, %s404
      %v407 = vld [vmem:[%s378] sm:$0xf]
      // While loop
      $region45: #{llama_stage_pallas.13} parent=43 // loop_pre_header
        _
      $region46: #{llama_stage_pallas.13} parent=43 // loop_header
        %s409 = sphi 0, %s411
        %p410 = scmp.ge.s32.totalorder %s409, %s23
        %v414 = vphi -inf, %v476
        %v415 = vphi 0.0, %v487
        %v416 = vphi 0.0, %v537
      $region47: #{llama_stage_pallas.13} parent=43 // loop_header_branch
        %413 = sbr.rel (%p410) target = $region51
      $region48: #{llama_stage_pallas.13} parent=43 // loop_body
        %s417 = smul.u32 %s409, 8
        %s418 = sshra.s32 %s417, 3
        %s419 = sand.u32 %s417, 7
        %s420 = smul.addr %s418, 4
        %s421 = scalar_lea.vmem %s386, %s420
        %v422 = vld [vmem:[%s421] sm:$0xf]
        %s423 = smul.addr %s418, 4
        %s424 = scalar_lea.vmem %s394, %s423
        %v425 = vld [vmem:[%s424] sm:$0xf]
        %vm426 = vcmask 64512
        %v428 = vsel %vm426, %v407, 0
        %v431 = vsel %vm426, %v422, 0
        %433 = vmatprep.subr.bf16.mxu0 0
        %434 = vmatpush1.bf16.xpose.msra.mxu0 %v431
        %435 = vmatprep.subr.bf16.mxu0 0
        %436 = vmatpush1.bf16.xpose.msra.mxu0 0
        %437 = vmatprep.subr.bf16.mxu0 0
        %438 = vmatpush1.bf16.xpose.msra.mxu0 0
        %439 = vmatprep.subr.bf16.mxu0 0
        %440 = vmatpush1.bf16.xpose.msra.mxu0 0
        %441 = vmatprep.subr.bf16.mxu0 0
        %442 = vmatpush1.bf16.xpose.msra.mxu0 0
        %443 = vmatprep.subr.bf16.mxu0 0
        %444 = vmatpush1.bf16.xpose.msra.mxu0 0
        %445 = vmatprep.subr.bf16.mxu0 0
        %446 = vmatpush1.bf16.xpose.msra.mxu0 0
        %447 = vmatprep.subr.bf16.mxu0 0
        %448 = vmatpush1.bf16.xpose.msra.mxu0 0
        %449 = vmatprep.subr.bf16.mxu0 0
        %450 = vmatpush1.bf16.xpose.msra.mxu0 0
        %451 = vmatprep.subr.bf16.mxu0 0
        %452 = vmatpush1.bf16.xpose.msra.mxu0 0
        %453 = vmatprep.subr.bf16.mxu0 0
        %454 = vmatpush1.bf16.xpose.msra.mxu0 0
        %455 = vmatprep.subr.bf16.mxu0 0
        %456 = vmatpush1.bf16.xpose.msra.mxu0 0
        %457 = vmatprep.subr.bf16.mxu0 0
        %458 = vmatpush1.bf16.xpose.msra.mxu0 0
        %459 = vmatprep.subr.bf16.mxu0 0
        %460 = vmatpush1.bf16.xpose.msra.mxu0 0
        %461 = vmatprep.subr.bf16.mxu0 0
        %462 = vmatpush1.bf16.xpose.msra.mxu0 0
        %463 = vmatprep.subr.bf16.mxu0 0
        %464 = vmatpush1.bf16.xpose.msra.mxu0 0
        %465 = vmatprep.mubr.bf16.mxu0 0
        %466 = vmatmul.mubr.bf16.gmra.mrb[0].mxu0 %v428
        %v467 = vpop.f32.mrb[0].mxu0
        %v468 = vadd.f32 0.0, %v467
        %v469 = vpop.f32.mrb[0].mxu0
        %v470 = vpop.f32.mrb[0].mxu0
        %v471 = vpop.f32.mrb[0].mxu0
        %472 = vdwg.mxu0
        %v473 = vsel %vm426, %v468, -inf
        %474 = vmax.xlane.f32.xlu0 %v473
        %v475 = vpop.xlane.xlu0 %474
        %v476 = vmax.f32 %v414, %v475
        %v477 = vsub.f32 %v414, %v476
        %v478 = vmul.f32 %v477, 1.442695
        %v479 = vpow.pop %v478
        %v480 = vsub.f32 %v468, %v476
        %v481 = vmul.f32 %v480, 1.442695
        %v482 = vpow.pop %v481
        %v483 = vmul.f32 %v479, %v415
        %v484 = vsel %vm426, %v482, 0.0
        %485 = vadd.xlane.f32.xlu0 %v484
        %v486 = vpop.xlane.xlu0 %485
        %v487 = vadd.f32 %v483, %v486
        %v488 = vmul.f32 %v479, %v416
        %v489 = vpack.c.bf16 %v482, %v482
        %v491 = vsel %vm426, %v489, 0
        %vm493 = vcmask 1043456
        %v495 = vsel %vm493, %v425, 0
        %497 = vmatprep.subr.bf16.mxu0 0
        %498 = vmatpush1.bf16.msra.mxu0 %v495
        %499 = vmatprep.subr.bf16.mxu0 0
        %500 = vmatpush1.bf16.msra.mxu0 0
        %501 = vmatprep.subr.bf16.mxu0 0
        %502 = vmatpush1.bf16.msra.mxu0 0
        %503 = vmatprep.subr.bf16.mxu0 0
        %504 = vmatpush1.bf16.msra.mxu0 0
        %505 = vmatprep.subr.bf16.mxu0 0
        %506 = vmatpush1.bf16.msra.mxu0 0
        %507 = vmatprep.subr.bf16.mxu0 0
        %508 = vmatpush1.bf16.msra.mxu0 0
        %509 = vmatprep.subr.bf16.mxu0 0
        %510 = vmatpush1.bf16.msra.mxu0 0
        %511 = vmatprep.subr.bf16.mxu0 0
        %512 = vmatpush1.bf16.msra.mxu0 0
        %513 = vmatprep.subr.bf16.mxu0 0
        %514 = vmatpush1.bf16.msra.mxu0 0
        %515 = vmatprep.subr.bf16.mxu0 0
        %516 = vmatpush1.bf16.msra.mxu0 0
        %517 = vmatprep.subr.bf16.mxu0 0
        %518 = vmatpush1.bf16.msra.mxu0 0
        %519 = vmatprep.subr.bf16.mxu0 0
        %520 = vmatpush1.bf16.msra.mxu0 0
        %521 = vmatprep.subr.bf16.mxu0 0
        %522 = vmatpush1.bf16.msra.mxu0 0
        %523 = vmatprep.subr.bf16.mxu0 0
        %524 = vmatpush1.bf16.msra.mxu0 0
        %525 = vmatprep.subr.bf16.mxu0 0
        %526 = vmatpush1.bf16.msra.mxu0 0
        %527 = vmatprep.subr.bf16.mxu0 0
        %528 = vmatpush1.bf16.msra.mxu0 0
        %529 = vmatprep.mubr.bf16.mxu0 0
        %530 = vmatmul.mubr.bf16.gmra.mrb[0].mxu0 %v491
        %v531 = vpop.f32.mrb[0].mxu0
        %v532 = vadd.f32 0.0, %v531
        %v533 = vpop.f32.mrb[0].mxu0
        %v534 = vpop.f32.mrb[0].mxu0
        %v535 = vpop.f32.mrb[0].mxu0
        %536 = vdwg.mxu0
        %v537 = vadd.f32 %v488, %v532
      $region49: #{llama_stage_pallas.13} parent=43 // loop_footer
        %s411 = sadd.s32 %s409, 1
      $region50: #{llama_stage_pallas.13} parent=43 // loop_footer_branch
        %408 = sbr.rel target = $region46
      $region51: #{llama_stage_pallas.13} parent=43 // loop_exit
        _
      %s538 = smul.u32 %s23, 8
      %s539 = sshra.s32 %s538, 3
      %s540 = sand.u32 %s538, 7
      %s541 = smul.addr %s539, 4
      %s542 = scalar_lea.vmem %s386, %s541
      %v543 = vld [vmem:[%s542] sm:$0xf]
      %s544 = smul.addr %s539, 4
      %s545 = scalar_lea.vmem %s394, %s544
      %v546 = vld [vmem:[%s545] sm:$0xf]
      %v547 = vld [vmem:[%s5] sm:$0xff]
      %vm548 = vcmask 64512
      %v550 = vsel %vm548, %v407, 0
      %v553 = vsel %vm548, %v543, 0
      %555 = vmatprep.subr.bf16.mxu0 0
      %556 = vmatpush1.bf16.xpose.msra.mxu0 %v553
      %557 = vmatprep.subr.bf16.mxu0 0
      %558 = vmatpush1.bf16.xpose.msra.mxu0 0
      %559 = vmatprep.subr.bf16.mxu0 0
      %560 = vmatpush1.bf16.xpose.msra.mxu0 0
      %561 = vmatprep.subr.bf16.mxu0 0
      %562 = vmatpush1.bf16.xpose.msra.mxu0 0
      %563 = vmatprep.subr.bf16.mxu0 0
      %564 = vmatpush1.bf16.xpose.msra.mxu0 0
      %565 = vmatprep.subr.bf16.mxu0 0
      %566 = vmatpush1.bf16.xpose.msra.mxu0 0
      %567 = vmatprep.subr.bf16.mxu0 0
      %568 = vmatpush1.bf16.xpose.msra.mxu0 0
      %569 = vmatprep.subr.bf16.mxu0 0
      %570 = vmatpush1.bf16.xpose.msra.mxu0 0
      %571 = vmatprep.subr.bf16.mxu0 0
      %572 = vmatpush1.bf16.xpose.msra.mxu0 0
      %573 = vmatprep.subr.bf16.mxu0 0
      %574 = vmatpush1.bf16.xpose.msra.mxu0 0
      %575 = vmatprep.subr.bf16.mxu0 0
      %576 = vmatpush1.bf16.xpose.msra.mxu0 0
      %577 = vmatprep.subr.bf16.mxu0 0
      %578 = vmatpush1.bf16.xpose.msra.mxu0 0
      %579 = vmatprep.subr.bf16.mxu0 0
      %580 = vmatpush1.bf16.xpose.msra.mxu0 0
      %581 = vmatprep.subr.bf16.mxu0 0
      %582 = vmatpush1.bf16.xpose.msra.mxu0 0
      %583 = vmatprep.subr.bf16.mxu0 0
      %584 = vmatpush1.bf16.xpose.msra.mxu0 0
      %585 = vmatprep.subr.bf16.mxu0 0
      %586 = vmatpush1.bf16.xpose.msra.mxu0 0
      %587 = vmatprep.mubr.bf16.mxu0 0
      %588 = vmatmul.mubr.bf16.gmra.mrb[0].mxu0 %v550
      %v589 = vpop.f32.mrb[0].mxu0
      %v590 = vadd.f32 %v547, %v589
      %v591 = vpop.f32.mrb[0].mxu0
      %v592 = vpop.f32.mrb[0].mxu0
      %v593 = vpop.f32.mrb[0].mxu0
      %594 = vdwg.mxu0
      %v595 = vsel %vm548, %v590, -inf
      %596 = vmax.xlane.f32.xlu0 %v595
      %v597 = vpop.xlane.xlu0 %596
      %v598 = vmax.f32 %v414, %v597
      %v599 = vsub.f32 %v414, %v598
      %v600 = vmul.f32 %v599, 1.442695
      %v601 = vpow.pop %v600
      %v602 = vsub.f32 %v590, %v598
      %v603 = vmul.f32 %v602, 1.442695
      %v604 = vpow.pop %v603
      %v605 = vmul.f32 %v601, %v415
      %v606 = vsel %vm548, %v604, 0.0
      %607 = vadd.xlane.f32.xlu0 %v606
      %v608 = vpop.xlane.xlu0 %607
      %v609 = vadd.f32 %v605, %v608
      %v610 = vmul.f32 %v601, %v416
      %v611 = vpack.c.bf16 %v604, %v604
      %v613 = vsel %vm548, %v611, 0
      %vm615 = vcmask 1043456
      %v617 = vsel %vm615, %v546, 0
      %619 = vmatprep.subr.bf16.mxu0 0
      %620 = vmatpush1.bf16.msra.mxu0 %v617
      %621 = vmatprep.subr.bf16.mxu0 0
      %622 = vmatpush1.bf16.msra.mxu0 0
      %623 = vmatprep.subr.bf16.mxu0 0
      %624 = vmatpush1.bf16.msra.mxu0 0
      %625 = vmatprep.subr.bf16.mxu0 0
      %626 = vmatpush1.bf16.msra.mxu0 0
      %627 = vmatprep.subr.bf16.mxu0 0
      %628 = vmatpush1.bf16.msra.mxu0 0
      %629 = vmatprep.subr.bf16.mxu0 0
      %630 = vmatpush1.bf16.msra.mxu0 0
      %631 = vmatprep.subr.bf16.mxu0 0
      %632 = vmatpush1.bf16.msra.mxu0 0
      %633 = vmatprep.subr.bf16.mxu0 0
      %634 = vmatpush1.bf16.msra.mxu0 0
      %635 = vmatprep.subr.bf16.mxu0 0
      %636 = vmatpush1.bf16.msra.mxu0 0
      %637 = vmatprep.subr.bf16.mxu0 0
      %638 = vmatpush1.bf16.msra.mxu0 0
      %639 = vmatprep.subr.bf16.mxu0 0
      %640 = vmatpush1.bf16.msra.mxu0 0
      %641 = vmatprep.subr.bf16.mxu0 0
      %642 = vmatpush1.bf16.msra.mxu0 0
      %643 = vmatprep.subr.bf16.mxu0 0
      %644 = vmatpush1.bf16.msra.mxu0 0
      %645 = vmatprep.subr.bf16.mxu0 0
      %646 = vmatpush1.bf16.msra.mxu0 0
      %647 = vmatprep.subr.bf16.mxu0 0
      %648 = vmatpush1.bf16.msra.mxu0 0
      %649 = vmatprep.subr.bf16.mxu0 0
      %650 = vmatpush1.bf16.msra.mxu0 0
      %651 = vmatprep.mubr.bf16.mxu0 0
      %652 = vmatmul.mubr.bf16.gmra.mrb[0].mxu0 %v613
      %v653 = vpop.f32.mrb[0].mxu0
      %v654 = vadd.f32 0.0, %v653
      %v655 = vpop.f32.mrb[0].mxu0
      %v656 = vpop.f32.mrb[0].mxu0
      %v657 = vpop.f32.mrb[0].mxu0
      %658 = vdwg.mxu0
      %v659 = vadd.f32 %v610, %v654
      %v660 = vrcp.pop %v609
      %v661 = vmul.f32 %v659, %v660
      %v662 = vpack.c.bf16 %v661, %v661
      %v663 = vld [vmem:[%s398] sm:$0xf]
      %v665 = vsel %vm548, %v662, 0
      %v668 = vsel %vm615, %v663, 0
      %670 = vmatprep.subr.bf16.mxu0 0
      %671 = vmatpush1.bf16.msra.mxu0 %v668
      %672 = vmatprep.subr.bf16.mxu0 0
      %673 = vmatpush1.bf16.msra.mxu0 0
      %674 = vmatprep.subr.bf16.mxu0 0
      %675 = vmatpush1.bf16.msra.mxu0 0
      %676 = vmatprep.subr.bf16.mxu0 0
      %677 = vmatpush1.bf16.msra.mxu0 0
      %678 = vmatprep.subr.bf16.mxu0 0
      %679 = vmatpush1.bf16.msra.mxu0 0
      %680 = vmatprep.subr.bf16.mxu0 0
      %681 = vmatpush1.bf16.msra.mxu0 0
      %682 = vmatprep.subr.bf16.mxu0 0
      %683 = vmatpush1.bf16.msra.mxu0 0
      %684 = vmatprep.subr.bf16.mxu0 0
      %685 = vmatpush1.bf16.msra.mxu0 0
      %686 = vmatprep.subr.bf16.mxu0 0
      %687 = vmatpush1.bf16.msra.mxu0 0
      %688 = vmatprep.subr.bf16.mxu0 0
      %689 = vmatpush1.bf16.msra.mxu0 0
      %690 = vmatprep.subr.bf16.mxu0 0
      %691 = vmatpush1.bf16.msra.mxu0 0
      %692 = vmatprep.subr.bf16.mxu0 0
      %693 = vmatpush1.bf16.msra.mxu0 0
      %694 = vmatprep.subr.bf16.mxu0 0
      %695 = vmatpush1.bf16.msra.mxu0 0
      %696 = vmatprep.subr.bf16.mxu0 0
      %697 = vmatpush1.bf16.msra.mxu0 0
      %698 = vmatprep.subr.bf16.mxu0 0
      %699 = vmatpush1.bf16.msra.mxu0 0
      %700 = vmatprep.subr.bf16.mxu0 0
      %701 = vmatpush1.bf16.msra.mxu0 0
      %702 = vmatprep.mubr.bf16.mxu0 0
      %703 = vmatmul.mubr.bf16.gmra.mrb[0].mxu0 %v665
      %v704 = vpop.f32.mrb[0].mxu0
      %v705 = vadd.f32 0.0, %v704
      %v706 = vpop.f32.mrb[0].mxu0
      %v707 = vpop.f32.mrb[0].mxu0
      %v708 = vpop.f32.mrb[0].mxu0
      %709 = vdwg.mxu0
      %p710 = scmp.eq.s32.totalorder %s24, 0
      // Predicated region
      $region52: #{llama_stage_pallas.13} parent=43 // pred_check
        %p711 = pneg %p710
      $region53: #{llama_stage_pallas.13} parent=43 // pred_check_branch
        %713 = sbr.rel (%p711) target = $region55
      $region54: #{llama_stage_pallas.13} parent=43 // pred_region
        %v714 = vld [vmem:[%s367] sm:$0xff]
        %v715 = vadd.f32 %v714, %v705
        %vm716 = vcmask 261120
        %717 = vst.msk [vmem:[%s405] sm:$0xff] %vm716, %v715
      $region55: #{llama_stage_pallas.13} parent=43 // pred_fallthru
        _
      %p718 = scmp.gt.s32.totalorder %s24, 0
      // Predicated region
      $region56: #{llama_stage_pallas.13} parent=43 // pred_check
        %p719 = pneg %p718
      $region57: #{llama_stage_pallas.13} parent=43 // pred_check_branch
        %721 = sbr.rel (%p719) target = $region59
      $region58: #{llama_stage_pallas.13} parent=43 // pred_region
        %v722 = vld [vmem:[%s405] sm:$0xff]
        %v723 = vadd.f32 %v722, %v705
        %vm724 = vcmask 261120
        %725 = vst.msk [vmem:[%s405] sm:$0xff] %vm724, %v723
      $region59: #{llama_stage_pallas.13} parent=43 // pred_fallthru
        _
      %p726 = scmp.lt.s32.totalorder %s22, 1
      %s727 = scalar_select %p726, %s22, 1
      %p728 = scmp.lt.s32.totalorder %s23, 0
      %s729 = scalar_select %p728, %s23, 0
      %s730 = sadd.s32 %s729, %s727
      %s731 = smul.addr %s730, 8
      %s732 = scalar_lea.vmem %s6, %s731
      // Predicated region
      $region60: #{llama_stage_pallas.13} parent=43 // pred_check
        %p733 = pneg %p217
      $region61: #{llama_stage_pallas.13} parent=43 // pred_check_branch
        %735 = sbr.rel (%p733) target = $region63
      $region62: #{llama_stage_pallas.13} parent=43 // pred_region
        _
      $region63: #{llama_stage_pallas.13} parent=43 // pred_fallthru
        _
    $region44: #{llama_stage_pallas.13} parent=5 // pred_fallthru
      _
    %p736 = scmp.le.s32.totalorder 2, %s12
    // Predicated region
    $region64: #{llama_stage_pallas.13} parent=5 // pred_check
      %p737 = pneg %p736
    $region65: #{llama_stage_pallas.13} parent=5 // pred_check_branch
      %739 = sbr.rel (%p737) target = $region67
    $region66: #{llama_stage_pallas.13} parent=5 // pred_region
      %s740 = ssub.s32 %s12, 2
      // Predicated region
      $region68: #{llama_stage_pallas.13} parent=66 // pred_check
        %p741 = pneg %p223
      $region69: #{llama_stage_pallas.13} parent=66 // pred_check_branch
        %743 = sbr.rel (%p741) target = $region71
      $region70: #{llama_stage_pallas.13} parent=66 // pred_region
        %p744 = scmp.lt.s32.totalorder %s25, 1
        %s745 = scalar_select %p744, %s25, 1
        %p746 = scmp.lt.s32.totalorder %s26, 0
        %s747 = scalar_select %p746, %s26, 0
        %s748 = sadd.s32 %s747, %s745
        %s749 = smul.addr %s748, 8
        %s750 = scalar_lea.vmem %s6, %s749
      $region71: #{llama_stage_pallas.13} parent=66 // pred_fallthru
        _
    $region67: #{llama_stage_pallas.13} parent=5 // pred_fallthru
      _
  $region6: #{llama_stage_pallas.13} parent=0 // loop_footer
    %s16 = sadd.s32 1, %s12
  $region7: #{llama_stage_pallas.13} parent=0 // loop_footer_branch
    %11 = sbr.rel target = $region3
  $region8: #{llama_stage_pallas.13} parent=0 // loop_exit
    _

// kernel: llama_stage_pallas.23
$region0: #{llama_stage_pallas.23}
  #allocation0 [shape = 'u32[]', space=smem, size = 0x4, offset = 0x4, fixed_abs, tag = 'smem constant byte address 0x4 - core index']
  #allocation1 [shape = 'u32[144,128]{1,0:T(1,128)}', space=vmem, size = 0x12000, scoped, tag = 'internal scratch']
  #allocation2 [shape = 'bf16[8,32]{1,0:T(8,128)(2,1)}', space=vmem, size = 0x800, scoped, tag = 'scratch operand']
  %s0 = inlined_call_operand.vmem [shape: f32[2,8,32], index: 0, kind: input, shape index: {}]
  %s1 = inlined_call_operand.vmem [shape: f32[1,32], index: 1, kind: input, shape index: {}]
  %s2 = inlined_call_operand.vmem [shape: bf16[32,96], index: 2, kind: input, shape index: {}]
  %s3 = inlined_call_operand.vmem [shape: bf16[32,96], index: 3, kind: input, shape index: {}]
  %s4 = inlined_call_operand.vmem [shape: bf16[96,32], index: 4, kind: input, shape index: {}]
  %s5 = inlined_call_operand.hbm [shape: f32[2,8,32], index: 5, kind: output, shape index: {}]
  %s6 = sld [smem:[#allocation0]]
  $region65: #{llama_stage_pallas.23} parent=0
    _
  %s8 = ssub.s32 1, %s6
  %s9 = scalar_select 0, %s8, %s6
  $region1: #{llama_stage_pallas.23} parent=0
    #allocation3 [shape = 'u8[8192]{0}', space=vmem, size = 0x2000, scoped, tag = 'output window, operand 0']
    #allocation4 [shape = 's32[2]{0}', space=sflag, size = 0x8, scoped, tag = 'scoped memory for llama_stage_pallas.23']
    %10 = vsyncpa [#allocation4], 0
    %s11 = scalar_lea.sflag [#allocation4], 1
    %12 = vsyncpa %s11, 0
    loop: start=0, step=1, limit=4
    $region2: #{llama_stage_pallas.23} parent=1 // loop_pre_header
      _
    $region3: #{llama_stage_pallas.23} parent=1 // loop_header
      %s14 = sphi 0, %s18
      %p15 = scmp.ge.s32.totalorder %s14, 4
      %s21 = sphi 0, %s40
      %s22 = sphi 0, %s36
      %s23 = sphi 0, %s32
      %s24 = sphi 0, %s21
      %s25 = sphi 0, %s22
      %s26 = sphi 0, %s23
      %s27 = sphi 0, %s24
      %s28 = sphi 0, %s25
      %s29 = sphi 0, %s26
      %s45 = sphi 0, %s47
      %s48 = sphi 0, %s45
      %s49 = sphi 0, %s48
      %s65 = sphi 0, %s49
      %s69 = sphi 0, %s69
      %s71 = sphi 0, %s69
      %s72 = sphi 0, %s71
      %s86 = sphi 0, %s72
      %s92 = sphi 0, %s94
      %s95 = sphi 0, %s92
      %s96 = sphi 0, %s95
      %s112 = sphi 0, %s96
      %s118 = sphi 0, %s120
      %s121 = sphi 0, %s118
      %s122 = sphi 0, %s121
      %s138 = sphi 0, %s122
      %s144 = sphi 0, %s146
      %s147 = sphi 0, %s144
      %s148 = sphi 0, %s147
      %s164 = sphi 0, %s148
      %s172 = sphi 0, %s174
      %s175 = sphi 0, %s172
      %s176 = sphi 0, %s175
      %s192 = sphi 0, %s176
    $region4: #{llama_stage_pallas.23} parent=1 // loop_header_branch
      %17 = sbr.rel (%p15) target = $region8
    $region5: #{llama_stage_pallas.23} parent=1 // loop_body
      %s19 = ssub.s32 %s14, 1
      %s20 = ssub.s32 %s14, 2
      %s30 = sadd.s32 1, %s23
      %p31 = scmp.ge.s32.totalorder %s30, 1
      %s32 = scalar_select %p31, 0, %s30
      %s33 = sadd.s32 1, %s22
      %s34 = scalar_select %p31, %s33, %s22
      %p35 = scmp.ge.s32.totalorder %s34, 1
      %s36 = scalar_select %p35, 0, %s34
      %s37 = sadd.s32 1, %s21
      %s38 = scalar_select %p35, %s37, %s21
      %p39 = scmp.ge.s32.totalorder %s38, 2
      %s40 = scalar_select %p39, 0, %s38
      %s41 = ssub.s32 %s21, %s40
      %s42 = ssub.s32 %s22, %s36
      %s43 = sor.u32 %s41, %s42
      %p44 = scmp.eq.s32.totalorder %s43, 0
      %s46 = sadd.s32 %s45, 1
      %s47 = scalar_select %p44, %s45, %s46
      %p50 = pneg %p44
      %p51 = scmp.eq.s32.totalorder %s14, 1
      %p52 = por %p50, %p51
      %p53 = scmp.ne.s32.totalorder %s45, %s48
      %p54 = scmp.eq.s32.totalorder %s14, 0
      %p55 = por %p53, %p54
      %p56 = scmp.ne.s32.totalorder %s45, %s48
      %p57 = scmp.eq.s32.totalorder %s19, 1
      %p58 = por %p56, %p57
      %p59 = scmp.ne.s32.totalorder %s48, %s49
      %p60 = scmp.eq.s32.totalorder %s19, 0
      %p61 = por %p59, %p60
      %p62 = scmp.ne.s32.totalorder %s48, %s49
      %p63 = scmp.eq.s32.totalorder %s20, 1
      %p64 = por %p62, %p63
      %p66 = scmp.ne.s32.totalorder %s49, %s65
      %p67 = scmp.eq.s32.totalorder %s20, 0
      %p68 = por %p66, %p67
      %s70 = sadd.s32 %s69, 1
      %p73 = scmp.eq.s32.totalorder %s14, 1
      %p74 = scmp.ne.s32.totalorder %s69, %s71
      %p75 = scmp.eq.s32.totalorder %s14, 0
      %p76 = por %p74, %p75
      %p77 = scmp.ne.s32.totalorder %s69, %s71
      %p78 = scmp.eq.s32.totalorder %s19, 1
      %p79 = por %p77, %p78
      %p80 = scmp.ne.s32.totalorder %s71, %s72
      %p81 = scmp.eq.s32.totalorder %s19, 0
      %p82 = por %p80, %p81
      %p83 = scmp.ne.s32.totalorder %s71, %s72
      %p84 = scmp.eq.s32.totalorder %s20, 1
      %p85 = por %p83, %p84
      %p87 = scmp.ne.s32.totalorder %s72, %s86
      %p88 = scmp.eq.s32.totalorder %s20, 0
      %p89 = por %p87, %p88
      %s90 = ssub.s32 %s23, %s32
      %p91 = scmp.eq.s32.totalorder %s90, 0
      %s93 = sadd.s32 %s92, 1
      %s94 = scalar_select %p91, %s92, %s93
      %p97 = pneg %p91
      %p98 = scmp.eq.s32.totalorder %s14, 1
      %p99 = por %p97, %p98
      %p100 = scmp.ne.s32.totalorder %s92, %s95
      %p101 = scmp.eq.s32.totalorder %s14, 0
      %p102 = por %p100, %p101
      %p103 = scmp.ne.s32.totalorder %s92, %s95
      %p104 = scmp.eq.s32.totalorder %s19, 1
      %p105 = por %p103, %p104
      %p106 = scmp.ne.s32.totalorder %s95, %s96
      %p107 = scmp.eq.s32.totalorder %s19, 0
      %p108 = por %p106, %p107
      %p109 = scmp.ne.s32.totalorder %s95, %s96
      %p110 = scmp.eq.s32.totalorder %s20, 1
      %p111 = por %p109, %p110
      %p113 = scmp.ne.s32.totalorder %s96, %s112
      %p114 = scmp.eq.s32.totalorder %s20, 0
      %p115 = por %p113, %p114
      %s116 = ssub.s32 %s23, %s32
      %p117 = scmp.eq.s32.totalorder %s116, 0
      %s119 = sadd.s32 %s118, 1
      %s120 = scalar_select %p117, %s118, %s119
      %p123 = pneg %p117
      %p124 = scmp.eq.s32.totalorder %s14, 1
      %p125 = por %p123, %p124
      %p126 = scmp.ne.s32.totalorder %s118, %s121
      %p127 = scmp.eq.s32.totalorder %s14, 0
      %p128 = por %p126, %p127
      %p129 = scmp.ne.s32.totalorder %s118, %s121
      %p130 = scmp.eq.s32.totalorder %s19, 1
      %p131 = por %p129, %p130
      %p132 = scmp.ne.s32.totalorder %s121, %s122
      %p133 = scmp.eq.s32.totalorder %s19, 0
      %p134 = por %p132, %p133
      %p135 = scmp.ne.s32.totalorder %s121, %s122
      %p136 = scmp.eq.s32.totalorder %s20, 1
      %p137 = por %p135, %p136
      %p139 = scmp.ne.s32.totalorder %s122, %s138
      %p140 = scmp.eq.s32.totalorder %s20, 0
      %p141 = por %p139, %p140
      %s142 = ssub.s32 %s23, %s32
      %p143 = scmp.eq.s32.totalorder %s142, 0
      %s145 = sadd.s32 %s144, 1
      %s146 = scalar_select %p143, %s144, %s145
      %p149 = pneg %p143
      %p150 = scmp.eq.s32.totalorder %s14, 1
      %p151 = por %p149, %p150
      %p152 = scmp.ne.s32.totalorder %s144, %s147
      %p153 = scmp.eq.s32.totalorder %s14, 0
      %p154 = por %p152, %p153
      %p155 = scmp.ne.s32.totalorder %s144, %s147
      %p156 = scmp.eq.s32.totalorder %s19, 1
      %p157 = por %p155, %p156
      %p158 = scmp.ne.s32.totalorder %s147, %s148
      %p159 = scmp.eq.s32.totalorder %s19, 0
      %p160 = por %p158, %p159
      %p161 = scmp.ne.s32.totalorder %s147, %s148
      %p162 = scmp.eq.s32.totalorder %s20, 1
      %p163 = por %p161, %p162
      %p165 = scmp.ne.s32.totalorder %s148, %s164
      %p166 = scmp.eq.s32.totalorder %s20, 0
      %p167 = por %p165, %p166
      %s168 = ssub.s32 %s21, %s40
      %s169 = ssub.s32 %s22, %s36
      %s170 = sor.u32 %s168, %s169
      %p171 = scmp.eq.s32.totalorder %s170, 0
      %s173 = sadd.s32 %s172, 1
      %s174 = scalar_select %p171, %s172, %s173
      %p177 = pneg %p171
      %p178 = scmp.eq.s32.totalorder %s14, 1
      %p179 = por %p177, %p178
      %p180 = scmp.ne.s32.totalorder %s172, %s175
      %p181 = scmp.eq.s32.totalorder %s14, 0
      %p182 = por %p180, %p181
      %p183 = scmp.ne.s32.totalorder %s172, %s175
      %p184 = scmp.eq.s32.totalorder %s19, 1
      %p185 = por %p183, %p184
      %p186 = scmp.ne.s32.totalorder %s175, %s176
      %p187 = scmp.eq.s32.totalorder %s19, 0
      %p188 = por %p186, %p187
      %p189 = scmp.ne.s32.totalorder %s175, %s176
      %p190 = scmp.eq.s32.totalorder %s20, 1
      %p191 = por %p189, %p190
      %p193 = scmp.ne.s32.totalorder %s176, %s192
      %p194 = scmp.eq.s32.totalorder %s20, 0
      %p195 = por %p193, %p194
      %p196 = scmp.le.s32.totalorder 1, %s14
      %p197 = scmp.lt.s32.totalorder %s14, 3
      %p198 = pnand %p196, %p197
      %p199 = pneg %p198
      // Predicated region
      $region9: #{llama_stage_pallas.23} parent=5 // pred_check
        _
      $region10: #{llama_stage_pallas.23} parent=5 // pred_check_branch
        %201 = sbr.rel (%p198) target = $region12
      $region11: #{llama_stage_pallas.23} parent=5 // pred_region
        %s202 = ssub.s32 %s14, 1
        // Predicated region
        $region13: #{llama_stage_pallas.23} parent=11 // pred_check
          %p203 = pneg %p82
        $region14: #{llama_stage_pallas.23} parent=11 // pred_check_branch
          %205 = sbr.rel (%p203) target = $region16
        $region15: #{llama_stage_pallas.23} parent=11 // pred_region
          _
        $region16: #{llama_stage_pallas.23} parent=11 // pred_fallthru
          _
        // Predicated region
        $region17: #{llama_stage_pallas.23} parent=11 // pred_check
          %p206 = pneg %p108
        $region18: #{llama_stage_pallas.23} parent=11 // pred_check_branch
          %208 = sbr.rel (%p206) target = $region20
        $region19: #{llama_stage_pallas.23} parent=11 // pred_region
          %p209 = scmp.lt.s32.totalorder %s26, 0
          %s210 = scalar_select %p209, %s26, 0
          %s211 = smul.addr %s210, 4
          %s212 = scalar_lea.vmem %s2, %s211
        $region20: #{llama_stage_pallas.23} parent=11 // pred_fallthru
          _
        // Predicated region
        $region21: #{llama_stage_pallas.23} parent=11 // pred_check
          %p213 = pneg %p134
        $region22: #{llama_stage_pallas.23} parent=11 // pred_check_branch
          %215 = sbr.rel (%p213) target = $region24
        $region23: #{llama_stage_pallas.23} parent=11 // pred_region
          %p216 = scmp.lt.s32.totalorder %s26, 0
          %s217 = scalar_select %p216, %s26, 0
          %s218 = smul.addr %s217, 4
          %s219 = scalar_lea.vmem %s3, %s218
        $region24: #{llama_stage_pallas.23} parent=11 // pred_fallthru
          _
        // Predicated region
        $region25: #{llama_stage_pallas.23} parent=11 // pred_check
          %p220 = pneg %p160
        $region26: #{llama_stage_pallas.23} parent=11 // pred_check_branch
          %222 = sbr.rel (%p220) target = $region28
        $region27: #{llama_stage_pallas.23} parent=11 // pred_region
          %s223 = smul.u32 12, %s26
          %p224 = scmp.lt.s32.totalorder %s223, 11
          %s225 = scalar_select %p224, %s223, 11
          %s226 = smul.addr %s225, 4
          %s227 = scalar_lea.vmem %s4, %s226
          %s228 = smul.u32 12, %s26
        $region28: #{llama_stage_pallas.23} parent=11 // pred_fallthru
          _
      $region12: #{llama_stage_pallas.23} parent=5 // pred_fallthru
        _
      %p229 = scmp.lt.s32.totalorder %s14, 2
      // Predicated region
      $region29: #{llama_stage_pallas.23} parent=5 // pred_check
        %p230 = pneg %p229
      $region30: #{llama_stage_pallas.23} parent=5 // pred_check_branch
        %232 = sbr.rel (%p230) target = $region32
      $region31: #{llama_stage_pallas.23} parent=5 // pred_region
        // Predicated region
        $region33: #{llama_stage_pallas.23} parent=31 // pred_check
          %p233 = pneg %p55
        $region34: #{llama_stage_pallas.23} parent=31 // pred_check_branch
          %235 = sbr.rel (%p233) target = $region36
        $region35: #{llama_stage_pallas.23} parent=31 // pred_region
          %p236 = scmp.lt.s32.totalorder %s21, 1
          %s237 = scalar_select %p236, %s21, 1
          %p238 = scmp.lt.s32.totalorder %s22, 0
          %s239 = scalar_select %p238, %s22, 0
          %s240 = sadd.s32 %s239, %s237
          %s241 = smul.addr %s240, 8
          %s242 = scalar_lea.vmem %s0, %s241
        $region36: #{llama_stage_pallas.23} parent=31 // pred_fallthru
          _
      $region32: #{llama_stage_pallas.23} parent=5 // pred_fallthru
        _
      %p243 = scmp.le.s32.totalorder 1, %s14
      %p244 = scmp.lt.s32.totalorder %s14, 3
      %p245 = pnand %p243, %p244
      %p246 = pneg %p245
      // Predicated region
      $region37: #{llama_stage_pallas.23} parent=5 // pred_check
        _
      $region38: #{llama_stage_pallas.23} parent=5 // pred_check_branch
        %248 = sbr.rel (%p245) target = $region40
      $region39: #{llama_stage_pallas.23} parent=5 // pred_region
        %s249 = ssub.s32 %s14, 1
        %p250 = scmp.lt.s32.totalorder %s24, 1
        %s251 = scalar_select %p250, %s24, 1
        %p252 = scmp.lt.s32.totalorder %s25, 0
        %s253 = scalar_select %p252, %s25, 0
        %s254 = sadd.s32 %s253, %s251
        %s255 = smul.addr %s254, 8
        %s256 = scalar_lea.vmem %s0, %s255
        %p257 = pneg %p61
        %p258 = pneg %p58
        %p259 = pneg %p82
        %p260 = pneg %p79
        %p261 = scmp.lt.s32.totalorder %s26, 0
        %s262 = scalar_select %p261, %s26, 0
        %s263 = smul.addr %s262, 4
        %s264 = scalar_lea.vmem %s2, %s263
        %p265 = pneg %p108
        %p266 = pneg %p105
        %p267 = scmp.lt.s32.totalorder %s26, 0
        %s268 = scalar_select %p267, %s26, 0
        %s269 = smul.addr %s268, 4
        %s270 = scalar_lea.vmem %s3, %s269
        %p271 = pneg %p134
        %p272 = pneg %p131
        %s273 = smul.u32 12, %s26
        %p274 = scmp.lt.s32.totalorder %s273, 11
        %s275 = scalar_select %p274, %s273, 11
        %s276 = smul.addr %s275, 4
        %s277 = scalar_lea.vmem %s4, %s276
        %p278 = pneg %p160
        %p279 = pneg %p157
        %p280 = pneg %p188
        %p281 = pneg %p185
        %s282 = sand.u32 %s175, 1
        %s283 = scalar_lea.sflag [#allocation4], %s282
        %s284 = sand.u32 %s175, 1
        %s285 = smul.addr %s284, 8
        %s286 = scalar_lea.vmem [#allocation3], %s285
        %p287 = scmp.lt.s32.totalorder %s24, 1
        %s288 = scalar_select %p287, %s24, 1
        %p289 = scmp.lt.s32.totalorder %s25, 0
        %s290 = scalar_select %p289, %s25, 0
        %s291 = sadd.s32 %s290, %s288
        %s292 = smul.addr %s291, 8
        %s293 = scalar_lea.vmem %s0, %s292
        %p294 = scmp.lt.s32.totalorder %s26, 0
        %s295 = scalar_select %p294, %s26, 0
        %s296 = smul.addr %s295, 4
        %s297 = scalar_lea.vmem %s2, %s296
        %p298 = scmp.lt.s32.totalorder %s26, 0
        %s299 = scalar_select %p298, %s26, 0
        %s300 = smul.addr %s299, 4
        %s301 = scalar_lea.vmem %s3, %s300
        %s302 = smul.u32 12, %s26
        %p303 = scmp.lt.s32.totalorder %s302, 11
        %s304 = scalar_select %p303, %s302, 11
        %s305 = smul.addr %s304, 4
        %s306 = scalar_lea.vmem %s4, %s305
        %s307 = smul.u32 12, %s26
        %p309 = scmp.eq.s32.totalorder %s26, 0
        // Predicated region
        $region41: #{llama_stage_pallas.23} parent=39 // pred_check
          %p310 = pneg %p309
        $region42: #{llama_stage_pallas.23} parent=39 // pred_check_branch
          %312 = sbr.rel (%p310) target = $region44
        $region43: #{llama_stage_pallas.23} parent=39 // pred_region
          %v313 = vld [vmem:[%s293] sm:$0xff]
          %v314 = vmul.f32 %v313, %v313
          %vm315 = vcmask 261120
          %v316 = vsel %vm315, %v314, 0.0
          %317 = vadd.xlane.f32.xlu0 %v316
          %v318 = vpop.xlane.xlu0 %317
          %v319 = vrcp.pop 32.0
          %v320 = vmul.f32 %v318, %v319
          %v321 = vadd.f32 %v320, 1e-05
          %v322 = vrsqrt.pop %v321
          %v323 = vmul.f32 %v313, %v322
          %v324 = vld [vmem:[%s1] sm:$0x1]
          %v326 = vlaneseq
          %v327 = vshrl.u32 %v326, 7
          %v328 = vsub.s32 0, %v327
          %v329 = vrot.slane %v324, %v328
          %v331 = vmul.f32 %v323, %v329
          %v332 = vpack.c.bf16 %v331, %v331
          %vm333 = vcmask 257024
          %334 = vst.msk [vmem:[#allocation2] sm:$0xf] %vm333, %v332
        $region44: #{llama_stage_pallas.23} parent=39 // pred_fallthru
          _
        %v335 = vld [vmem:[#allocation2] sm:$0xf]
        %v336 = vld [vmem:[%s297] sm:$0xf]
        %v337 = vld [vmem:[%s297 + $0x4] sm:$0xf]
        %v338 = vld [vmem:[%s297 + $0x8] sm:$0xf]
        %v339 = vld [vmem:[%s297 + $0xc] sm:$0xf]
        %v344 = vunpack.c.l.b16 %v336
        %v345 = vunpack.c.l.b16 %v337
        %v346 = vunpack.c.l.b16 %v338
        %v347 = vunpack.c.l.b16 %v339
        %v348 = vpack.c.b16 %v345, %v344
        %v349 = vpack.c.b16 %v347, %v346
        %vm352 = vcmask 261120
        %v354 = vsel %vm352, %v335, 0
        %356 = vmatprep.subr.bf16.mxu0 0
        %357 = vmatpush1.bf16.msra.mxu0 %v348
        %358 = vmatprep.subr.bf16.mxu0 0
        %359 = vmatpush1.bf16.msra.mxu0 %v349
        %360 = vmatprep.subr.bf16.mxu0 0
        %361 = vmatpush1.bf16.msra.mxu0 0
        %362 = vmatprep.subr.bf16.mxu0 0
        %363 = vmatpush1.bf16.msra.mxu0 0
        %364 = vmatprep.subr.bf16.mxu0 0
        %365 = vmatpush1.bf16.msra.mxu0 0
        %366 = vmatprep.subr.bf16.mxu0 0
        %367 = vmatpush1.bf16.msra.mxu0 0
        %368 = vmatprep.subr.bf16.mxu0 0
        %369 = vmatpush1.bf16.msra.mxu0 0
        %370 = vmatprep.subr.bf16.mxu0 0
        %371 = vmatpush1.bf16.msra.mxu0 0
        %372 = vmatprep.subr.bf16.mxu0 0
        %373 = vmatpush1.bf16.msra.mxu0 0
        %374 = vmatprep.subr.bf16.mxu0 0
        %375 = vmatpush1.bf16.msra.mxu0 0
        %376 = vmatprep.subr.bf16.mxu0 0
        %377 = vmatpush1.bf16.msra.mxu0 0
        %378 = vmatprep.subr.bf16.mxu0 0
        %379 = vmatpush1.bf16.msra.mxu0 0
        %380 = vmatprep.subr.bf16.mxu0 0
        %381 = vmatpush1.bf16.msra.mxu0 0
        %382 = vmatprep.subr.bf16.mxu0 0
        %383 = vmatpush1.bf16.msra.mxu0 0
        %384 = vmatprep.subr.bf16.mxu0 0
        %385 = vmatpush1.bf16.msra.mxu0 0
        %386 = vmatprep.subr.bf16.mxu0 0
        %387 = vmatpush1.bf16.msra.mxu0 0
        %388 = vmatprep.mubr.bf16.mxu0 0
        %389 = vmatmul.mubr.bf16.gmra.mrb[0].mxu0 %v354
        %v390 = vpop.f32.mrb[0].mxu0
        %v391 = vadd.f32 0.0, %v390
        %v392 = vpop.f32.mrb[0].mxu0
        %v393 = vpop.f32.mrb[0].mxu0
        %v394 = vpop.f32.mrb[0].mxu0
        %395 = vdwg.mxu0
        %v396 = vld [vmem:[%s301] sm:$0xf]
        %v397 = vld [vmem:[%s301 + $0x4] sm:$0xf]
        %v398 = vld [vmem:[%s301 + $0x8] sm:$0xf]
        %v399 = vld [vmem:[%s301 + $0xc] sm:$0xf]
        %v404 = vunpack.c.l.b16 %v396
        %v405 = vunpack.c.l.b16 %v397
        %v406 = vunpack.c.l.b16 %v398
        %v407 = vunpack.c.l.b16 %v399
        %v408 = vpack.c.b16 %v405, %v404
        %v409 = vpack.c.b16 %v407, %v406
        %412 = vmatprep.subr.bf16.mxu0 0
        %413 = vmatpush1.bf16.msra.mxu0 %v408
        %414 = vmatprep.subr.bf16.mxu0 0
        %415 = vmatpush1.bf16.msra.mxu0 %v409
        %416 = vmatprep.subr.bf16.mxu0 0
        %417 = vmatpush1.bf16.msra.mxu0 0
        %418 = vmatprep.subr.bf16.mxu0 0
        %419 = vmatpush1.bf16.msra.mxu0 0
        %420 = vmatprep.subr.bf16.mxu0 0
        %421 = vmatpush1.bf16.msra.mxu0 0
        %422 = vmatprep.subr.bf16.mxu0 0
        %423 = vmatpush1.bf16.msra.mxu0 0
        %424 = vmatprep.subr.bf16.mxu0 0
        %425 = vmatpush1.bf16.msra.mxu0 0
        %426 = vmatprep.subr.bf16.mxu0 0
        %427 = vmatpush1.bf16.msra.mxu0 0
        %428 = vmatprep.subr.bf16.mxu0 0
        %429 = vmatpush1.bf16.msra.mxu0 0
        %430 = vmatprep.subr.bf16.mxu0 0
        %431 = vmatpush1.bf16.msra.mxu0 0
        %432 = vmatprep.subr.bf16.mxu0 0
        %433 = vmatpush1.bf16.msra.mxu0 0
        %434 = vmatprep.subr.bf16.mxu0 0
        %435 = vmatpush1.bf16.msra.mxu0 0
        %436 = vmatprep.subr.bf16.mxu0 0
        %437 = vmatpush1.bf16.msra.mxu0 0
        %438 = vmatprep.subr.bf16.mxu0 0
        %439 = vmatpush1.bf16.msra.mxu0 0
        %440 = vmatprep.subr.bf16.mxu0 0
        %441 = vmatpush1.bf16.msra.mxu0 0
        %442 = vmatprep.subr.bf16.mxu0 0
        %443 = vmatpush1.bf16.msra.mxu0 0
        %444 = vmatprep.mubr.bf16.mxu0 0
        %445 = vmatmul.mubr.bf16.gmra.mrb[0].mxu0 %v354
        %v446 = vpop.f32.mrb[0].mxu0
        %v447 = vadd.f32 0.0, %v446
        %v448 = vpop.f32.mrb[0].mxu0
        %v449 = vpop.f32.mrb[0].mxu0
        %v450 = vpop.f32.mrb[0].mxu0
        %451 = vdwg.mxu0
        %v452 = vsub.f32 0.0, %v391
        %v453 = vmin.f32 %v452, 80.0
        %v454 = vmul.f32 %v453, 1.442695
        %v455 = vpow.pop %v454
        %v456 = vadd.f32 %v455, 1.0
        %v457 = vrcp.pop %v456
        %v458 = vmul.f32 1.0, %v457
        %v459 = vmul.f32 %v391, %v458
        %v460 = vmul.f32 %v459, %v447
        %v461 = vpack.c.bf16 %v460, %v460
        %v462 = vld [vmem:[%s306] sm:$0xf]
        %v463 = vld [vmem:[%s306 + $0x4] sm:$0xf]
        %v464 = vld [vmem:[%s306 + $0x8] sm:$0xf]
        %v465 = vld [vmem:[%s306 + $0xc] sm:$0xf]
        %v466 = vld [vmem:[%s306 + $0x10] sm:$0xf]
        %v467 = vld [vmem:[%s306 + $0x14] sm:$0xf]
        %v468 = vld [vmem:[%s306 + $0x18] sm:$0xf]
        %v469 = vld [vmem:[%s306 + $0x1c] sm:$0xf]
        %v470 = vld [vmem:[%s306 + $0x20] sm:$0xf]
        %v471 = vld [vmem:[%s306 + $0x24] sm:$0xf]
        %v472 = vld [vmem:[%s306 + $0x28] sm:$0xf]
        %v473 = vld [vmem:[%s306 + $0x2c] sm:$0xf]
        %v486 = vunpack.c.l.b16 %v462
        %v487 = vunpack.c.l.b16 %v463
        %v488 = vunpack.c.l.b16 %v464
        %v489 = vunpack.c.l.b16 %v465
        %v490 = vunpack.c.l.b16 %v466
        %v491 = vunpack.c.l.b16 %v467
        %v492 = vunpack.c.l.b16 %v468
        %v493 = vunpack.c.l.b16 %v469
        %v494 = vunpack.c.l.b16 %v470
        %v495 = vunpack.c.l.b16 %v471
        %v496 = vunpack.c.l.b16 %v472
        %v497 = vunpack.c.l.b16 %v473
        %v498 = vpack.c.b16 %v487, %v486
        %v499 = vpack.c.b16 %v489, %v488
        %v500 = vpack.c.b16 %v491, %v490
        %v501 = vpack.c.b16 %v493, %v492
        %v502 = vpack.c.b16 %v495, %v494
        %v503 = vpack.c.b16 %v497, %v496
        %vm510 = vcmask 785408
        %v512 = vsel %vm510, %v461, 0
        %514 = vmatprep.subr.bf16.mxu0 0
        %515 = vmatpush1.bf16.msra.mxu0 %v498
        %516 = vmatprep.subr.bf16.mxu0 0
        %517 = vmatpush1.bf16.msra.mxu0 %v499
        %518 = vmatprep.subr.bf16.mxu0 0
        %519 = vmatpush1.bf16.msra.mxu0 %v500
        %520 = vmatprep.subr.bf16.mxu0 0
        %521 = vmatpush1.bf16.msra.mxu0 %v501
        %522 = vmatprep.subr.bf16.mxu0 0
        %523 = vmatpush1.bf16.msra.mxu0 %v502
        %524 = vmatprep.subr.bf16.mxu0 0
        %525 = vmatpush1.bf16.msra.mxu0 %v503
        %526 = vmatprep.subr.bf16.mxu0 0
        %527 = vmatpush1.bf16.msra.mxu0 0
        %528 = vmatprep.subr.bf16.mxu0 0
        %529 = vmatpush1.bf16.msra.mxu0 0
        %530 = vmatprep.subr.bf16.mxu0 0
        %531 = vmatpush1.bf16.msra.mxu0 0
        %532 = vmatprep.subr.bf16.mxu0 0
        %533 = vmatpush1.bf16.msra.mxu0 0
        %534 = vmatprep.subr.bf16.mxu0 0
        %535 = vmatpush1.bf16.msra.mxu0 0
        %536 = vmatprep.subr.bf16.mxu0 0
        %537 = vmatpush1.bf16.msra.mxu0 0
        %538 = vmatprep.subr.bf16.mxu0 0
        %539 = vmatpush1.bf16.msra.mxu0 0
        %540 = vmatprep.subr.bf16.mxu0 0
        %541 = vmatpush1.bf16.msra.mxu0 0
        %542 = vmatprep.subr.bf16.mxu0 0
        %543 = vmatpush1.bf16.msra.mxu0 0
        %544 = vmatprep.subr.bf16.mxu0 0
        %545 = vmatpush1.bf16.msra.mxu0 0
        %546 = vmatprep.mubr.bf16.mxu0 0
        %547 = vmatmul.mubr.bf16.gmra.mrb[0].mxu0 %v512
        %v548 = vpop.f32.mrb[0].mxu0
        %v549 = vadd.f32 0.0, %v548
        %v550 = vpop.f32.mrb[0].mxu0
        %v551 = vpop.f32.mrb[0].mxu0
        %v552 = vpop.f32.mrb[0].mxu0
        %553 = vdwg.mxu0
        // Predicated region
        $region45: #{llama_stage_pallas.23} parent=39 // pred_check
          %p554 = pneg %p309
        $region46: #{llama_stage_pallas.23} parent=39 // pred_check_branch
          %556 = sbr.rel (%p554) target = $region48
        $region47: #{llama_stage_pallas.23} parent=39 // pred_region
          %v557 = vld [vmem:[%s293] sm:$0xff]
          %v558 = vadd.f32 %v557, %v549
          %559 = vst.msk [vmem:[%s286] sm:$0xff] %vm352, %v558
        $region48: #{llama_stage_pallas.23} parent=39 // pred_fallthru
          _
        %p560 = scmp.gt.s32.totalorder %s26, 0
        // Predicated region
        $region49: #{llama_stage_pallas.23} parent=39 // pred_check
          %p561 = pneg %p560
        $region50: #{llama_stage_pallas.23} parent=39 // pred_check_branch
          %563 = sbr.rel (%p561) target = $region52
        $region51: #{llama_stage_pallas.23} parent=39 // pred_region
          %v564 = vld [vmem:[%s286] sm:$0xff]
          %v565 = vadd.f32 %v564, %v549
          %566 = vst.msk [vmem:[%s286] sm:$0xff] %vm352, %v565
        $region52: #{llama_stage_pallas.23} parent=39 // pred_fallthru
          _
        %s567 = sand.u32 %s175, 1
        %s568 = scalar_lea.sflag [#allocation4], %s567
        %s569 = sand.u32 %s175, 1
        %s570 = smul.addr %s569, 8
        %s571 = scalar_lea.vmem [#allocation3], %s570
        // Predicated region
        $region53: #{llama_stage_pallas.23} parent=39 // pred_check
          %p572 = pneg %p185
        $region54: #{llama_stage_pallas.23} parent=39 // pred_check_branch
          %574 = sbr.rel (%p572) target = $region56
        $region55: #{llama_stage_pallas.23} parent=39 // pred_region
          %s576 = ssub.s32 128, 128
          %577 = vsyncadd %s568, %s576
          %s578 = sadd.s32 %s25, %s24
          %s579 = smul.addr %s578, 128
          %s580 = scalar_lea.hbm %s5, %s579
          %s582 = sshll.u32 %s571, 4
          %s583 = int_to_ptr.vmem [resolvable:$true] %s582
          %585 = dma.vmem_to_hbm [thread:$0]  %s583, 128, %s580, %s568
        $region56: #{llama_stage_pallas.23} parent=39 // pred_fallthru
          _
      $region40: #{llama_stage_pallas.23} parent=5 // pred_fallthru
        _
      %p586 = scmp.le.s32.totalorder 2, %s14
      // Predicated region
      $region57: #{llama_stage_pallas.23} parent=5 // pred_check
        %p587 = pneg %p586
      $region58: #{llama_stage_pallas.23} parent=5 // pred_check_branch
        %589 = sbr.rel (%p587) target = $region60
      $region59: #{llama_stage_pallas.23} parent=5 // pred_region
        %s590 = ssub.s32 %s14, 2
        // Predicated region
        $region61: #{llama_stage_pallas.23} parent=59 // pred_check
          %p591 = pneg %p191
        $region62: #{llama_stage_pallas.23} parent=59 // pred_check_branch
          %593 = sbr.rel (%p591) target = $region64
        $region63: #{llama_stage_pallas.23} parent=59 // pred_region
          %s594 = sand.u32 %s176, 1
          %s595 = scalar_lea.sflag [#allocation4], %s594
          %s596 = sand.u32 %s176, 1
          %s597 = smul.addr %s596, 8
          %s598 = scalar_lea.vmem [#allocation3], %s597
          %599 = dma.done %s595, 128
        $region64: #{llama_stage_pallas.23} parent=59 // pred_fallthru
          _
      $region60: #{llama_stage_pallas.23} parent=5 // pred_fallthru
        _
    $region6: #{llama_stage_pallas.23} parent=1 // loop_footer
      %s18 = sadd.s32 1, %s14
    $region7: #{llama_stage_pallas.23} parent=1 // loop_footer_branch
      %13 = sbr.rel target = $region3
    $region8: #{llama_stage_pallas.23} parent=1 // loop_exit
      _
    %600 = vsyncpa [#allocation4], 1
    %s601 = scalar_lea.sflag [#allocation4], 1
    %602 = vsyncpa %s601, 1

</llo_original>
